<compile_context>
chip_gen: v7x
topology: tpu7x:2x2x1
jax: 0.10.0
libtpu: 0.0.40
codegen_flags: <defaults>
</compile_context>

<pallas_src>
import functools

import jax
import jax.numpy as jnp
from jax.experimental import pallas as pl
from jax.experimental.pallas import tpu as pltpu


# ----------------------------------------------------------------------------
# Pallas kernels
# ----------------------------------------------------------------------------
def _wx_bias_kernel(w_ref, x_ref, b_ref, o_ref, *, activation):
    """o = act(W @ X + b). W:(Cout,K) X:(K,tn) b:(Cout,1) -> (Cout,tn)."""
    acc = jnp.dot(w_ref[...], x_ref[...], preferred_element_type=jnp.float32)
    acc = acc + b_ref[...]                      # (Cout, 1) broadcasts over lanes
    if activation == "relu":
        acc = jnp.maximum(acc, 0.0)
    o_ref[...] = acc.astype(o_ref.dtype)


def conv_matmul(w, x, b, activation=None, max_tile_n=512):
    """y = act(w @ x + b) with the (large) last dim of x tiled over a parallel grid.

    w: (Cout, K), x: (K, N), b: (Cout,) -> (Cout, N) in f32.
    """
    Cout, K = w.shape
    K2, N = x.shape
    assert K == K2
    tn = N if N <= max_tile_n else max_tile_n          # tile lane dim; keep K / Cout whole
    kernel = functools.partial(_wx_bias_kernel, activation=activation)
    return pl.pallas_call(
        kernel,
        out_shape=jax.ShapeDtypeStruct((Cout, N), jnp.float32),
        grid=(pl.cdiv(N, tn),),
        in_specs=[
            pl.BlockSpec((Cout, K), lambda j: (0, 0)),
            pl.BlockSpec((K, tn), lambda j: (0, j)),
            pl.BlockSpec((Cout, 1), lambda j: (0, 0)),
        ],
        out_specs=pl.BlockSpec((Cout, tn), lambda j: (0, j)),
        compiler_params=pltpu.CompilerParams(
            dimension_semantics=("parallel",)),
    )(w.astype(jnp.float32), x.astype(jnp.float32),
      b.reshape(Cout, 1).astype(jnp.float32))


def _attention_kernel(x_ref, w_ref, b_ref, o_ref, *, n_class, nb, hw):
    """Fused AttentionBlock over the whole batch.

    x_ref: (Cin, nb*hw)  -- CNHW-flattened activation slab.
    w_ref: (2*n_class, Cin) -- [w_relu_path ; w_sigmoid_path] stacked.
    b_ref: (2*n_class, 1).
    o_ref: (n_class, nb*hw).
    """
    x = x_ref[...]
    z_all = jnp.dot(w_ref[...], x, preferred_element_type=jnp.float32) + b_ref[...]
    z = jnp.maximum(z_all[:n_class, :], 0.0)            # relu path (1x1 conv #1)
    e = jnp.exp(z)
    cw = jax.nn.sigmoid(z_all[n_class:, :])             # sigmoid path (1x1 conv #2)

    # Per-(class, batch) spatial sum via segment-indicator matmuls (stays 2-D, aligned).
    total = nb * hw
    r = jax.lax.broadcasted_iota(jnp.int32, (total, nb), 0)
    c = jax.lax.broadcasted_iota(jnp.int32, (total, nb), 1)
    seg_tn = ((r >= c * hw) & (r < (c + 1) * hw)).astype(jnp.float32)   # (total, nb)
    r2 = jax.lax.broadcasted_iota(jnp.int32, (nb, total), 1)
    c2 = jax.lax.broadcasted_iota(jnp.int32, (nb, total), 0)
    seg_nt = ((r2 >= c2 * hw) & (r2 < (c2 + 1) * hw)).astype(jnp.float32)  # (nb, total)

    denom = jnp.dot(e, seg_tn, preferred_element_type=jnp.float32)       # (nc, nb)
    denom_full = jnp.dot(denom, seg_nt, preferred_element_type=jnp.float32)  # (nc, total)
    # Matches the reference exactly: exp(relu(z)) / spatial-sum, then * sigmoid gate.
    # (z >= 0 so exp >= 1 and denom >= hw: no division-by-zero risk.)
    o_ref[...] = ((e / denom_full) * cw).astype(o_ref.dtype)


def attention_block(x_cnhw, w1, b1, w2, b2):
    """AttentionBlock on a CNHW slab. x:(Cin, Nb, H, W) -> (n_class, Nb, H, W)."""
    Cin, Nb, H, W = x_cnhw.shape
    nc = w1.shape[0]
    HW = H * W
    x2 = x_cnhw.reshape(Cin, Nb * HW).astype(jnp.float32)    # contiguous: free reshape
    w = jnp.concatenate([w1.reshape(nc, Cin), w2.reshape(nc, Cin)],
                        axis=0).astype(jnp.float32)           # (2*nc, Cin)
    b = jnp.concatenate([b1, b2], axis=0).reshape(2 * nc, 1).astype(jnp.float32)
    out = pl.pallas_call(
        functools.partial(_attention_kernel, n_class=nc, nb=Nb, hw=HW),
        out_shape=jax.ShapeDtypeStruct((nc, Nb * HW), jnp.float32),
    )(x2, w, b)
    return out.reshape(nc, Nb, H, W)


def _fc_heads_kernel(x_ref, a1_ref, a2_ref,
                     w1_ref, b1_ref, w2_ref, b2_ref,
                     w1a1_ref, b1a1_ref, w2a1_ref, b2a1_ref,
                     w1a2_ref, b1a2_ref, w2a2_ref, b2a2_ref,
                     yp_ref, ya1_ref, ya2_ref):
    """All three fc1->relu->fc2 heads fused in one kernel (intermediates stay in vregs)."""
    def head(x, w1, b1, w2, b2):
        h = jnp.maximum(jnp.dot(x, w1, preferred_element_type=jnp.float32) + b1, 0.0)
        return jnp.dot(h, w2, preferred_element_type=jnp.float32) + b2

    yp_ref[...] = head(x_ref[...], w1_ref[...], b1_ref[...],
                       w2_ref[...], b2_ref[...]).astype(yp_ref.dtype)
    ya1_ref[...] = head(a1_ref[...], w1a1_ref[...], b1a1_ref[...],
                        w2a1_ref[...], b2a1_ref[...]).astype(ya1_ref.dtype)
    ya2_ref[...] = head(a2_ref[...], w1a2_ref[...], b1a2_ref[...],
                        w2a2_ref[...], b2a2_ref[...]).astype(ya2_ref.dtype)


def fc_heads(xf, a1f, a2f, params):
    Nb = xf.shape[0]
    args = [xf, a1f, a2f,
            params["fc1_w"].T, params["fc1_b"].reshape(1, -1),
            params["fc2_w"].T, params["fc2_b"].reshape(1, -1),
            params["fc1_a1_w"].T, params["fc1_a1_b"].reshape(1, -1),
            params["fc2_a1_w"].T, params["fc2_a1_b"].reshape(1, -1),
            params["fc1_a2_w"].T, params["fc1_a2_b"].reshape(1, -1),
            params["fc2_a2_w"].T, params["fc2_a2_b"].reshape(1, -1)]
    args = [a.astype(jnp.float32) for a in args]
    out_shape = tuple(jax.ShapeDtypeStruct((Nb, 10), jnp.float32) for _ in range(3))
    return pl.pallas_call(_fc_heads_kernel, out_shape=out_shape)(*args)


# ----------------------------------------------------------------------------
# Glue ops (plain JAX, trace-time only)
# ----------------------------------------------------------------------------
def im2col_cnhw(x, k):
    """x: (Cin, Nb, H, W) -> (Cin*k*k, Nb*OH*OW), rows ordered (cin, ki, kj)."""
    Cin, Nb, H, W = x.shape
    OH, OW = H - k + 1, W - k + 1
    cols = [x[:, :, i:i + OH, j:j + OW] for i in range(k) for j in range(k)]
    p = jnp.stack(cols, axis=1)                 # (Cin, k*k, Nb, OH, OW)
    return p.reshape(Cin * k * k, Nb * OH * OW)


def conv2d_5x5_cnhw(x, w, b, activation=None):
    """Valid 5x5 conv, stride 1, CNHW in/out, via im2col + lane-dense Pallas matmul."""
    Cin, Nb, H, W = x.shape
    Cout = w.shape[0]
    OH, OW = H - 4, W - 4
    p = im2col_cnhw(x, 5)                                   # (Cin*25, Nb*OH*OW)
    wm = w.reshape(Cout, Cin * 25)
    out = conv_matmul(wm, p, b, activation=activation)      # (Cout, Nb*OH*OW)
    return out.reshape(Cout, Nb, OH, OW)


def maxpool2_cnhw(x):
    C, Nb, H, W = x.shape
    return x.reshape(C, Nb, H // 2, 2, W // 2, 2).max(axis=(3, 5))


# ----------------------------------------------------------------------------
# Parameters (deterministic init, PyTorch-like uniform(-1/sqrt(fan_in), +))
# ----------------------------------------------------------------------------
def init_params(key):
    def u(k, shape, fan_in):
        bound = 1.0 / float(fan_in) ** 0.5
        return jax.random.uniform(k, shape, jnp.float32, -bound, bound)

    names_shapes = [
        ("conv1_w", (10, 1, 5, 5), 25), ("conv1_b", (10,), 25),
        ("ab1_w1", (10, 10, 1, 1), 10), ("ab1_b1", (10,), 10),
        ("ab1_w2", (10, 10, 1, 1), 10), ("ab1_b2", (10,), 10),
        ("conv2_w", (20, 10, 5, 5), 250), ("conv2_b", (20,), 250),
        ("ab2_w1", (10, 20, 1, 1), 20), ("ab2_b1", (10,), 20),
        ("ab2_w2", (10, 20, 1, 1), 20), ("ab2_b2", (10,), 20),
        ("fc1_w", (50, 320), 320), ("fc1_b", (50,), 320),
        ("fc2_w", (10, 50), 50), ("fc2_b", (10,), 50),
        ("fc1_a1_w", (128, 1440), 1440), ("fc1_a1_b", (128,), 1440),
        ("fc2_a1_w", (10, 128), 128), ("fc2_a1_b", (10,), 128),
        ("fc1_a2_w", (32, 160), 160), ("fc1_a2_b", (32,), 160),
        ("fc2_a2_w", (10, 32), 32), ("fc2_a2_b", (10,), 32),
    ]
    keys = jax.random.split(key, len(names_shapes))
    return {name: u(k, shape, fan_in)
            for k, (name, shape, fan_in) in zip(keys, names_shapes)}


# ----------------------------------------------------------------------------
# Forward pass (mirrors Net.forward)
# ----------------------------------------------------------------------------
def net_forward(params, x):
    n_batch = x.shape[0]
    xc = x.transpose(1, 0, 2, 3)                           # NCHW -> CNHW (1, Nb, 28, 28)

    # x = relu(max_pool2d(conv1(x), 2)); relu fused into the conv GEMM (max is monotone)
    y1 = conv2d_5x5_cnhw(xc, params["conv1_w"], params["conv1_b"],
                         activation="relu")                # (10, Nb, 24, 24)
    x1 = maxpool2_cnhw(y1)                                 # (10, Nb, 12, 12)

    a1 = attention_block(x1, params["ab1_w1"], params["ab1_b1"],
                         params["ab1_w2"], params["ab1_b2"])   # (10, Nb, 12, 12)

    # x = relu(max_pool2d(conv2_drop(conv2(x)), 2))  (dropout2d == identity in eval)
    y2 = conv2d_5x5_cnhw(x1, params["conv2_w"], params["conv2_b"],
                         activation="relu")                # (20, Nb, 8, 8)
    x2 = maxpool2_cnhw(y2)                                 # (20, Nb, 4, 4)

    a2 = attention_block(x2, params["ab2_w1"], params["ab2_b1"],
                         params["ab2_w2"], params["ab2_b2"])   # (10, Nb, 4, 4)

    # Tiny transposes back to per-batch NCHW flattening order for the FC heads.
    xf = x2.transpose(1, 0, 2, 3).reshape(n_batch, 320)
    a1f = a1.transpose(1, 0, 2, 3).reshape(n_batch, 1440)
    a2f = a2.transpose(1, 0, 2, 3).reshape(n_batch, 160)

    # fc1->relu->(dropout==identity)->fc2 for all three heads, one fused kernel.
    yp, y_a1, y_a2 = fc_heads(xf, a1f, a2f, params)
    return yp, y_a1, y_a2


# ----------------------------------------------------------------------------
if __name__ == "__main__":
    key = jax.random.PRNGKey(0)
    pkey, xkey = jax.random.split(key)
    params = init_params(pkey)

    # Shapes are dictated by the module: fc1 expects 320 = 20*4*4, which forces
    # a 28x28 single-channel input (MNIST-like).  batch = 2.
    x = jax.random.normal(xkey, (2, 1, 28, 28), dtype=jnp.float32)

    fwd = jax.jit(net_forward)
    yp, y_a1, y_a2 = fwd(params, x)
    jax.block_until_ready((yp, y_a1, y_a2))

    assert yp.shape == (2, 10) and y_a1.shape == (2, 10) and y_a2.shape == (2, 10)
    assert all(bool(jnp.all(jnp.isfinite(t))) for t in (yp, y_a1, y_a2))
    print("KERNEL_OK")
</pallas_src>

<mosaic_0001>
module attributes {stable_mosaic.version = 11 : i64} {
  func.func @_wx_bias_kernel(%arg0: i32, %arg1: memref<10x25xf32, #tpu.memory_space<vmem>>, %arg2: memref<25x512xf32, #tpu.memory_space<vmem>>, %arg3: memref<10x1xf32, #tpu.memory_space<vmem>>, %arg4: memref<10x512xf32, #tpu.memory_space<vmem>>) attributes {dimension_semantics = [#tpu.dimension_semantics<parallel>], iteration_bounds = array<i64: 3>, scalar_prefetch = 0 : i64, scratch_operands = 0 : i64, tpu.core_type = #tpu.core_type<tc>, window_params = [{pipeline_mode = #tpu.pipeline_mode<synchronous>, transform_indices = @transform_0, window_bounds = array<i64: 10, 25>}, {transform_indices = @transform_1, window_bounds = array<i64: 25, 512>}, {pipeline_mode = #tpu.pipeline_mode<synchronous>, transform_indices = @transform_2, window_bounds = array<i64: 10, 1>}, {transform_indices = @transform_3, window_bounds = array<i64: 10, 512>}]} {
    %c0 = arith.constant 0 : index
    %c0_0 = arith.constant 0 : index
    %0 = vector.load %arg1[%c0, %c0_0] : memref<10x25xf32, #tpu.memory_space<vmem>>, vector<10x25xf32>
    %c0_1 = arith.constant 0 : index
    %c0_2 = arith.constant 0 : index
    %1 = vector.load %arg2[%c0_1, %c0_2] : memref<25x512xf32, #tpu.memory_space<vmem>>, vector<25x512xf32>
    %cst = arith.constant dense<0.000000e+00> : vector<10x512xf32>
    %2 = tpu.matmul %0, %1, %cst {dimension_numbers = #tpu.dot_dimension_numbers<[1], [0], [0], [1], [0, 0, 1, 1], [], []>} : vector<10x25xf32>, vector<25x512xf32>, vector<10x512xf32> -> vector<10x512xf32>
    %c0_3 = arith.constant 0 : index
    %c0_4 = arith.constant 0 : index
    %3 = vector.load %arg3[%c0_3, %c0_4] : memref<10x1xf32, #tpu.memory_space<vmem>>, vector<10x1xf32>
    %4 = vector.broadcast %3 : vector<10x1xf32> to vector<10x512xf32>
    %5 = arith.addf %2, %4 : vector<10x512xf32>
    %cst_5 = arith.constant 0.000000e+00 : f32
    %6 = vector.broadcast %cst_5 : f32 to vector<10x512xf32>
    %7 = arith.maximumf %5, %6 : vector<10x512xf32>
    %c0_6 = arith.constant 0 : index
    %c0_7 = arith.constant 0 : index
    %8 = vector.load %arg4[%c0_6, %c0_7] : memref<10x512xf32, #tpu.memory_space<vmem>>, vector<10x512xf32>
    tpu.vector_store %arg4[%c0_6, %c0_7], %7 {strides = array<i32>} : memref<10x512xf32, #tpu.memory_space<vmem>>, vector<10x512xf32>,
    return
  }
  func.func @transform_0(%arg0: i32) -> (i32, i32) {
    %c0_i32 = arith.constant 0 : i32
    %c0_i32_0 = arith.constant 0 : i32
    %c0_i32_1 = arith.constant 0 : i32
    return %c0_i32, %c0_i32_0 : i32, i32
  }
  func.func @transform_1(%arg0: i32) -> (i32, i32) {
    %c0_i32 = arith.constant 0 : i32
    %c0_i32_0 = arith.constant 0 : i32
    return %c0_i32, %arg0 : i32, i32
  }
  func.func @transform_2(%arg0: i32) -> (i32, i32) {
    %c0_i32 = arith.constant 0 : i32
    %c0_i32_0 = arith.constant 0 : i32
    %c0_i32_1 = arith.constant 0 : i32
    return %c0_i32, %c0_i32_0 : i32, i32
  }
  func.func @transform_3(%arg0: i32) -> (i32, i32) {
    %c0_i32 = arith.constant 0 : i32
    %c0_i32_0 = arith.constant 0 : i32
    return %c0_i32, %arg0 : i32, i32
  }
}

module attributes {stable_mosaic.version = 11 : i64} {
  func.func @_wx_bias_kernel(%arg0: i32, %arg1: memref<20x250xf32, #tpu.memory_space<vmem>>, %arg2: memref<250x128xf32, #tpu.memory_space<vmem>>, %arg3: memref<20x1xf32, #tpu.memory_space<vmem>>, %arg4: memref<20x128xf32, #tpu.memory_space<vmem>>) attributes {dimension_semantics = [#tpu.dimension_semantics<parallel>], iteration_bounds = array<i64: 1>, scalar_prefetch = 0 : i64, scratch_operands = 0 : i64, tpu.core_type = #tpu.core_type<tc>, window_params = [{pipeline_mode = #tpu.pipeline_mode<synchronous>, transform_indices = @transform_0, window_bounds = array<i64: 20, 250>}, {transform_indices = @transform_1, window_bounds = array<i64: 250, 128>}, {pipeline_mode = #tpu.pipeline_mode<synchronous>, transform_indices = @transform_2, window_bounds = array<i64: 20, 1>}, {transform_indices = @transform_3, window_bounds = array<i64: 20, 128>}]} {
    %c0 = arith.constant 0 : index
    %c0_0 = arith.constant 0 : index
    %0 = vector.load %arg1[%c0, %c0_0] : memref<20x250xf32, #tpu.memory_space<vmem>>, vector<20x250xf32>
    %c0_1 = arith.constant 0 : index
    %c0_2 = arith.constant 0 : index
    %1 = vector.load %arg2[%c0_1, %c0_2] : memref<250x128xf32, #tpu.memory_space<vmem>>, vector<250x128xf32>
    %cst = arith.constant dense<0.000000e+00> : vector<20x128xf32>
    %2 = tpu.matmul %0, %1, %cst {dimension_numbers = #tpu.dot_dimension_numbers<[1], [0], [0], [1], [0, 0, 1, 1], [], []>} : vector<20x250xf32>, vector<250x128xf32>, vector<20x128xf32> -> vector<20x128xf32>
    %c0_3 = arith.constant 0 : index
    %c0_4 = arith.constant 0 : index
    %3 = vector.load %arg3[%c0_3, %c0_4] : memref<20x1xf32, #tpu.memory_space<vmem>>, vector<20x1xf32>
    %4 = vector.broadcast %3 : vector<20x1xf32> to vector<20x128xf32>
    %5 = arith.addf %2, %4 : vector<20x128xf32>
    %cst_5 = arith.constant 0.000000e+00 : f32
    %6 = vector.broadcast %cst_5 : f32 to vector<20x128xf32>
    %7 = arith.maximumf %5, %6 : vector<20x128xf32>
    %c0_6 = arith.constant 0 : index
    %c0_7 = arith.constant 0 : index
    %8 = vector.load %arg4[%c0_6, %c0_7] : memref<20x128xf32, #tpu.memory_space<vmem>>, vector<20x128xf32>
    tpu.vector_store %arg4[%c0_6, %c0_7], %7 {strides = array<i32>} : memref<20x128xf32, #tpu.memory_space<vmem>>, vector<20x128xf32>,
    return
  }
  func.func @transform_0(%arg0: i32) -> (i32, i32) {
    %c0_i32 = arith.constant 0 : i32
    %c0_i32_0 = arith.constant 0 : i32
    %c0_i32_1 = arith.constant 0 : i32
    return %c0_i32, %c0_i32_0 : i32, i32
  }
  func.func @transform_1(%arg0: i32) -> (i32, i32) {
    %c0_i32 = arith.constant 0 : i32
    %c0_i32_0 = arith.constant 0 : i32
    return %c0_i32, %arg0 : i32, i32
  }
  func.func @transform_2(%arg0: i32) -> (i32, i32) {
    %c0_i32 = arith.constant 0 : i32
    %c0_i32_0 = arith.constant 0 : i32
    %c0_i32_1 = arith.constant 0 : i32
    return %c0_i32, %c0_i32_0 : i32, i32
  }
  func.func @transform_3(%arg0: i32) -> (i32, i32) {
    %c0_i32 = arith.constant 0 : i32
    %c0_i32_0 = arith.constant 0 : i32
    return %c0_i32, %arg0 : i32, i32
  }
}

module attributes {stable_mosaic.version = 11 : i64} {
  func.func @_attention_kernel(%arg0: memref<20x32xf32, #tpu.memory_space<vmem>>, %arg1: memref<20x20xf32, #tpu.memory_space<vmem>>, %arg2: memref<20x1xf32, #tpu.memory_space<vmem>>, %arg3: memref<10x32xf32, #tpu.memory_space<vmem>>) attributes {dimension_semantics = [], scalar_prefetch = 0 : i64, scratch_operands = 0 : i64, tpu.core_type = #tpu.core_type<tc>} {
    %c0 = arith.constant 0 : index
    %c0_0 = arith.constant 0 : index
    %0 = vector.load %arg0[%c0, %c0_0] : memref<20x32xf32, #tpu.memory_space<vmem>>, vector<20x32xf32>
    %c0_1 = arith.constant 0 : index
    %c0_2 = arith.constant 0 : index
    %1 = vector.load %arg1[%c0_1, %c0_2] : memref<20x20xf32, #tpu.memory_space<vmem>>, vector<20x20xf32>
    %cst = arith.constant dense<0.000000e+00> : vector<20x32xf32>
    %2 = tpu.matmul %1, %0, %cst {dimension_numbers = #tpu.dot_dimension_numbers<[1], [0], [0], [1], [0, 0, 1, 1], [], []>} : vector<20x20xf32>, vector<20x32xf32>, vector<20x32xf32> -> vector<20x32xf32>
    %c0_3 = arith.constant 0 : index
    %c0_4 = arith.constant 0 : index
    %3 = vector.load %arg2[%c0_3, %c0_4] : memref<20x1xf32, #tpu.memory_space<vmem>>, vector<20x1xf32>
    %4 = vector.broadcast %3 : vector<20x1xf32> to vector<20x32xf32>
    %5 = arith.addf %2, %4 : vector<20x32xf32>
    %6 = vector.extract_strided_slice %5 {offsets = [0, 0], sizes = [10, 32], strides = [1, 1]} : vector<20x32xf32> to vector<10x32xf32>
    %cst_5 = arith.constant 0.000000e+00 : f32
    %7 = vector.broadcast %cst_5 : f32 to vector<10x32xf32>
    %8 = arith.maximumf %6, %7 : vector<10x32xf32>
    %9 = math.exp %8 : vector<10x32xf32>
    %10 = vector.extract_strided_slice %5 {offsets = [10, 0], sizes = [10, 32], strides = [1, 1]} : vector<20x32xf32> to vector<10x32xf32>
    %11 = arith.negf %10 : vector<10x32xf32>
    %12 = math.exp %11 : vector<10x32xf32>
    %cst_6 = arith.constant 1.000000e+00 : f32
    %13 = vector.broadcast %cst_6 : f32 to vector<10x32xf32>
    %14 = arith.addf %13, %12 : vector<10x32xf32>
    %15 = arith.divf %13, %14 : vector<10x32xf32>
    %16 = tpu.iota {dimensions = array<i32: 0>} : vector<32x2xi32>
    %17 = tpu.iota {dimensions = array<i32: 1>} : vector<32x2xi32>
    %c16_i32 = arith.constant 16 : i32
    %18 = vector.broadcast %c16_i32 : i32 to vector<32x2xi32>
    %19 = arith.muli %17, %18 : vector<32x2xi32>
    %20 = arith.cmpi sge, %16, %19 : vector<32x2xi32>
    %c1_i32 = arith.constant 1 : i32
    %21 = vector.broadcast %c1_i32 : i32 to vector<32x2xi32>
    %22 = arith.addi %17, %21 : vector<32x2xi32>
    %c16_i32_7 = arith.constant 16 : i32
    %23 = vector.broadcast %c16_i32_7 : i32 to vector<32x2xi32>
    %24 = arith.muli %22, %23 : vector<32x2xi32>
    %25 = arith.cmpi slt, %16, %24 : vector<32x2xi32>
    %26 = arith.andi %20, %25 : vector<32x2xi1>
    %27 = arith.extui %26 : vector<32x2xi1> to vector<32x2xi32>
    %28 = arith.sitofp %27 : vector<32x2xi32> to vector<32x2xf32>
    %29 = tpu.iota {dimensions = array<i32: 1>} : vector<2x32xi32>
    %30 = tpu.iota {dimensions = array<i32: 0>} : vector<2x32xi32>
    %c16_i32_8 = arith.constant 16 : i32
    %31 = vector.broadcast %c16_i32_8 : i32 to vector<2x32xi32>
    %32 = arith.muli %30, %31 : vector<2x32xi32>
    %33 = arith.cmpi sge, %29, %32 : vector<2x32xi32>
    %c1_i32_9 = arith.constant 1 : i32
    %34 = vector.broadcast %c1_i32_9 : i32 to vector<2x32xi32>
    %35 = arith.addi %30, %34 : vector<2x32xi32>
    %c16_i32_10 = arith.constant 16 : i32
    %36 = vector.broadcast %c16_i32_10 : i32 to vector<2x32xi32>
    %37 = arith.muli %35, %36 : vector<2x32xi32>
    %38 = arith.cmpi slt, %29, %37 : vector<2x32xi32>
    %39 = arith.andi %33, %38 : vector<2x32xi1>
    %40 = arith.extui %39 : vector<2x32xi1> to vector<2x32xi32>
    %41 = arith.sitofp %40 : vector<2x32xi32> to vector<2x32xf32>
    %cst_11 = arith.constant dense<0.000000e+00> : vector<10x2xf32>
    %42 = tpu.matmul %9, %28, %cst_11 {dimension_numbers = #tpu.dot_dimension_numbers<[1], [0], [0], [1], [0, 0, 1, 1], [], []>} : vector<10x32xf32>, vector<32x2xf32>, vector<10x2xf32> -> vector<10x2xf32>
    %cst_12 = arith.constant dense<0.000000e+00> : vector<10x32xf32>
    %43 = tpu.matmul %42, %41, %cst_12 {dimension_numbers = #tpu.dot_dimension_numbers<[1], [0], [0], [1], [0, 0, 1, 1], [], []>} : vector<10x2xf32>, vector<2x32xf32>, vector<10x32xf32> -> vector<10x32xf32>
    %44 = arith.divf %9, %43 : vector<10x32xf32>
    %45 = arith.mulf %44, %15 : vector<10x32xf32>
    %c0_13 = arith.constant 0 : index
    %c0_14 = arith.constant 0 : index
    %46 = vector.load %arg3[%c0_13, %c0_14] : memref<10x32xf32, #tpu.memory_space<vmem>>, vector<10x32xf32>
    tpu.vector_store %arg3[%c0_13, %c0_14], %45 {strides = array<i32>} : memref<10x32xf32, #tpu.memory_space<vmem>>, vector<10x32xf32>,
    return
  }
}

module attributes {stable_mosaic.version = 11 : i64} {
  func.func @_attention_kernel(%arg0: memref<10x288xf32, #tpu.memory_space<vmem>>, %arg1: memref<20x10xf32, #tpu.memory_space<vmem>>, %arg2: memref<20x1xf32, #tpu.memory_space<vmem>>, %arg3: memref<10x288xf32, #tpu.memory_space<vmem>>) attributes {dimension_semantics = [], scalar_prefetch = 0 : i64, scratch_operands = 0 : i64, tpu.core_type = #tpu.core_type<tc>} {
    %c0 = arith.constant 0 : index
    %c0_0 = arith.constant 0 : index
    %0 = vector.load %arg0[%c0, %c0_0] : memref<10x288xf32, #tpu.memory_space<vmem>>, vector<10x288xf32>
    %c0_1 = arith.constant 0 : index
    %c0_2 = arith.constant 0 : index
    %1 = vector.load %arg1[%c0_1, %c0_2] : memref<20x10xf32, #tpu.memory_space<vmem>>, vector<20x10xf32>
    %cst = arith.constant dense<0.000000e+00> : vector<20x288xf32>
    %2 = tpu.matmul %1, %0, %cst {dimension_numbers = #tpu.dot_dimension_numbers<[1], [0], [0], [1], [0, 0, 1, 1], [], []>} : vector<20x10xf32>, vector<10x288xf32>, vector<20x288xf32> -> vector<20x288xf32>
    %c0_3 = arith.constant 0 : index
    %c0_4 = arith.constant 0 : index
    %3 = vector.load %arg2[%c0_3, %c0_4] : memref<20x1xf32, #tpu.memory_space<vmem>>, vector<20x1xf32>
    %4 = vector.broadcast %3 : vector<20x1xf32> to vector<20x288xf32>
    %5 = arith.addf %2, %4 : vector<20x288xf32>
    %6 = vector.extract_strided_slice %5 {offsets = [0, 0], sizes = [10, 288], strides = [1, 1]} : vector<20x288xf32> to vector<10x288xf32>
    %cst_5 = arith.constant 0.000000e+00 : f32
    %7 = vector.broadcast %cst_5 : f32 to vector<10x288xf32>
    %8 = arith.maximumf %6, %7 : vector<10x288xf32>
    %9 = math.exp %8 : vector<10x288xf32>
    %10 = vector.extract_strided_slice %5 {offsets = [10, 0], sizes = [10, 288], strides = [1, 1]} : vector<20x288xf32> to vector<10x288xf32>
    %11 = arith.negf %10 : vector<10x288xf32>
    %12 = math.exp %11 : vector<10x288xf32>
    %cst_6 = arith.constant 1.000000e+00 : f32
    %13 = vector.broadcast %cst_6 : f32 to vector<10x288xf32>
    %14 = arith.addf %13, %12 : vector<10x288xf32>
    %15 = arith.divf %13, %14 : vector<10x288xf32>
    %16 = tpu.iota {dimensions = array<i32: 0>} : vector<288x2xi32>
    %17 = tpu.iota {dimensions = array<i32: 1>} : vector<288x2xi32>
    %c144_i32 = arith.constant 144 : i32
    %18 = vector.broadcast %c144_i32 : i32 to vector<288x2xi32>
    %19 = arith.muli %17, %18 : vector<288x2xi32>
    %20 = arith.cmpi sge, %16, %19 : vector<288x2xi32>
    %c1_i32 = arith.constant 1 : i32
    %21 = vector.broadcast %c1_i32 : i32 to vector<288x2xi32>
    %22 = arith.addi %17, %21 : vector<288x2xi32>
    %c144_i32_7 = arith.constant 144 : i32
    %23 = vector.broadcast %c144_i32_7 : i32 to vector<288x2xi32>
    %24 = arith.muli %22, %23 : vector<288x2xi32>
    %25 = arith.cmpi slt, %16, %24 : vector<288x2xi32>
    %26 = arith.andi %20, %25 : vector<288x2xi1>
    %27 = arith.extui %26 : vector<288x2xi1> to vector<288x2xi32>
    %28 = arith.sitofp %27 : vector<288x2xi32> to vector<288x2xf32>
    %29 = tpu.iota {dimensions = array<i32: 1>} : vector<2x288xi32>
    %30 = tpu.iota {dimensions = array<i32: 0>} : vector<2x288xi32>
    %c144_i32_8 = arith.constant 144 : i32
    %31 = vector.broadcast %c144_i32_8 : i32 to vector<2x288xi32>
    %32 = arith.muli %30, %31 : vector<2x288xi32>
    %33 = arith.cmpi sge, %29, %32 : vector<2x288xi32>
    %c1_i32_9 = arith.constant 1 : i32
    %34 = vector.broadcast %c1_i32_9 : i32 to vector<2x288xi32>
    %35 = arith.addi %30, %34 : vector<2x288xi32>
    %c144_i32_10 = arith.constant 144 : i32
    %36 = vector.broadcast %c144_i32_10 : i32 to vector<2x288xi32>
    %37 = arith.muli %35, %36 : vector<2x288xi32>
    %38 = arith.cmpi slt, %29, %37 : vector<2x288xi32>
    %39 = arith.andi %33, %38 : vector<2x288xi1>
    %40 = arith.extui %39 : vector<2x288xi1> to vector<2x288xi32>
    %41 = arith.sitofp %40 : vector<2x288xi32> to vector<2x288xf32>
    %cst_11 = arith.constant dense<0.000000e+00> : vector<10x2xf32>
    %42 = tpu.matmul %9, %28, %cst_11 {dimension_numbers = #tpu.dot_dimension_numbers<[1], [0], [0], [1], [0, 0, 1, 1], [], []>} : vector<10x288xf32>, vector<288x2xf32>, vector<10x2xf32> -> vector<10x2xf32>
    %cst_12 = arith.constant dense<0.000000e+00> : vector<10x288xf32>
    %43 = tpu.matmul %42, %41, %cst_12 {dimension_numbers = #tpu.dot_dimension_numbers<[1], [0], [0], [1], [0, 0, 1, 1], [], []>} : vector<10x2xf32>, vector<2x288xf32>, vector<10x288xf32> -> vector<10x288xf32>
    %44 = arith.divf %9, %43 : vector<10x288xf32>
    %45 = arith.mulf %44, %15 : vector<10x288xf32>
    %c0_13 = arith.constant 0 : index
    %c0_14 = arith.constant 0 : index
    %46 = vector.load %arg3[%c0_13, %c0_14] : memref<10x288xf32, #tpu.memory_space<vmem>>, vector<10x288xf32>
    tpu.vector_store %arg3[%c0_13, %c0_14], %45 {strides = array<i32>} : memref<10x288xf32, #tpu.memory_space<vmem>>, vector<10x288xf32>,
    return
  }
}

module attributes {stable_mosaic.version = 11 : i64} {
  func.func @_fc_heads_kernel(%arg0: memref<2x320xf32, #tpu.memory_space<vmem>>, %arg1: memref<2x1440xf32, #tpu.memory_space<vmem>>, %arg2: memref<2x160xf32, #tpu.memory_space<vmem>>, %arg3: memref<320x50xf32, #tpu.memory_space<vmem>>, %arg4: memref<1x50xf32, #tpu.memory_space<vmem>>, %arg5: memref<50x10xf32, #tpu.memory_space<vmem>>, %arg6: memref<1x10xf32, #tpu.memory_space<vmem>>, %arg7: memref<1440x128xf32, #tpu.memory_space<vmem>>, %arg8: memref<1x128xf32, #tpu.memory_space<vmem>>, %arg9: memref<128x10xf32, #tpu.memory_space<vmem>>, %arg10: memref<1x10xf32, #tpu.memory_space<vmem>>, %arg11: memref<160x32xf32, #tpu.memory_space<vmem>>, %arg12: memref<1x32xf32, #tpu.memory_space<vmem>>, %arg13: memref<32x10xf32, #tpu.memory_space<vmem>>, %arg14: memref<1x10xf32, #tpu.memory_space<vmem>>, %arg15: memref<2x10xf32, #tpu.memory_space<vmem>>, %arg16: memref<2x10xf32, #tpu.memory_space<vmem>>, %arg17: memref<2x10xf32, #tpu.memory_space<vmem>>) attributes {dimension_semantics = [], scalar_prefetch = 0 : i64, scratch_operands = 0 : i64, tpu.core_type = #tpu.core_type<tc>} {
    %c0 = arith.constant 0 : index
    %c0_0 = arith.constant 0 : index
    %0 = vector.load %arg0[%c0, %c0_0] : memref<2x320xf32, #tpu.memory_space<vmem>>, vector<2x320xf32>
    %c0_1 = arith.constant 0 : index
    %c0_2 = arith.constant 0 : index
    %1 = vector.load %arg3[%c0_1, %c0_2] : memref<320x50xf32, #tpu.memory_space<vmem>>, vector<320x50xf32>
    %c0_3 = arith.constant 0 : index
    %c0_4 = arith.constant 0 : index
    %2 = vector.load %arg4[%c0_3, %c0_4] : memref<1x50xf32, #tpu.memory_space<vmem>>, vector<1x50xf32>
    %c0_5 = arith.constant 0 : index
    %c0_6 = arith.constant 0 : index
    %3 = vector.load %arg5[%c0_5, %c0_6] : memref<50x10xf32, #tpu.memory_space<vmem>>, vector<50x10xf32>
    %c0_7 = arith.constant 0 : index
    %c0_8 = arith.constant 0 : index
    %4 = vector.load %arg6[%c0_7, %c0_8] : memref<1x10xf32, #tpu.memory_space<vmem>>, vector<1x10xf32>
    %cst = arith.constant dense<0.000000e+00> : vector<2x50xf32>
    %5 = tpu.matmul %0, %1, %cst {dimension_numbers = #tpu.dot_dimension_numbers<[1], [0], [0], [1], [0, 0, 1, 1], [], []>} : vector<2x320xf32>, vector<320x50xf32>, vector<2x50xf32> -> vector<2x50xf32>
    %6 = vector.broadcast %2 : vector<1x50xf32> to vector<2x50xf32>
    %7 = arith.addf %5, %6 : vector<2x50xf32>
    %cst_9 = arith.constant 0.000000e+00 : f32
    %8 = vector.broadcast %cst_9 : f32 to vector<2x50xf32>
    %9 = arith.maximumf %7, %8 : vector<2x50xf32>
    %cst_10 = arith.constant dense<0.000000e+00> : vector<2x10xf32>
    %10 = tpu.matmul %9, %3, %cst_10 {dimension_numbers = #tpu.dot_dimension_numbers<[1], [0], [0], [1], [0, 0, 1, 1], [], []>} : vector<2x50xf32>, vector<50x10xf32>, vector<2x10xf32> -> vector<2x10xf32>
    %11 = vector.broadcast %4 : vector<1x10xf32> to vector<2x10xf32>
    %12 = arith.addf %10, %11 : vector<2x10xf32>
    %c0_11 = arith.constant 0 : index
    %c0_12 = arith.constant 0 : index
    %13 = vector.load %arg15[%c0_11, %c0_12] : memref<2x10xf32, #tpu.memory_space<vmem>>, vector<2x10xf32>
    tpu.vector_store %arg15[%c0_11, %c0_12], %12 {strides = array<i32>} : memref<2x10xf32, #tpu.memory_space<vmem>>, vector<2x10xf32>,
    %c0_13 = arith.constant 0 : index
    %c0_14 = arith.constant 0 : index
    %14 = vector.load %arg1[%c0_13, %c0_14] : memref<2x1440xf32, #tpu.memory_space<vmem>>, vector<2x1440xf32>
    %c0_15 = arith.constant 0 : index
    %c0_16 = arith.constant 0 : index
    %15 = vector.load %arg7[%c0_15, %c0_16] : memref<1440x128xf32, #tpu.memory_space<vmem>>, vector<1440x128xf32>
    %c0_17 = arith.constant 0 : index
    %c0_18 = arith.constant 0 : index
    %16 = vector.load %arg8[%c0_17, %c0_18] : memref<1x128xf32, #tpu.memory_space<vmem>>, vector<1x128xf32>
    %c0_19 = arith.constant 0 : index
    %c0_20 = arith.constant 0 : index
    %17 = vector.load %arg9[%c0_19, %c0_20] : memref<128x10xf32, #tpu.memory_space<vmem>>, vector<128x10xf32>
    %c0_21 = arith.constant 0 : index
    %c0_22 = arith.constant 0 : index
    %18 = vector.load %arg10[%c0_21, %c0_22] : memref<1x10xf32, #tpu.memory_space<vmem>>, vector<1x10xf32>
    %cst_23 = arith.constant dense<0.000000e+00> : vector<2x128xf32>
    %19 = tpu.matmul %14, %15, %cst_23 {dimension_numbers = #tpu.dot_dimension_numbers<[1], [0], [0], [1], [0, 0, 1, 1], [], []>} : vector<2x1440xf32>, vector<1440x128xf32>, vector<2x128xf32> -> vector<2x128xf32>
    %20 = vector.broadcast %16 : vector<1x128xf32> to vector<2x128xf32>
    %21 = arith.addf %19, %20 : vector<2x128xf32>
    %cst_24 = arith.constant 0.000000e+00 : f32
    %22 = vector.broadcast %cst_24 : f32 to vector<2x128xf32>
    %23 = arith.maximumf %21, %22 : vector<2x128xf32>
    %cst_25 = arith.constant dense<0.000000e+00> : vector<2x10xf32>
    %24 = tpu.matmul %23, %17, %cst_25 {dimension_numbers = #tpu.dot_dimension_numbers<[1], [0], [0], [1], [0, 0, 1, 1], [], []>} : vector<2x128xf32>, vector<128x10xf32>, vector<2x10xf32> -> vector<2x10xf32>
    %25 = vector.broadcast %18 : vector<1x10xf32> to vector<2x10xf32>
    %26 = arith.addf %24, %25 : vector<2x10xf32>
    %c0_26 = arith.constant 0 : index
    %c0_27 = arith.constant 0 : index
    %27 = vector.load %arg16[%c0_26, %c0_27] : memref<2x10xf32, #tpu.memory_space<vmem>>, vector<2x10xf32>
    tpu.vector_store %arg16[%c0_26, %c0_27], %26 {strides = array<i32>} : memref<2x10xf32, #tpu.memory_space<vmem>>, vector<2x10xf32>,
    %c0_28 = arith.constant 0 : index
    %c0_29 = arith.constant 0 : index
    %28 = vector.load %arg2[%c0_28, %c0_29] : memref<2x160xf32, #tpu.memory_space<vmem>>, vector<2x160xf32>
    %c0_30 = arith.constant 0 : index
    %c0_31 = arith.constant 0 : index
    %29 = vector.load %arg11[%c0_30, %c0_31] : memref<160x32xf32, #tpu.memory_space<vmem>>, vector<160x32xf32>
    %c0_32 = arith.constant 0 : index
    %c0_33 = arith.constant 0 : index
    %30 = vector.load %arg12[%c0_32, %c0_33] : memref<1x32xf32, #tpu.memory_space<vmem>>, vector<1x32xf32>
    %c0_34 = arith.constant 0 : index
    %c0_35 = arith.constant 0 : index
    %31 = vector.load %arg13[%c0_34, %c0_35] : memref<32x10xf32, #tpu.memory_space<vmem>>, vector<32x10xf32>
    %c0_36 = arith.constant 0 : index
    %c0_37 = arith.constant 0 : index
    %32 = vector.load %arg14[%c0_36, %c0_37] : memref<1x10xf32, #tpu.memory_space<vmem>>, vector<1x10xf32>
    %cst_38 = arith.constant dense<0.000000e+00> : vector<2x32xf32>
    %33 = tpu.matmul %28, %29, %cst_38 {dimension_numbers = #tpu.dot_dimension_numbers<[1], [0], [0], [1], [0, 0, 1, 1], [], []>} : vector<2x160xf32>, vector<160x32xf32>, vector<2x32xf32> -> vector<2x32xf32>
    %34 = vector.broadcast %30 : vector<1x32xf32> to vector<2x32xf32>
    %35 = arith.addf %33, %34 : vector<2x32xf32>
    %cst_39 = arith.constant 0.000000e+00 : f32
    %36 = vector.broadcast %cst_39 : f32 to vector<2x32xf32>
    %37 = arith.maximumf %35, %36 : vector<2x32xf32>
    %cst_40 = arith.constant dense<0.000000e+00> : vector<2x10xf32>
    %38 = tpu.matmul %37, %31, %cst_40 {dimension_numbers = #tpu.dot_dimension_numbers<[1], [0], [0], [1], [0, 0, 1, 1], [], []>} : vector<2x32xf32>, vector<32x10xf32>, vector<2x10xf32> -> vector<2x10xf32>
    %39 = vector.broadcast %32 : vector<1x10xf32> to vector<2x10xf32>
    %40 = arith.addf %38, %39 : vector<2x10xf32>
    %c0_41 = arith.constant 0 : index
    %c0_42 = arith.constant 0 : index
    %41 = vector.load %arg17[%c0_41, %c0_42] : memref<2x10xf32, #tpu.memory_space<vmem>>, vector<2x10xf32>
    tpu.vector_store %arg17[%c0_41, %c0_42], %40 {strides = array<i32>} : memref<2x10xf32, #tpu.memory_space<vmem>>, vector<2x10xf32>,
    return
  }
}

</mosaic_0001>

<llo_original>
// kernel: net_forward.5
$region0: #{net_forward.5}
  #allocation0 [shape = 'u32[]', space=smem, size = 0x4, offset = 0x4, fixed_abs, tag = 'smem constant byte address 0x4 - core index']
  #allocation1 [shape = 'u32[144,128]{1,0:T(1,128)}', space=vmem, size = 0x12000, scoped, tag = 'internal scratch']
  %s0 = inlined_call_operand.vmem [shape: f32[10,25], index: 0, kind: input, shape index: {}]
  %s1 = inlined_call_operand.vmem [shape: f32[25,1152], index: 1, kind: input, shape index: {}]
  %s2 = inlined_call_operand.vmem [shape: f32[10,1], index: 2, kind: input, shape index: {}]
  %s3 = inlined_call_operand.vmem [shape: f32[10,1152], index: 3, kind: output, shape index: {}]
  %s4 = sld [smem:[#allocation0]]
  $region173: #{net_forward.5} parent=0
    _
  %s6 = ssub.s32 1, %s4
  %s7 = scalar_select 0, %s6, %s4
  $region1: #{net_forward.5} parent=0
    #allocation2 [shape = 'u8[131072]{0}', space=vmem, size = 0x20000, scoped, tag = 'input window, operand 1']
    #allocation3 [shape = 'u8[65536]{0}', space=vmem, size = 0x10000, scoped, tag = 'output window, operand 0']
    loop: start=0, step=1, limit=5
    $region2: #{net_forward.5} parent=1 // loop_pre_header
      _
    $region3: #{net_forward.5} parent=1 // loop_header
      %s9 = sphi 0, %s13
      %p10 = scmp.ge.s32.totalorder %s9, 5
      %s17 = sphi 0, %s17
      %s19 = sphi 0, %s17
      %s20 = sphi 0, %s19
      %s34 = sphi 0, %s20
      %s40 = sphi 0, %s42
      %s43 = sphi 0, %s40
      %s44 = sphi 0, %s43
      %s60 = sphi 0, %s44
      %s64 = sphi 0, %s64
      %s66 = sphi 0, %s64
      %s67 = sphi 0, %s66
      %s81 = sphi 0, %s67
      %s87 = sphi 0, %s89
      %s90 = sphi 0, %s87
      %s91 = sphi 0, %s90
      %s107 = sphi 0, %s91
    $region4: #{net_forward.5} parent=1 // loop_header_branch
      %12 = sbr.rel (%p10) target = $region8
    $region5: #{net_forward.5} parent=1 // loop_body
      %s14 = ssub.s32 %s9, 1
      %s15 = ssub.s32 %s9, 2
      %s16 = sadd.s32 %s9, 1
      %s18 = sadd.s32 %s17, 1
      %p21 = scmp.eq.s32.totalorder %s9, 2
      %p22 = scmp.ne.s32.totalorder %s17, %s19
      %p23 = scmp.eq.s32.totalorder %s9, 0
      %p24 = por %p22, %p23
      %p25 = scmp.ne.s32.totalorder %s17, %s19
      %p26 = scmp.eq.s32.totalorder %s14, 2
      %p27 = por %p25, %p26
      %p28 = scmp.ne.s32.totalorder %s19, %s20
      %p29 = scmp.eq.s32.totalorder %s14, 0
      %p30 = por %p28, %p29
      %p31 = scmp.ne.s32.totalorder %s19, %s20
      %p32 = scmp.eq.s32.totalorder %s15, 2
      %p33 = por %p31, %p32
      %p35 = scmp.ne.s32.totalorder %s20, %s34
      %p36 = scmp.eq.s32.totalorder %s15, 0
      %p37 = por %p35, %p36
      %s38 = ssub.s32 %s9, %s16
      %p39 = scmp.eq.s32.totalorder %s38, 0
      %s41 = sadd.s32 %s40, 1
      %s42 = scalar_select %p39, %s40, %s41
      %p45 = pneg %p39
      %p46 = scmp.eq.s32.totalorder %s9, 2
      %p47 = por %p45, %p46
      %p48 = scmp.ne.s32.totalorder %s40, %s43
      %p49 = scmp.eq.s32.totalorder %s9, 0
      %p50 = por %p48, %p49
      %p51 = scmp.ne.s32.totalorder %s40, %s43
      %p52 = scmp.eq.s32.totalorder %s14, 2
      %p53 = por %p51, %p52
      %p54 = scmp.ne.s32.totalorder %s43, %s44
      %p55 = scmp.eq.s32.totalorder %s14, 0
      %p56 = por %p54, %p55
      %p57 = scmp.ne.s32.totalorder %s43, %s44
      %p58 = scmp.eq.s32.totalorder %s15, 2
      %p59 = por %p57, %p58
      %p61 = scmp.ne.s32.totalorder %s44, %s60
      %p62 = scmp.eq.s32.totalorder %s15, 0
      %p63 = por %p61, %p62
      %s65 = sadd.s32 %s64, 1
      %p68 = scmp.eq.s32.totalorder %s9, 2
      %p69 = scmp.ne.s32.totalorder %s64, %s66
      %p70 = scmp.eq.s32.totalorder %s9, 0
      %p71 = por %p69, %p70
      %p72 = scmp.ne.s32.totalorder %s64, %s66
      %p73 = scmp.eq.s32.totalorder %s14, 2
      %p74 = por %p72, %p73
      %p75 = scmp.ne.s32.totalorder %s66, %s67
      %p76 = scmp.eq.s32.totalorder %s14, 0
      %p77 = por %p75, %p76
      %p78 = scmp.ne.s32.totalorder %s66, %s67
      %p79 = scmp.eq.s32.totalorder %s15, 2
      %p80 = por %p78, %p79
      %p82 = scmp.ne.s32.totalorder %s67, %s81
      %p83 = scmp.eq.s32.totalorder %s15, 0
      %p84 = por %p82, %p83
      %s85 = ssub.s32 %s9, %s16
      %p86 = scmp.eq.s32.totalorder %s85, 0
      %s88 = sadd.s32 %s87, 1
      %s89 = scalar_select %p86, %s87, %s88
      %p92 = pneg %p86
      %p93 = scmp.eq.s32.totalorder %s9, 2
      %p94 = por %p92, %p93
      %p95 = scmp.ne.s32.totalorder %s87, %s90
      %p96 = scmp.eq.s32.totalorder %s9, 0
      %p97 = por %p95, %p96
      %p98 = scmp.ne.s32.totalorder %s87, %s90
      %p99 = scmp.eq.s32.totalorder %s14, 2
      %p100 = por %p98, %p99
      %p101 = scmp.ne.s32.totalorder %s90, %s91
      %p102 = scmp.eq.s32.totalorder %s14, 0
      %p103 = por %p101, %p102
      %p104 = scmp.ne.s32.totalorder %s90, %s91
      %p105 = scmp.eq.s32.totalorder %s15, 2
      %p106 = por %p104, %p105
      %p108 = scmp.ne.s32.totalorder %s91, %s107
      %p109 = scmp.eq.s32.totalorder %s15, 0
      %p110 = por %p108, %p109
      %p111 = scmp.le.s32.totalorder 1, %s9
      %p112 = scmp.lt.s32.totalorder %s9, 4
      %p113 = pnand %p111, %p112
      %p114 = pneg %p113
      // Predicated region
      $region9: #{net_forward.5} parent=5 // pred_check
        _
      $region10: #{net_forward.5} parent=5 // pred_check_branch
        %116 = sbr.rel (%p113) target = $region12
      $region11: #{net_forward.5} parent=5 // pred_region
        %s117 = ssub.s32 %s9, 1
        // Predicated region
        $region13: #{net_forward.5} parent=11 // pred_check
          %p118 = pneg %p30
        $region14: #{net_forward.5} parent=11 // pred_check_branch
          %120 = sbr.rel (%p118) target = $region16
        $region15: #{net_forward.5} parent=11 // pred_region
          _
        $region16: #{net_forward.5} parent=11 // pred_fallthru
          _
        // Predicated region
        $region17: #{net_forward.5} parent=11 // pred_check
          %p121 = pneg %p77
        $region18: #{net_forward.5} parent=11 // pred_check_branch
          %123 = sbr.rel (%p121) target = $region20
        $region19: #{net_forward.5} parent=11 // pred_region
          _
        $region20: #{net_forward.5} parent=11 // pred_fallthru
          _
      $region12: #{net_forward.5} parent=5 // pred_fallthru
        _
      %p124 = scmp.lt.s32.totalorder %s9, 3
      // Predicated region
      $region21: #{net_forward.5} parent=5 // pred_check
        %p125 = pneg %p124
      $region22: #{net_forward.5} parent=5 // pred_check_branch
        %127 = sbr.rel (%p125) target = $region24
      $region23: #{net_forward.5} parent=5 // pred_region
        // Predicated region
        $region25: #{net_forward.5} parent=23 // pred_check
          %p128 = pneg %p50
        $region26: #{net_forward.5} parent=23 // pred_check_branch
          %130 = sbr.rel (%p128) target = $region28
        $region27: #{net_forward.5} parent=23 // pred_region
          %s131 = sand.u32 %s40, 1
          %s132 = sand.u32 %s40, 1
          %s133 = smul.addr %s132, 128
          %s134 = scalar_lea.vmem [#allocation2], %s133
          %s135 = smul.u32 4, %s9
          %s136 = ssub.s32 9, %s135
          %p137 = scmp.lt.s32.totalorder %s136, 4
          %s138 = scalar_select %p137, %s136, 4
          %s139 = smul.u32 512, %s138
          %p140 = scmp.ne.s32.totalorder 0, %s139
          %s141 = smul.addr %s135, 8
          %s142 = scalar_lea.vmem %s1, %s141
          %s143 = smul.u32 %s138, 8
          // Predicated region
          $region29: #{net_forward.5} parent=27 // pred_check
            %p144 = pneg %p140
          $region30: #{net_forward.5} parent=27 // pred_check_branch
            %146 = sbr.rel (%p144) target = $region32
          $region31: #{net_forward.5} parent=27 // pred_region
            %p147 = scmp.lt.u32.totalorder %s143, 8
            %p148 = pneg %p147
            // Predicated region
            $region33: #{net_forward.5} parent=31 // pred_check
              _
            $region34: #{net_forward.5} parent=31 // pred_check_branch
              %150 = sbr.rel (%p147) target = $region36
            $region35: #{net_forward.5} parent=31 // pred_region
              %s171 = sand.u32 %s143, 7
              %p172 = scmp.eq.s32.totalorder %s171, 0
              // Predicated region
              $region48: #{net_forward.5} parent=35 // pred_check
                %p173 = pneg %p172
              $region49: #{net_forward.5} parent=35 // pred_check_branch
                %175 = sbr.rel (%p173) target = $region51
              $region50: #{net_forward.5} parent=35 // pred_region
                %s176 = sshrl.u32 %s143, 3
                %s177 = sshrl.u32 %s176, 4
                // While loop
                $region52: #{net_forward.5} parent=50 // loop_pre_header
                  _
                $region53: #{net_forward.5} parent=50 // loop_header
                  %s181 = sphi 0, %s183
                  %p182 = scmp.ge.s32.totalorder %s181, %s177
                  %s186 = sphi 0, %s319
                  %s187 = sphi %s142, %s322
                  %s188 = sphi %s134, %s323
                $region54: #{net_forward.5} parent=50 // loop_header_branch
                  %185 = sbr.rel (%p182) target = $region58
                $region55: #{net_forward.5} parent=50 // loop_body
                  %v189 = vld [vmem:[%s187] sm:$0xff]
                  %190 = vst [vmem:[%s188] sm:$0xff] %v189
                  %v191 = vld [vmem:[%s187 + $0x8] sm:$0xff]
                  %192 = vst [vmem:[%s188 + $0x8] sm:$0xff] %v191
                  %v193 = vld [vmem:[%s187 + $0x10] sm:$0xff]
                  %194 = vst [vmem:[%s188 + $0x10] sm:$0xff] %v193
                  %v195 = vld [vmem:[%s187 + $0x18] sm:$0xff]
                  %196 = vst [vmem:[%s188 + $0x18] sm:$0xff] %v195
                  %v197 = vld [vmem:[%s187 + $0x20] sm:$0xff]
                  %198 = vst [vmem:[%s188 + $0x20] sm:$0xff] %v197
                  %v199 = vld [vmem:[%s187 + $0x28] sm:$0xff]
                  %200 = vst [vmem:[%s188 + $0x28] sm:$0xff] %v199
                  %v201 = vld [vmem:[%s187 + $0x30] sm:$0xff]
                  %202 = vst [vmem:[%s188 + $0x30] sm:$0xff] %v201
                  %v203 = vld [vmem:[%s187 + $0x38] sm:$0xff]
                  %204 = vst [vmem:[%s188 + $0x38] sm:$0xff] %v203
                  %v205 = vld [vmem:[%s187 + $0x40] sm:$0xff]
                  %206 = vst [vmem:[%s188 + $0x40] sm:$0xff] %v205
                  %v207 = vld [vmem:[%s187 + $0x48] sm:$0xff]
                  %208 = vst [vmem:[%s188 + $0x48] sm:$0xff] %v207
                  %v209 = vld [vmem:[%s187 + $0x50] sm:$0xff]
                  %210 = vst [vmem:[%s188 + $0x50] sm:$0xff] %v209
                  %v211 = vld [vmem:[%s187 + $0x58] sm:$0xff]
                  %212 = vst [vmem:[%s188 + $0x58] sm:$0xff] %v211
                  %v213 = vld [vmem:[%s187 + $0x60] sm:$0xff]
                  %214 = vst [vmem:[%s188 + $0x60] sm:$0xff] %v213
                  %v215 = vld [vmem:[%s187 + $0x68] sm:$0xff]
                  %216 = vst [vmem:[%s188 + $0x68] sm:$0xff] %v215
                  %v217 = vld [vmem:[%s187 + $0x70] sm:$0xff]
                  %218 = vst [vmem:[%s188 + $0x70] sm:$0xff] %v217
                  %v219 = vld [vmem:[%s187 + $0x78] sm:$0xff]
                  %220 = vst [vmem:[%s188 + $0x78] sm:$0xff] %v219
                  %v221 = vld [vmem:[%s187 + $0x48] sm:$0xff]
                  %222 = vst [vmem:[%s188 + $0x20] sm:$0xff] %v221
                  %v223 = vld [vmem:[%s187 + $0x50] sm:$0xff]
                  %224 = vst [vmem:[%s188 + $0x28] sm:$0xff] %v223
                  %v225 = vld [vmem:[%s187 + $0x58] sm:$0xff]
                  %226 = vst [vmem:[%s188 + $0x30] sm:$0xff] %v225
                  %v227 = vld [vmem:[%s187 + $0x60] sm:$0xff]
                  %228 = vst [vmem:[%s188 + $0x38] sm:$0xff] %v227
                  %v229 = vld [vmem:[%s187 + $0x68] sm:$0xff]
                  %230 = vst [vmem:[%s188 + $0x40] sm:$0xff] %v229
                  %v231 = vld [vmem:[%s187 + $0x70] sm:$0xff]
                  %232 = vst [vmem:[%s188 + $0x48] sm:$0xff] %v231
                  %v233 = vld [vmem:[%s187 + $0x78] sm:$0xff]
                  %234 = vst [vmem:[%s188 + $0x50] sm:$0xff] %v233
                  %v235 = vld [vmem:[%s187 + $0x80] sm:$0xff]
                  %236 = vst [vmem:[%s188 + $0x58] sm:$0xff] %v235
                  %v237 = vld [vmem:[%s187 + $0x88] sm:$0xff]
                  %238 = vst [vmem:[%s188 + $0x60] sm:$0xff] %v237
                  %v239 = vld [vmem:[%s187 + $0x90] sm:$0xff]
                  %240 = vst [vmem:[%s188 + $0x68] sm:$0xff] %v239
                  %v241 = vld [vmem:[%s187 + $0x98] sm:$0xff]
                  %242 = vst [vmem:[%s188 + $0x70] sm:$0xff] %v241
                  %v243 = vld [vmem:[%s187 + $0xa0] sm:$0xff]
                  %244 = vst [vmem:[%s188 + $0x78] sm:$0xff] %v243
                  %v245 = vld [vmem:[%s187 + $0xa8] sm:$0xff]
                  %246 = vst [vmem:[%s188 + $0x80] sm:$0xff] %v245
                  %v247 = vld [vmem:[%s187 + $0xb0] sm:$0xff]
                  %248 = vst [vmem:[%s188 + $0x88] sm:$0xff] %v247
                  %v249 = vld [vmem:[%s187 + $0xb8] sm:$0xff]
                  %250 = vst [vmem:[%s188 + $0x90] sm:$0xff] %v249
                  %v251 = vld [vmem:[%s187 + $0xc0] sm:$0xff]
                  %252 = vst [vmem:[%s188 + $0x98] sm:$0xff] %v251
                  %v253 = vld [vmem:[%s187 + $0x90] sm:$0xff]
                  %254 = vst [vmem:[%s188 + $0x40] sm:$0xff] %v253
                  %v255 = vld [vmem:[%s187 + $0x98] sm:$0xff]
                  %256 = vst [vmem:[%s188 + $0x48] sm:$0xff] %v255
                  %v257 = vld [vmem:[%s187 + $0xa0] sm:$0xff]
                  %258 = vst [vmem:[%s188 + $0x50] sm:$0xff] %v257
                  %v259 = vld [vmem:[%s187 + $0xa8] sm:$0xff]
                  %260 = vst [vmem:[%s188 + $0x58] sm:$0xff] %v259
                  %v261 = vld [vmem:[%s187 + $0xb0] sm:$0xff]
                  %262 = vst [vmem:[%s188 + $0x60] sm:$0xff] %v261
                  %v263 = vld [vmem:[%s187 + $0xb8] sm:$0xff]
                  %264 = vst [vmem:[%s188 + $0x68] sm:$0xff] %v263
                  %v265 = vld [vmem:[%s187 + $0xc0] sm:$0xff]
                  %266 = vst [vmem:[%s188 + $0x70] sm:$0xff] %v265
                  %v267 = vld [vmem:[%s187 + $0xc8] sm:$0xff]
                  %268 = vst [vmem:[%s188 + $0x78] sm:$0xff] %v267
                  %v269 = vld [vmem:[%s187 + $0xd0] sm:$0xff]
                  %270 = vst [vmem:[%s188 + $0x80] sm:$0xff] %v269
                  %v271 = vld [vmem:[%s187 + $0xd8] sm:$0xff]
                  %272 = vst [vmem:[%s188 + $0x88] sm:$0xff] %v271
                  %v273 = vld [vmem:[%s187 + $0xe0] sm:$0xff]
                  %274 = vst [vmem:[%s188 + $0x90] sm:$0xff] %v273
                  %v275 = vld [vmem:[%s187 + $0xe8] sm:$0xff]
                  %276 = vst [vmem:[%s188 + $0x98] sm:$0xff] %v275
                  %v277 = vld [vmem:[%s187 + $0xf0] sm:$0xff]
                  %278 = vst [vmem:[%s188 + $0xa0] sm:$0xff] %v277
                  %v279 = vld [vmem:[%s187 + $0xf8] sm:$0xff]
                  %280 = vst [vmem:[%s188 + $0xa8] sm:$0xff] %v279
                  %v281 = vld [vmem:[%s187 + $0x100] sm:$0xff]
                  %282 = vst [vmem:[%s188 + $0xb0] sm:$0xff] %v281
                  %v283 = vld [vmem:[%s187 + $0x108] sm:$0xff]
                  %284 = vst [vmem:[%s188 + $0xb8] sm:$0xff] %v283
                  %v285 = vld [vmem:[%s187 + $0xd8] sm:$0xff]
                  %286 = vst [vmem:[%s188 + $0x60] sm:$0xff] %v285
                  %v287 = vld [vmem:[%s187 + $0xe0] sm:$0xff]
                  %288 = vst [vmem:[%s188 + $0x68] sm:$0xff] %v287
                  %v289 = vld [vmem:[%s187 + $0xe8] sm:$0xff]
                  %290 = vst [vmem:[%s188 + $0x70] sm:$0xff] %v289
                  %v291 = vld [vmem:[%s187 + $0xf0] sm:$0xff]
                  %292 = vst [vmem:[%s188 + $0x78] sm:$0xff] %v291
                  %v293 = vld [vmem:[%s187 + $0xf8] sm:$0xff]
                  %294 = vst [vmem:[%s188 + $0x80] sm:$0xff] %v293
                  %v295 = vld [vmem:[%s187 + $0x100] sm:$0xff]
                  %296 = vst [vmem:[%s188 + $0x88] sm:$0xff] %v295
                  %v297 = vld [vmem:[%s187 + $0x108] sm:$0xff]
                  %298 = vst [vmem:[%s188 + $0x90] sm:$0xff] %v297
                  %v299 = vld [vmem:[%s187 + $0x110] sm:$0xff]
                  %300 = vst [vmem:[%s188 + $0x98] sm:$0xff] %v299
                  %v301 = vld [vmem:[%s187 + $0x118] sm:$0xff]
                  %302 = vst [vmem:[%s188 + $0xa0] sm:$0xff] %v301
                  %v303 = vld [vmem:[%s187 + $0x120] sm:$0xff]
                  %304 = vst [vmem:[%s188 + $0xa8] sm:$0xff] %v303
                  %v305 = vld [vmem:[%s187 + $0x128] sm:$0xff]
                  %306 = vst [vmem:[%s188 + $0xb0] sm:$0xff] %v305
                  %v307 = vld [vmem:[%s187 + $0x130] sm:$0xff]
                  %308 = vst [vmem:[%s188 + $0xb8] sm:$0xff] %v307
                  %v309 = vld [vmem:[%s187 + $0x138] sm:$0xff]
                  %310 = vst [vmem:[%s188 + $0xc0] sm:$0xff] %v309
                  %v311 = vld [vmem:[%s187 + $0x140] sm:$0xff]
                  %312 = vst [vmem:[%s188 + $0xc8] sm:$0xff] %v311
                  %v313 = vld [vmem:[%s187 + $0x148] sm:$0xff]
                  %314 = vst [vmem:[%s188 + $0xd0] sm:$0xff] %v313
                  %v315 = vld [vmem:[%s187 + $0x150] sm:$0xff]
                  %316 = vst [vmem:[%s188 + $0xd8] sm:$0xff] %v315
                  %s317 = sadd.s32 1, %s186
                  %p318 = scmp.ge.s32.totalorder %s317, %s177
                  %s319 = scalar_select %p318, 0, %s317
                  %s320 = smul.u32 %s319, 128
                  %s321 = smul.u32 %s319, 128
                  %s322 = scalar_lea.vmem %s142, %s320
                  %s323 = scalar_lea.vmem %s134, %s321 [#allocation2]
                $region56: #{net_forward.5} parent=50 // loop_footer
                  %s183 = sadd.s32 %s181, 1
                $region57: #{net_forward.5} parent=50 // loop_footer_branch
                  %180 = sbr.rel target = $region53
                $region58: #{net_forward.5} parent=50 // loop_exit
                  _
                %s324 = sshrl.u32 %s176, 4
                %s325 = sand.u32 %s176, 15
                %s326 = smul.u32 %s324, 16
                %s327 = smul.u32 128, %s326
                %s328 = sshra.s32 %s327, 4
                %s329 = scalar_lea.vmem %s142, %s328
                %s330 = smul.u32 128, %s326
                %s331 = sshra.s32 %s330, 4
                %s332 = scalar_lea.vmem %s134, %s331 [#allocation2]
                // While loop
                $region59: #{net_forward.5} parent=50 // loop_pre_header
                  _
                $region60: #{net_forward.5} parent=50 // loop_header
                  %s336 = sphi 0, %s338
                  %p337 = scmp.ge.s32.totalorder %s336, %s325
                  %s341 = sphi 0, %s354
                  %s342 = sphi %s329, %s357
                  %s343 = sphi %s332, %s358
                $region61: #{net_forward.5} parent=50 // loop_header_branch
                  %340 = sbr.rel (%p337) target = $region65
                $region62: #{net_forward.5} parent=50 // loop_body
                  %v344 = vld [vmem:[%s342] sm:$0xff]
                  %345 = vst [vmem:[%s343] sm:$0xff] %v344
                  %v346 = vld [vmem:[%s342 + $0x48] sm:$0xff]
                  %347 = vst [vmem:[%s343 + $0x20] sm:$0xff] %v346
                  %v348 = vld [vmem:[%s342 + $0x90] sm:$0xff]
                  %349 = vst [vmem:[%s343 + $0x40] sm:$0xff] %v348
                  %v350 = vld [vmem:[%s342 + $0xd8] sm:$0xff]
                  %351 = vst [vmem:[%s343 + $0x60] sm:$0xff] %v350
                  %s352 = sadd.s32 1, %s341
                  %p353 = scmp.ge.s32.totalorder %s352, %s325
                  %s354 = scalar_select %p353, 0, %s352
                  %s355 = smul.u32 %s354, 8
                  %s356 = smul.u32 %s354, 8
                  %s357 = scalar_lea.vmem %s329, %s355
                  %s358 = scalar_lea.vmem %s332, %s356 [#allocation2]
                $region63: #{net_forward.5} parent=50 // loop_footer
                  %s338 = sadd.s32 %s336, 1
                $region64: #{net_forward.5} parent=50 // loop_footer_branch
                  %335 = sbr.rel target = $region60
                $region65: #{net_forward.5} parent=50 // loop_exit
                  _
              $region51: #{net_forward.5} parent=35 // pred_fallthru
                _
              %p359 = pneg %p172
              // Predicated region
              $region66: #{net_forward.5} parent=35 // pred_check
                _
              $region67: #{net_forward.5} parent=35 // pred_check_branch
                %361 = sbr.rel (%p172) target = $region69
              $region68: #{net_forward.5} parent=35 // pred_region
                %s362 = sand.u32 %s143, 7
                %s363 = ssub.s32 %s143, %s362
                %s364 = scalar_lea.vmem %s142, %s363
                %s365 = ssub.s32 %s143, %s362
                %s366 = scalar_lea.vmem %s134, %s365 [#allocation2]
                %s367 = sshrl.u32 %s143, 3
                %s368 = sshrl.u32 %s367, 4
                // While loop
                $region70: #{net_forward.5} parent=68 // loop_pre_header
                  _
                $region71: #{net_forward.5} parent=68 // loop_header
                  %s372 = sphi 0, %s374
                  %p373 = scmp.ge.s32.totalorder %s372, %s368
                  %s377 = sphi 0, %s510
                  %s378 = sphi %s142, %s513
                  %s379 = sphi %s134, %s514
                $region72: #{net_forward.5} parent=68 // loop_header_branch
                  %376 = sbr.rel (%p373) target = $region76
                $region73: #{net_forward.5} parent=68 // loop_body
                  %v380 = vld [vmem:[%s378] sm:$0xff]
                  %381 = vst [vmem:[%s379] sm:$0xff] %v380
                  %v382 = vld [vmem:[%s378 + $0x8] sm:$0xff]
                  %383 = vst [vmem:[%s379 + $0x8] sm:$0xff] %v382
                  %v384 = vld [vmem:[%s378 + $0x10] sm:$0xff]
                  %385 = vst [vmem:[%s379 + $0x10] sm:$0xff] %v384
                  %v386 = vld [vmem:[%s378 + $0x18] sm:$0xff]
                  %387 = vst [vmem:[%s379 + $0x18] sm:$0xff] %v386
                  %v388 = vld [vmem:[%s378 + $0x20] sm:$0xff]
                  %389 = vst [vmem:[%s379 + $0x20] sm:$0xff] %v388
                  %v390 = vld [vmem:[%s378 + $0x28] sm:$0xff]
                  %391 = vst [vmem:[%s379 + $0x28] sm:$0xff] %v390
                  %v392 = vld [vmem:[%s378 + $0x30] sm:$0xff]
                  %393 = vst [vmem:[%s379 + $0x30] sm:$0xff] %v392
                  %v394 = vld [vmem:[%s378 + $0x38] sm:$0xff]
                  %395 = vst [vmem:[%s379 + $0x38] sm:$0xff] %v394
                  %v396 = vld [vmem:[%s378 + $0x40] sm:$0xff]
                  %397 = vst [vmem:[%s379 + $0x40] sm:$0xff] %v396
                  %v398 = vld [vmem:[%s378 + $0x48] sm:$0xff]
                  %399 = vst [vmem:[%s379 + $0x48] sm:$0xff] %v398
                  %v400 = vld [vmem:[%s378 + $0x50] sm:$0xff]
                  %401 = vst [vmem:[%s379 + $0x50] sm:$0xff] %v400
                  %v402 = vld [vmem:[%s378 + $0x58] sm:$0xff]
                  %403 = vst [vmem:[%s379 + $0x58] sm:$0xff] %v402
                  %v404 = vld [vmem:[%s378 + $0x60] sm:$0xff]
                  %405 = vst [vmem:[%s379 + $0x60] sm:$0xff] %v404
                  %v406 = vld [vmem:[%s378 + $0x68] sm:$0xff]
                  %407 = vst [vmem:[%s379 + $0x68] sm:$0xff] %v406
                  %v408 = vld [vmem:[%s378 + $0x70] sm:$0xff]
                  %409 = vst [vmem:[%s379 + $0x70] sm:$0xff] %v408
                  %v410 = vld [vmem:[%s378 + $0x78] sm:$0xff]
                  %411 = vst [vmem:[%s379 + $0x78] sm:$0xff] %v410
                  %v412 = vld [vmem:[%s378 + $0x48] sm:$0xff]
                  %413 = vst [vmem:[%s379 + $0x20] sm:$0xff] %v412
                  %v414 = vld [vmem:[%s378 + $0x50] sm:$0xff]
                  %415 = vst [vmem:[%s379 + $0x28] sm:$0xff] %v414
                  %v416 = vld [vmem:[%s378 + $0x58] sm:$0xff]
                  %417 = vst [vmem:[%s379 + $0x30] sm:$0xff] %v416
                  %v418 = vld [vmem:[%s378 + $0x60] sm:$0xff]
                  %419 = vst [vmem:[%s379 + $0x38] sm:$0xff] %v418
                  %v420 = vld [vmem:[%s378 + $0x68] sm:$0xff]
                  %421 = vst [vmem:[%s379 + $0x40] sm:$0xff] %v420
                  %v422 = vld [vmem:[%s378 + $0x70] sm:$0xff]
                  %423 = vst [vmem:[%s379 + $0x48] sm:$0xff] %v422
                  %v424 = vld [vmem:[%s378 + $0x78] sm:$0xff]
                  %425 = vst [vmem:[%s379 + $0x50] sm:$0xff] %v424
                  %v426 = vld [vmem:[%s378 + $0x80] sm:$0xff]
                  %427 = vst [vmem:[%s379 + $0x58] sm:$0xff] %v426
                  %v428 = vld [vmem:[%s378 + $0x88] sm:$0xff]
                  %429 = vst [vmem:[%s379 + $0x60] sm:$0xff] %v428
                  %v430 = vld [vmem:[%s378 + $0x90] sm:$0xff]
                  %431 = vst [vmem:[%s379 + $0x68] sm:$0xff] %v430
                  %v432 = vld [vmem:[%s378 + $0x98] sm:$0xff]
                  %433 = vst [vmem:[%s379 + $0x70] sm:$0xff] %v432
                  %v434 = vld [vmem:[%s378 + $0xa0] sm:$0xff]
                  %435 = vst [vmem:[%s379 + $0x78] sm:$0xff] %v434
                  %v436 = vld [vmem:[%s378 + $0xa8] sm:$0xff]
                  %437 = vst [vmem:[%s379 + $0x80] sm:$0xff] %v436
                  %v438 = vld [vmem:[%s378 + $0xb0] sm:$0xff]
                  %439 = vst [vmem:[%s379 + $0x88] sm:$0xff] %v438
                  %v440 = vld [vmem:[%s378 + $0xb8] sm:$0xff]
                  %441 = vst [vmem:[%s379 + $0x90] sm:$0xff] %v440
                  %v442 = vld [vmem:[%s378 + $0xc0] sm:$0xff]
                  %443 = vst [vmem:[%s379 + $0x98] sm:$0xff] %v442
                  %v444 = vld [vmem:[%s378 + $0x90] sm:$0xff]
                  %445 = vst [vmem:[%s379 + $0x40] sm:$0xff] %v444
                  %v446 = vld [vmem:[%s378 + $0x98] sm:$0xff]
                  %447 = vst [vmem:[%s379 + $0x48] sm:$0xff] %v446
                  %v448 = vld [vmem:[%s378 + $0xa0] sm:$0xff]
                  %449 = vst [vmem:[%s379 + $0x50] sm:$0xff] %v448
                  %v450 = vld [vmem:[%s378 + $0xa8] sm:$0xff]
                  %451 = vst [vmem:[%s379 + $0x58] sm:$0xff] %v450
                  %v452 = vld [vmem:[%s378 + $0xb0] sm:$0xff]
                  %453 = vst [vmem:[%s379 + $0x60] sm:$0xff] %v452
                  %v454 = vld [vmem:[%s378 + $0xb8] sm:$0xff]
                  %455 = vst [vmem:[%s379 + $0x68] sm:$0xff] %v454
                  %v456 = vld [vmem:[%s378 + $0xc0] sm:$0xff]
                  %457 = vst [vmem:[%s379 + $0x70] sm:$0xff] %v456
                  %v458 = vld [vmem:[%s378 + $0xc8] sm:$0xff]
                  %459 = vst [vmem:[%s379 + $0x78] sm:$0xff] %v458
                  %v460 = vld [vmem:[%s378 + $0xd0] sm:$0xff]
                  %461 = vst [vmem:[%s379 + $0x80] sm:$0xff] %v460
                  %v462 = vld [vmem:[%s378 + $0xd8] sm:$0xff]
                  %463 = vst [vmem:[%s379 + $0x88] sm:$0xff] %v462
                  %v464 = vld [vmem:[%s378 + $0xe0] sm:$0xff]
                  %465 = vst [vmem:[%s379 + $0x90] sm:$0xff] %v464
                  %v466 = vld [vmem:[%s378 + $0xe8] sm:$0xff]
                  %467 = vst [vmem:[%s379 + $0x98] sm:$0xff] %v466
                  %v468 = vld [vmem:[%s378 + $0xf0] sm:$0xff]
                  %469 = vst [vmem:[%s379 + $0xa0] sm:$0xff] %v468
                  %v470 = vld [vmem:[%s378 + $0xf8] sm:$0xff]
                  %471 = vst [vmem:[%s379 + $0xa8] sm:$0xff] %v470
                  %v472 = vld [vmem:[%s378 + $0x100] sm:$0xff]
                  %473 = vst [vmem:[%s379 + $0xb0] sm:$0xff] %v472
                  %v474 = vld [vmem:[%s378 + $0x108] sm:$0xff]
                  %475 = vst [vmem:[%s379 + $0xb8] sm:$0xff] %v474
                  %v476 = vld [vmem:[%s378 + $0xd8] sm:$0xff]
                  %477 = vst [vmem:[%s379 + $0x60] sm:$0xff] %v476
                  %v478 = vld [vmem:[%s378 + $0xe0] sm:$0xff]
                  %479 = vst [vmem:[%s379 + $0x68] sm:$0xff] %v478
                  %v480 = vld [vmem:[%s378 + $0xe8] sm:$0xff]
                  %481 = vst [vmem:[%s379 + $0x70] sm:$0xff] %v480
                  %v482 = vld [vmem:[%s378 + $0xf0] sm:$0xff]
                  %483 = vst [vmem:[%s379 + $0x78] sm:$0xff] %v482
                  %v484 = vld [vmem:[%s378 + $0xf8] sm:$0xff]
                  %485 = vst [vmem:[%s379 + $0x80] sm:$0xff] %v484
                  %v486 = vld [vmem:[%s378 + $0x100] sm:$0xff]
                  %487 = vst [vmem:[%s379 + $0x88] sm:$0xff] %v486
                  %v488 = vld [vmem:[%s378 + $0x108] sm:$0xff]
                  %489 = vst [vmem:[%s379 + $0x90] sm:$0xff] %v488
                  %v490 = vld [vmem:[%s378 + $0x110] sm:$0xff]
                  %491 = vst [vmem:[%s379 + $0x98] sm:$0xff] %v490
                  %v492 = vld [vmem:[%s378 + $0x118] sm:$0xff]
                  %493 = vst [vmem:[%s379 + $0xa0] sm:$0xff] %v492
                  %v494 = vld [vmem:[%s378 + $0x120] sm:$0xff]
                  %495 = vst [vmem:[%s379 + $0xa8] sm:$0xff] %v494
                  %v496 = vld [vmem:[%s378 + $0x128] sm:$0xff]
                  %497 = vst [vmem:[%s379 + $0xb0] sm:$0xff] %v496
                  %v498 = vld [vmem:[%s378 + $0x130] sm:$0xff]
                  %499 = vst [vmem:[%s379 + $0xb8] sm:$0xff] %v498
                  %v500 = vld [vmem:[%s378 + $0x138] sm:$0xff]
                  %501 = vst [vmem:[%s379 + $0xc0] sm:$0xff] %v500
                  %v502 = vld [vmem:[%s378 + $0x140] sm:$0xff]
                  %503 = vst [vmem:[%s379 + $0xc8] sm:$0xff] %v502
                  %v504 = vld [vmem:[%s378 + $0x148] sm:$0xff]
                  %505 = vst [vmem:[%s379 + $0xd0] sm:$0xff] %v504
                  %v506 = vld [vmem:[%s378 + $0x150] sm:$0xff]
                  %507 = vst [vmem:[%s379 + $0xd8] sm:$0xff] %v506
                  %s508 = sadd.s32 1, %s377
                  %p509 = scmp.ge.s32.totalorder %s508, %s368
                  %s510 = scalar_select %p509, 0, %s508
                  %s511 = smul.u32 %s510, 128
                  %s512 = smul.u32 %s510, 128
                  %s513 = scalar_lea.vmem %s142, %s511
                  %s514 = scalar_lea.vmem %s134, %s512 [#allocation2]
                $region74: #{net_forward.5} parent=68 // loop_footer
                  %s374 = sadd.s32 %s372, 1
                $region75: #{net_forward.5} parent=68 // loop_footer_branch
                  %371 = sbr.rel target = $region71
                $region76: #{net_forward.5} parent=68 // loop_exit
                  _
                %s515 = sshrl.u32 %s367, 4
                %s516 = sand.u32 %s367, 15
                %s517 = smul.u32 %s515, 16
                %s518 = smul.u32 128, %s517
                %s519 = sshra.s32 %s518, 4
                %s520 = scalar_lea.vmem %s142, %s519
                %s521 = smul.u32 128, %s517
                %s522 = sshra.s32 %s521, 4
                %s523 = scalar_lea.vmem %s134, %s522 [#allocation2]
                // While loop
                $region77: #{net_forward.5} parent=68 // loop_pre_header
                  _
                $region78: #{net_forward.5} parent=68 // loop_header
                  %s527 = sphi 0, %s529
                  %p528 = scmp.ge.s32.totalorder %s527, %s516
                  %s532 = sphi 0, %s545
                  %s533 = sphi %s520, %s548
                  %s534 = sphi %s523, %s549
                $region79: #{net_forward.5} parent=68 // loop_header_branch
                  %531 = sbr.rel (%p528) target = $region83
                $region80: #{net_forward.5} parent=68 // loop_body
                  %v535 = vld [vmem:[%s533] sm:$0xff]
                  %536 = vst [vmem:[%s534] sm:$0xff] %v535
                  %v537 = vld [vmem:[%s533 + $0x48] sm:$0xff]
                  %538 = vst [vmem:[%s534 + $0x20] sm:$0xff] %v537
                  %v539 = vld [vmem:[%s533 + $0x90] sm:$0xff]
                  %540 = vst [vmem:[%s534 + $0x40] sm:$0xff] %v539
                  %v541 = vld [vmem:[%s533 + $0xd8] sm:$0xff]
                  %542 = vst [vmem:[%s534 + $0x60] sm:$0xff] %v541
                  %s543 = sadd.s32 1, %s532
                  %p544 = scmp.ge.s32.totalorder %s543, %s516
                  %s545 = scalar_select %p544, 0, %s543
                  %s546 = smul.u32 %s545, 8
                  %s547 = smul.u32 %s545, 8
                  %s548 = scalar_lea.vmem %s520, %s546
                  %s549 = scalar_lea.vmem %s523, %s547 [#allocation2]
                $region81: #{net_forward.5} parent=68 // loop_footer
                  %s529 = sadd.s32 %s527, 1
                $region82: #{net_forward.5} parent=68 // loop_footer_branch
                  %526 = sbr.rel target = $region78
                $region83: #{net_forward.5} parent=68 // loop_exit
                  _
                %s550 = sshllo.u32 0, %s362
                loop: start=0, step=1, limit=1
                $region84: #{net_forward.5} parent=68 // loop_pre_header
                  _
                $region85: #{net_forward.5} parent=68 // loop_header
                  %s552 = sphi 0, %s556
                  %p553 = scmp.ge.s32.totalorder %s552, 1
                  %s557 = sphi %s364, %s364
                  %s558 = sphi %s366, %s366
                $region86: #{net_forward.5} parent=68 // loop_header_branch
                  %555 = sbr.rel (%p553) target = $region90
                $region87: #{net_forward.5} parent=68 // loop_body
                  %v559 = vld [vmem:[%s557] sm:%s550]
                  %560 = vst [vmem:[%s558] sm:%s550] %v559
                  %v561 = vld [vmem:[%s557 + $0x48] sm:%s550]
                  %562 = vst [vmem:[%s558 + $0x20] sm:%s550] %v561
                  %v563 = vld [vmem:[%s557 + $0x90] sm:%s550]
                  %564 = vst [vmem:[%s558 + $0x40] sm:%s550] %v563
                  %v565 = vld [vmem:[%s557 + $0xd8] sm:%s550]
                  %566 = vst [vmem:[%s558 + $0x60] sm:%s550] %v565
                $region88: #{net_forward.5} parent=68 // loop_footer
                  %s556 = sadd.s32 1, %s552
                $region89: #{net_forward.5} parent=68 // loop_footer_branch
                  %551 = sbr.rel target = $region85
                $region90: #{net_forward.5} parent=68 // loop_exit
                  _
              $region69: #{net_forward.5} parent=35 // pred_fallthru
                _
            $region36: #{net_forward.5} parent=31 // pred_fallthru
              _
            // Predicated region
            $region37: #{net_forward.5} parent=31 // pred_check
              %p151 = pneg %p147
            $region38: #{net_forward.5} parent=31 // pred_check_branch
              %153 = sbr.rel (%p151) target = $region40
            $region39: #{net_forward.5} parent=31 // pred_region
              %s154 = sshllo.u32 0, %s143
              loop: start=0, step=1, limit=1
              $region41: #{net_forward.5} parent=39 // loop_pre_header
                _
              $region42: #{net_forward.5} parent=39 // loop_header
                %s156 = sphi 0, %s160
                %p157 = scmp.ge.s32.totalorder %s156, 1
                %s161 = sphi %s142, %s142
                %s162 = sphi %s134, %s134
              $region43: #{net_forward.5} parent=39 // loop_header_branch
                %159 = sbr.rel (%p157) target = $region47
              $region44: #{net_forward.5} parent=39 // loop_body
                %v163 = vld [vmem:[%s161] sm:%s154]
                %164 = vst [vmem:[%s162] sm:%s154] %v163
                %v165 = vld [vmem:[%s161 + $0x48] sm:%s154]
                %166 = vst [vmem:[%s162 + $0x20] sm:%s154] %v165
                %v167 = vld [vmem:[%s161 + $0x90] sm:%s154]
                %168 = vst [vmem:[%s162 + $0x40] sm:%s154] %v167
                %v169 = vld [vmem:[%s161 + $0xd8] sm:%s154]
                %170 = vst [vmem:[%s162 + $0x60] sm:%s154] %v169
              $region45: #{net_forward.5} parent=39 // loop_footer
                %s160 = sadd.s32 1, %s156
              $region46: #{net_forward.5} parent=39 // loop_footer_branch
                %155 = sbr.rel target = $region42
              $region47: #{net_forward.5} parent=39 // loop_exit
                _
            $region40: #{net_forward.5} parent=31 // pred_fallthru
              _
          $region32: #{net_forward.5} parent=27 // pred_fallthru
            _
          %567 = vnop
        $region28: #{net_forward.5} parent=23 // pred_fallthru
          _
      $region24: #{net_forward.5} parent=5 // pred_fallthru
        _
      %p568 = scmp.le.s32.totalorder 1, %s9
      %p569 = scmp.lt.s32.totalorder %s9, 4
      %p570 = pnand %p568, %p569
      %p571 = pneg %p570
      // Predicated region
      $region91: #{net_forward.5} parent=5 // pred_check
        _
      $region92: #{net_forward.5} parent=5 // pred_check_branch
        %573 = sbr.rel (%p570) target = $region94
      $region93: #{net_forward.5} parent=5 // pred_region
        %s574 = ssub.s32 %s9, 1
        %s575 = sand.u32 %s43, 1
        %s576 = sand.u32 %s43, 1
        %s577 = smul.addr %s576, 128
        %s578 = scalar_lea.vmem [#allocation2], %s577
        // Predicated region
        $region95: #{net_forward.5} parent=93 // pred_check
          %p579 = pneg %p56
        $region96: #{net_forward.5} parent=93 // pred_check_branch
          %581 = sbr.rel (%p579) target = $region98
        $region97: #{net_forward.5} parent=93 // pred_region
          _
        $region98: #{net_forward.5} parent=93 // pred_fallthru
          _
        %p582 = pneg %p30
        %p583 = pneg %p27
        %s584 = sand.u32 %s43, 1
        %s585 = sand.u32 %s43, 1
        %s586 = smul.addr %s585, 128
        %s587 = scalar_lea.vmem [#allocation2], %s586
        %p588 = pneg %p56
        %p589 = pneg %p53
        %p590 = pneg %p77
        %p591 = pneg %p74
        %p592 = pneg %p103
        %p593 = pneg %p100
        %s594 = sand.u32 %s90, 1
        %s595 = sand.u32 %s90, 1
        %s596 = smul.addr %s595, 64
        %s597 = scalar_lea.vmem [#allocation3], %s596
        %s598 = smul.u32 4, %s14
        %s599 = ssub.s32 9, %s598
        %p600 = scmp.lt.s32.totalorder %s599, 4
        %s601 = scalar_select %p600, %s599, 4
        %s602 = smul.u32 512, %s601
        %s603 = smul.u32 4, %s14
        %s604 = ssub.s32 9, %s603
        %p605 = scmp.lt.s32.totalorder %s604, 4
        %s606 = scalar_select %p605, %s604, 4
        %s607 = smul.u32 256, %s606
        %v608 = vld [vmem:[%s0] sm:$0xff]
        %v609 = vld [vmem:[%s0 + $0x8] sm:$0x3]
        %v610 = vld [vmem:[%s578] sm:$0xff]
        %v611 = vld [vmem:[%s578 + $0x8] sm:$0xff]
        %v612 = vld [vmem:[%s578 + $0x10] sm:$0xff]
        %v613 = vld [vmem:[%s578 + $0x18] sm:$0xff]
        %v614 = vld [vmem:[%s578 + $0x20] sm:$0xff]
        %v615 = vld [vmem:[%s578 + $0x28] sm:$0xff]
        %v616 = vld [vmem:[%s578 + $0x30] sm:$0xff]
        %v617 = vld [vmem:[%s578 + $0x38] sm:$0xff]
        %v618 = vld [vmem:[%s578 + $0x40] sm:$0xff]
        %v619 = vld [vmem:[%s578 + $0x48] sm:$0xff]
        %v620 = vld [vmem:[%s578 + $0x50] sm:$0xff]
        %v621 = vld [vmem:[%s578 + $0x58] sm:$0xff]
        %v622 = vld [vmem:[%s578 + $0x60] sm:$0x1]
        %v623 = vld [vmem:[%s578 + $0x68] sm:$0x1]
        %v624 = vld [vmem:[%s578 + $0x70] sm:$0x1]
        %v625 = vld [vmem:[%s578 + $0x78] sm:$0x1]
        %v626 = vld [vmem:[%s2] sm:$0xff]
        %v627 = vld [vmem:[%s2 + $0x8] sm:$0x3]
        %629 = vset.pattern.permute.xlu0 0
        %630 = vperm.xlu0 %629, %v626
        %v631 = vpop.permute.xlu0 %630
        %634 = vset.pattern.permute.xlu0 0
        %635 = vperm.xlu0 %634, %v627
        %v636 = vpop.permute.xlu0 %635
        %vm638 = vcmask 203776
        %v640 = vsel %vm638, %v608, 0
        %v643 = vsel %vm638, %v609, 0
        %vm645 = vcmask 1040384
        %v647 = vsel %vm645, %v622, 0
        %v650 = vsel %vm645, %v623, 0
        %v653 = vsel %vm645, %v624, 0
        %v656 = vsel %vm645, %v625, 0
        %658 = vmatprep.subr.mxu0 %v611
        %659 = vmatpush1.msra.mxu0 %v610
        %660 = vmatprep.subr.mxu0 %v615
        %661 = vmatpush1.msra.mxu0 %v614
        %662 = vmatprep.subr.mxu0 %v619
        %663 = vmatpush1.msra.mxu0 %v618
        %664 = vmatprep.subr.mxu0 %v650
        %665 = vmatpush1.msra.mxu0 %v647
        %666 = vmatprep.subr.mxu0 0.0
        %667 = vmatpush1.msra.mxu0 0.0
        %668 = vmatprep.subr.mxu0 0.0
        %669 = vmatpush1.msra.mxu0 0.0
        %670 = vmatprep.subr.mxu0 0.0
        %671 = vmatpush1.msra.mxu0 0.0
        %672 = vmatprep.subr.mxu0 0.0
        %673 = vmatpush1.msra.mxu0 0.0
        %674 = vmatprep.subr.mxu0 0.0
        %675 = vmatpush1.msra.mxu0 0.0
        %676 = vmatprep.subr.mxu0 0.0
        %677 = vmatpush1.msra.mxu0 0.0
        %678 = vmatprep.subr.mxu0 0.0
        %679 = vmatpush1.msra.mxu0 0.0
        %680 = vmatprep.subr.mxu0 0.0
        %681 = vmatpush1.msra.mxu0 0.0
        %682 = vmatprep.subr.mxu0 0.0
        %683 = vmatpush1.msra.mxu0 0.0
        %684 = vmatprep.subr.mxu0 0.0
        %685 = vmatpush1.msra.mxu0 0.0
        %686 = vmatprep.subr.mxu0 0.0
        %687 = vmatpush1.msra.mxu0 0.0
        %688 = vmatprep.subr.mxu0 0.0
        %689 = vmatpush1.msra.mxu0 0.0
        %690 = vmatprep.subr.mxu0 0.0
        %691 = vmatpush1.msra.mxu0 0.0
        %692 = vmatprep.subr.mxu0 0.0
        %693 = vmatpush1.msra.mxu0 0.0
        %694 = vmatprep.subr.mxu0 0.0
        %695 = vmatpush1.msra.mxu0 0.0
        %696 = vmatprep.subr.mxu0 0.0
        %697 = vmatpush1.msra.mxu0 0.0
        %698 = vmatprep.subr.mxu0 0.0
        %699 = vmatpush1.msra.mxu0 0.0
        %700 = vmatprep.subr.mxu0 0.0
        %701 = vmatpush1.msra.mxu0 0.0
        %702 = vmatprep.subr.mxu0 0.0
        %703 = vmatpush1.msra.mxu0 0.0
        %704 = vmatprep.subr.mxu0 0.0
        %705 = vmatpush1.msra.mxu0 0.0
        %706 = vmatprep.subr.mxu0 0.0
        %707 = vmatpush1.msra.mxu0 0.0
        %708 = vmatprep.subr.mxu0 0.0
        %709 = vmatpush1.msra.mxu0 0.0
        %710 = vmatprep.subr.mxu0 0.0
        %711 = vmatpush1.msra.mxu0 0.0
        %712 = vmatprep.subr.mxu0 0.0
        %713 = vmatpush1.msra.mxu0 0.0
        %714 = vmatprep.subr.mxu0 0.0
        %715 = vmatpush1.msra.mxu0 0.0
        %716 = vmatprep.subr.mxu0 0.0
        %717 = vmatpush1.msra.mxu0 0.0
        %718 = vmatprep.subr.mxu0 0.0
        %719 = vmatpush1.msra.mxu0 0.0
        %720 = vmatprep.subr.mxu0 0.0
        %721 = vmatpush1.msra.mxu0 0.0
        %722 = vmatprep.mubr.f32.mxu0 0.0
        %723 = vmatmul.mubr.f32.gmra.mrb[0].mxu0 %v640
        %v724 = vpop.f32.mrb[0].mxu0
        %v725 = vadd.f32 %v631, %v724
        %v726 = vpop.f32.mrb[0].mxu0
        %v727 = vadd.f32 %v631, %v726
        %728 = vmatprep.mubr.f32.mxu0 0.0
        %729 = vmatmul.mubr.f32.gmra.mrb[0].mxu0 %v643
        %v730 = vpop.f32.mrb[0].mxu0
        %v731 = vadd.f32 %v636, %v730
        %v732 = vpop.f32.mrb[0].mxu0
        %v733 = vadd.f32 %v636, %v732
        %734 = vdwg.mxu0
        %735 = vmatprep.subr.mxu0 %v613
        %736 = vmatpush1.msra.mxu0 %v612
        %737 = vmatprep.subr.mxu0 %v617
        %738 = vmatpush1.msra.mxu0 %v616
        %739 = vmatprep.subr.mxu0 %v621
        %740 = vmatpush1.msra.mxu0 %v620
        %741 = vmatprep.subr.mxu0 %v656
        %742 = vmatpush1.msra.mxu0 %v653
        %743 = vmatprep.subr.mxu0 0.0
        %744 = vmatpush1.msra.mxu0 0.0
        %745 = vmatprep.subr.mxu0 0.0
        %746 = vmatpush1.msra.mxu0 0.0
        %747 = vmatprep.subr.mxu0 0.0
        %748 = vmatpush1.msra.mxu0 0.0
        %749 = vmatprep.subr.mxu0 0.0
        %750 = vmatpush1.msra.mxu0 0.0
        %751 = vmatprep.subr.mxu0 0.0
        %752 = vmatpush1.msra.mxu0 0.0
        %753 = vmatprep.subr.mxu0 0.0
        %754 = vmatpush1.msra.mxu0 0.0
        %755 = vmatprep.subr.mxu0 0.0
        %756 = vmatpush1.msra.mxu0 0.0
        %757 = vmatprep.subr.mxu0 0.0
        %758 = vmatpush1.msra.mxu0 0.0
        %759 = vmatprep.subr.mxu0 0.0
        %760 = vmatpush1.msra.mxu0 0.0
        %761 = vmatprep.subr.mxu0 0.0
        %762 = vmatpush1.msra.mxu0 0.0
        %763 = vmatprep.subr.mxu0 0.0
        %764 = vmatpush1.msra.mxu0 0.0
        %765 = vmatprep.subr.mxu0 0.0
        %766 = vmatpush1.msra.mxu0 0.0
        %767 = vmatprep.subr.mxu0 0.0
        %768 = vmatpush1.msra.mxu0 0.0
        %769 = vmatprep.subr.mxu0 0.0
        %770 = vmatpush1.msra.mxu0 0.0
        %771 = vmatprep.subr.mxu0 0.0
        %772 = vmatpush1.msra.mxu0 0.0
        %773 = vmatprep.subr.mxu0 0.0
        %774 = vmatpush1.msra.mxu0 0.0
        %775 = vmatprep.subr.mxu0 0.0
        %776 = vmatpush1.msra.mxu0 0.0
        %777 = vmatprep.subr.mxu0 0.0
        %778 = vmatpush1.msra.mxu0 0.0
        %779 = vmatprep.subr.mxu0 0.0
        %780 = vmatpush1.msra.mxu0 0.0
        %781 = vmatprep.subr.mxu0 0.0
        %782 = vmatpush1.msra.mxu0 0.0
        %783 = vmatprep.subr.mxu0 0.0
        %784 = vmatpush1.msra.mxu0 0.0
        %785 = vmatprep.subr.mxu0 0.0
        %786 = vmatpush1.msra.mxu0 0.0
        %787 = vmatprep.subr.mxu0 0.0
        %788 = vmatpush1.msra.mxu0 0.0
        %789 = vmatprep.subr.mxu0 0.0
        %790 = vmatpush1.msra.mxu0 0.0
        %791 = vmatprep.subr.mxu0 0.0
        %792 = vmatpush1.msra.mxu0 0.0
        %793 = vmatprep.subr.mxu0 0.0
        %794 = vmatpush1.msra.mxu0 0.0
        %795 = vmatprep.subr.mxu0 0.0
        %796 = vmatpush1.msra.mxu0 0.0
        %797 = vmatprep.subr.mxu0 0.0
        %798 = vmatpush1.msra.mxu0 0.0
        %799 = vmatprep.mubr.f32.mxu0 0.0
        %800 = vmatmul.mubr.f32.gmra.mrb[0].mxu0 %v640
        %v801 = vpop.f32.mrb[0].mxu0
        %v802 = vadd.f32 %v631, %v801
        %v803 = vpop.f32.mrb[0].mxu0
        %v804 = vadd.f32 %v631, %v803
        %805 = vmatprep.mubr.f32.mxu0 0.0
        %806 = vmatmul.mubr.f32.gmra.mrb[0].mxu0 %v643
        %v807 = vpop.f32.mrb[0].mxu0
        %v808 = vadd.f32 %v636, %v807
        %v809 = vpop.f32.mrb[0].mxu0
        %v810 = vadd.f32 %v636, %v809
        %811 = vdwg.mxu0
        %v812 = vmax.f32 %v725, 0.0
        %v813 = vmax.f32 %v727, 0.0
        %v814 = vmax.f32 %v802, 0.0
        %v815 = vmax.f32 %v804, 0.0
        %v816 = vmax.f32 %v731, 0.0
        %v817 = vmax.f32 %v733, 0.0
        %v818 = vmax.f32 %v808, 0.0
        %v819 = vmax.f32 %v810, 0.0
        %820 = vst [vmem:[%s597] sm:$0xff] %v812
        %821 = vst [vmem:[%s597 + $0x8] sm:$0xff] %v813
        %822 = vst [vmem:[%s597 + $0x10] sm:$0xff] %v814
        %823 = vst [vmem:[%s597 + $0x18] sm:$0xff] %v815
        %824 = vst [vmem:[%s597 + $0x20] sm:$0x3] %v816
        %825 = vst [vmem:[%s597 + $0x28] sm:$0x3] %v817
        %826 = vst [vmem:[%s597 + $0x30] sm:$0x3] %v818
        %827 = vst [vmem:[%s597 + $0x38] sm:$0x3] %v819
        %s828 = sand.u32 %s90, 1
        %s829 = sand.u32 %s90, 1
        %s830 = smul.addr %s829, 64
        %s831 = scalar_lea.vmem [#allocation3], %s830
        // Predicated region
        $region99: #{net_forward.5} parent=93 // pred_check
          %p832 = pneg %p100
        $region100: #{net_forward.5} parent=93 // pred_check_branch
          %834 = sbr.rel (%p832) target = $region102
        $region101: #{net_forward.5} parent=93 // pred_region
          %s835 = smul.u32 4, %s14
          %s836 = ssub.s32 9, %s835
          %p837 = scmp.lt.s32.totalorder %s836, 4
          %s838 = scalar_select %p837, %s836, 4
          %s839 = smul.u32 256, %s838
          %p840 = scmp.ne.s32.totalorder 0, %s839
          %s841 = smul.addr %s835, 8
          %s842 = scalar_lea.vmem %s3, %s841
          %s843 = smul.u32 %s838, 8
          // Predicated region
          $region103: #{net_forward.5} parent=101 // pred_check
            %p844 = pneg %p840
          $region104: #{net_forward.5} parent=101 // pred_check_branch
            %846 = sbr.rel (%p844) target = $region106
          $region105: #{net_forward.5} parent=101 // pred_region
            %p847 = scmp.lt.u32.totalorder %s843, 8
            %p848 = pneg %p847
            // Predicated region
            $region107: #{net_forward.5} parent=105 // pred_check
              _
            $region108: #{net_forward.5} parent=105 // pred_check_branch
              %850 = sbr.rel (%p847) target = $region110
            $region109: #{net_forward.5} parent=105 // pred_region
              %s867 = sand.u32 %s843, 7
              %p868 = scmp.eq.s32.totalorder %s867, 0
              // Predicated region
              $region122: #{net_forward.5} parent=109 // pred_check
                %p869 = pneg %p868
              $region123: #{net_forward.5} parent=109 // pred_check_branch
                %871 = sbr.rel (%p869) target = $region125
              $region124: #{net_forward.5} parent=109 // pred_region
                %s872 = sshrl.u32 %s843, 3
                %s873 = sshrl.u32 %s872, 5
                // While loop
                $region126: #{net_forward.5} parent=124 // loop_pre_header
                  _
                $region127: #{net_forward.5} parent=124 // loop_header
                  %s877 = sphi 0, %s879
                  %p878 = scmp.ge.s32.totalorder %s877, %s873
                  %s882 = sphi 0, %s1015
                  %s883 = sphi %s831, %s1018
                  %s884 = sphi %s842, %s1019
                $region128: #{net_forward.5} parent=124 // loop_header_branch
                  %881 = sbr.rel (%p878) target = $region132
                $region129: #{net_forward.5} parent=124 // loop_body
                  %v885 = vld [vmem:[%s883] sm:$0xff]
                  %886 = vst [vmem:[%s884] sm:$0xff] %v885
                  %v887 = vld [vmem:[%s883 + $0x8] sm:$0xff]
                  %888 = vst [vmem:[%s884 + $0x8] sm:$0xff] %v887
                  %v889 = vld [vmem:[%s883 + $0x10] sm:$0xff]
                  %890 = vst [vmem:[%s884 + $0x10] sm:$0xff] %v889
                  %v891 = vld [vmem:[%s883 + $0x18] sm:$0xff]
                  %892 = vst [vmem:[%s884 + $0x18] sm:$0xff] %v891
                  %v893 = vld [vmem:[%s883 + $0x20] sm:$0xff]
                  %894 = vst [vmem:[%s884 + $0x20] sm:$0xff] %v893
                  %v895 = vld [vmem:[%s883 + $0x28] sm:$0xff]
                  %896 = vst [vmem:[%s884 + $0x28] sm:$0xff] %v895
                  %v897 = vld [vmem:[%s883 + $0x30] sm:$0xff]
                  %898 = vst [vmem:[%s884 + $0x30] sm:$0xff] %v897
                  %v899 = vld [vmem:[%s883 + $0x38] sm:$0xff]
                  %900 = vst [vmem:[%s884 + $0x38] sm:$0xff] %v899
                  %v901 = vld [vmem:[%s883 + $0x40] sm:$0xff]
                  %902 = vst [vmem:[%s884 + $0x40] sm:$0xff] %v901
                  %v903 = vld [vmem:[%s883 + $0x48] sm:$0xff]
                  %904 = vst [vmem:[%s884 + $0x48] sm:$0xff] %v903
                  %v905 = vld [vmem:[%s883 + $0x50] sm:$0xff]
                  %906 = vst [vmem:[%s884 + $0x50] sm:$0xff] %v905
                  %v907 = vld [vmem:[%s883 + $0x58] sm:$0xff]
                  %908 = vst [vmem:[%s884 + $0x58] sm:$0xff] %v907
                  %v909 = vld [vmem:[%s883 + $0x60] sm:$0xff]
                  %910 = vst [vmem:[%s884 + $0x60] sm:$0xff] %v909
                  %v911 = vld [vmem:[%s883 + $0x68] sm:$0xff]
                  %912 = vst [vmem:[%s884 + $0x68] sm:$0xff] %v911
                  %v913 = vld [vmem:[%s883 + $0x70] sm:$0xff]
                  %914 = vst [vmem:[%s884 + $0x70] sm:$0xff] %v913
                  %v915 = vld [vmem:[%s883 + $0x78] sm:$0xff]
                  %916 = vst [vmem:[%s884 + $0x78] sm:$0xff] %v915
                  %v917 = vld [vmem:[%s883 + $0x80] sm:$0xff]
                  %918 = vst [vmem:[%s884 + $0x80] sm:$0xff] %v917
                  %v919 = vld [vmem:[%s883 + $0x88] sm:$0xff]
                  %920 = vst [vmem:[%s884 + $0x88] sm:$0xff] %v919
                  %v921 = vld [vmem:[%s883 + $0x90] sm:$0xff]
                  %922 = vst [vmem:[%s884 + $0x90] sm:$0xff] %v921
                  %v923 = vld [vmem:[%s883 + $0x98] sm:$0xff]
                  %924 = vst [vmem:[%s884 + $0x98] sm:$0xff] %v923
                  %v925 = vld [vmem:[%s883 + $0xa0] sm:$0xff]
                  %926 = vst [vmem:[%s884 + $0xa0] sm:$0xff] %v925
                  %v927 = vld [vmem:[%s883 + $0xa8] sm:$0xff]
                  %928 = vst [vmem:[%s884 + $0xa8] sm:$0xff] %v927
                  %v929 = vld [vmem:[%s883 + $0xb0] sm:$0xff]
                  %930 = vst [vmem:[%s884 + $0xb0] sm:$0xff] %v929
                  %v931 = vld [vmem:[%s883 + $0xb8] sm:$0xff]
                  %932 = vst [vmem:[%s884 + $0xb8] sm:$0xff] %v931
                  %v933 = vld [vmem:[%s883 + $0xc0] sm:$0xff]
                  %934 = vst [vmem:[%s884 + $0xc0] sm:$0xff] %v933
                  %v935 = vld [vmem:[%s883 + $0xc8] sm:$0xff]
                  %936 = vst [vmem:[%s884 + $0xc8] sm:$0xff] %v935
                  %v937 = vld [vmem:[%s883 + $0xd0] sm:$0xff]
                  %938 = vst [vmem:[%s884 + $0xd0] sm:$0xff] %v937
                  %v939 = vld [vmem:[%s883 + $0xd8] sm:$0xff]
                  %940 = vst [vmem:[%s884 + $0xd8] sm:$0xff] %v939
                  %v941 = vld [vmem:[%s883 + $0xe0] sm:$0xff]
                  %942 = vst [vmem:[%s884 + $0xe0] sm:$0xff] %v941
                  %v943 = vld [vmem:[%s883 + $0xe8] sm:$0xff]
                  %944 = vst [vmem:[%s884 + $0xe8] sm:$0xff] %v943
                  %v945 = vld [vmem:[%s883 + $0xf0] sm:$0xff]
                  %946 = vst [vmem:[%s884 + $0xf0] sm:$0xff] %v945
                  %v947 = vld [vmem:[%s883 + $0xf8] sm:$0xff]
                  %948 = vst [vmem:[%s884 + $0xf8] sm:$0xff] %v947
                  %v949 = vld [vmem:[%s883 + $0x20] sm:$0xff]
                  %950 = vst [vmem:[%s884 + $0x48] sm:$0xff] %v949
                  %v951 = vld [vmem:[%s883 + $0x28] sm:$0xff]
                  %952 = vst [vmem:[%s884 + $0x50] sm:$0xff] %v951
                  %v953 = vld [vmem:[%s883 + $0x30] sm:$0xff]
                  %954 = vst [vmem:[%s884 + $0x58] sm:$0xff] %v953
                  %v955 = vld [vmem:[%s883 + $0x38] sm:$0xff]
                  %956 = vst [vmem:[%s884 + $0x60] sm:$0xff] %v955
                  %v957 = vld [vmem:[%s883 + $0x40] sm:$0xff]
                  %958 = vst [vmem:[%s884 + $0x68] sm:$0xff] %v957
                  %v959 = vld [vmem:[%s883 + $0x48] sm:$0xff]
                  %960 = vst [vmem:[%s884 + $0x70] sm:$0xff] %v959
                  %v961 = vld [vmem:[%s883 + $0x50] sm:$0xff]
                  %962 = vst [vmem:[%s884 + $0x78] sm:$0xff] %v961
                  %v963 = vld [vmem:[%s883 + $0x58] sm:$0xff]
                  %964 = vst [vmem:[%s884 + $0x80] sm:$0xff] %v963
                  %v965 = vld [vmem:[%s883 + $0x60] sm:$0xff]
                  %966 = vst [vmem:[%s884 + $0x88] sm:$0xff] %v965
                  %v967 = vld [vmem:[%s883 + $0x68] sm:$0xff]
                  %968 = vst [vmem:[%s884 + $0x90] sm:$0xff] %v967
                  %v969 = vld [vmem:[%s883 + $0x70] sm:$0xff]
                  %970 = vst [vmem:[%s884 + $0x98] sm:$0xff] %v969
                  %v971 = vld [vmem:[%s883 + $0x78] sm:$0xff]
                  %972 = vst [vmem:[%s884 + $0xa0] sm:$0xff] %v971
                  %v973 = vld [vmem:[%s883 + $0x80] sm:$0xff]
                  %974 = vst [vmem:[%s884 + $0xa8] sm:$0xff] %v973
                  %v975 = vld [vmem:[%s883 + $0x88] sm:$0xff]
                  %976 = vst [vmem:[%s884 + $0xb0] sm:$0xff] %v975
                  %v977 = vld [vmem:[%s883 + $0x90] sm:$0xff]
                  %978 = vst [vmem:[%s884 + $0xb8] sm:$0xff] %v977
                  %v979 = vld [vmem:[%s883 + $0x98] sm:$0xff]
                  %980 = vst [vmem:[%s884 + $0xc0] sm:$0xff] %v979
                  %v981 = vld [vmem:[%s883 + $0xa0] sm:$0xff]
                  %982 = vst [vmem:[%s884 + $0xc8] sm:$0xff] %v981
                  %v983 = vld [vmem:[%s883 + $0xa8] sm:$0xff]
                  %984 = vst [vmem:[%s884 + $0xd0] sm:$0xff] %v983
                  %v985 = vld [vmem:[%s883 + $0xb0] sm:$0xff]
                  %986 = vst [vmem:[%s884 + $0xd8] sm:$0xff] %v985
                  %v987 = vld [vmem:[%s883 + $0xb8] sm:$0xff]
                  %988 = vst [vmem:[%s884 + $0xe0] sm:$0xff] %v987
                  %v989 = vld [vmem:[%s883 + $0xc0] sm:$0xff]
                  %990 = vst [vmem:[%s884 + $0xe8] sm:$0xff] %v989
                  %v991 = vld [vmem:[%s883 + $0xc8] sm:$0xff]
                  %992 = vst [vmem:[%s884 + $0xf0] sm:$0xff] %v991
                  %v993 = vld [vmem:[%s883 + $0xd0] sm:$0xff]
                  %994 = vst [vmem:[%s884 + $0xf8] sm:$0xff] %v993
                  %v995 = vld [vmem:[%s883 + $0xd8] sm:$0xff]
                  %996 = vst [vmem:[%s884 + $0x100] sm:$0xff] %v995
                  %v997 = vld [vmem:[%s883 + $0xe0] sm:$0xff]
                  %998 = vst [vmem:[%s884 + $0x108] sm:$0xff] %v997
                  %v999 = vld [vmem:[%s883 + $0xe8] sm:$0xff]
                  %1000 = vst [vmem:[%s884 + $0x110] sm:$0xff] %v999
                  %v1001 = vld [vmem:[%s883 + $0xf0] sm:$0xff]
                  %1002 = vst [vmem:[%s884 + $0x118] sm:$0xff] %v1001
                  %v1003 = vld [vmem:[%s883 + $0xf8] sm:$0xff]
                  %1004 = vst [vmem:[%s884 + $0x120] sm:$0xff] %v1003
                  %v1005 = vld [vmem:[%s883 + $0x100] sm:$0xff]
                  %1006 = vst [vmem:[%s884 + $0x128] sm:$0xff] %v1005
                  %v1007 = vld [vmem:[%s883 + $0x108] sm:$0xff]
                  %1008 = vst [vmem:[%s884 + $0x130] sm:$0xff] %v1007
                  %v1009 = vld [vmem:[%s883 + $0x110] sm:$0xff]
                  %1010 = vst [vmem:[%s884 + $0x138] sm:$0xff] %v1009
                  %v1011 = vld [vmem:[%s883 + $0x118] sm:$0xff]
                  %1012 = vst [vmem:[%s884 + $0x140] sm:$0xff] %v1011
                  %s1013 = sadd.s32 1, %s882
                  %p1014 = scmp.ge.s32.totalorder %s1013, %s873
                  %s1015 = scalar_select %p1014, 0, %s1013
                  %s1016 = smul.u32 %s1015, 256
                  %s1017 = smul.u32 %s1015, 256
                  %s1018 = scalar_lea.vmem %s831, %s1016 [#allocation3]
                  %s1019 = scalar_lea.vmem %s842, %s1017
                $region130: #{net_forward.5} parent=124 // loop_footer
                  %s879 = sadd.s32 %s877, 1
                $region131: #{net_forward.5} parent=124 // loop_footer_branch
                  %876 = sbr.rel target = $region127
                $region132: #{net_forward.5} parent=124 // loop_exit
                  _
                %s1020 = sshrl.u32 %s872, 5
                %s1021 = sand.u32 %s872, 31
                %s1022 = smul.u32 %s1020, 32
                %s1023 = smul.u32 128, %s1022
                %s1024 = sshra.s32 %s1023, 4
                %s1025 = scalar_lea.vmem %s831, %s1024 [#allocation3]
                %s1026 = smul.u32 128, %s1022
                %s1027 = sshra.s32 %s1026, 4
                %s1028 = scalar_lea.vmem %s842, %s1027
                // While loop
                $region133: #{net_forward.5} parent=124 // loop_pre_header
                  _
                $region134: #{net_forward.5} parent=124 // loop_header
                  %s1032 = sphi 0, %s1034
                  %p1033 = scmp.ge.s32.totalorder %s1032, %s1021
                  %s1037 = sphi 0, %s1046
                  %s1038 = sphi %s1025, %s1049
                  %s1039 = sphi %s1028, %s1050
                $region135: #{net_forward.5} parent=124 // loop_header_branch
                  %1036 = sbr.rel (%p1033) target = $region139
                $region136: #{net_forward.5} parent=124 // loop_body
                  %v1040 = vld [vmem:[%s1038] sm:$0xff]
                  %1041 = vst [vmem:[%s1039] sm:$0xff] %v1040
                  %v1042 = vld [vmem:[%s1038 + $0x20] sm:$0xff]
                  %1043 = vst [vmem:[%s1039 + $0x48] sm:$0xff] %v1042
                  %s1044 = sadd.s32 1, %s1037
                  %p1045 = scmp.ge.s32.totalorder %s1044, %s1021
                  %s1046 = scalar_select %p1045, 0, %s1044
                  %s1047 = smul.u32 %s1046, 8
                  %s1048 = smul.u32 %s1046, 8
                  %s1049 = scalar_lea.vmem %s1025, %s1047 [#allocation3]
                  %s1050 = scalar_lea.vmem %s1028, %s1048
                $region137: #{net_forward.5} parent=124 // loop_footer
                  %s1034 = sadd.s32 %s1032, 1
                $region138: #{net_forward.5} parent=124 // loop_footer_branch
                  %1031 = sbr.rel target = $region134
                $region139: #{net_forward.5} parent=124 // loop_exit
                  _
              $region125: #{net_forward.5} parent=109 // pred_fallthru
                _
              %p1051 = pneg %p868
              // Predicated region
              $region140: #{net_forward.5} parent=109 // pred_check
                _
              $region141: #{net_forward.5} parent=109 // pred_check_branch
                %1053 = sbr.rel (%p868) target = $region143
              $region142: #{net_forward.5} parent=109 // pred_region
                %s1054 = sand.u32 %s843, 7
                %s1055 = ssub.s32 %s843, %s1054
                %s1056 = scalar_lea.vmem %s831, %s1055 [#allocation3]
                %s1057 = ssub.s32 %s843, %s1054
                %s1058 = scalar_lea.vmem %s842, %s1057
                %s1059 = sshrl.u32 %s843, 3
                %s1060 = sshrl.u32 %s1059, 5
                // While loop
                $region144: #{net_forward.5} parent=142 // loop_pre_header
                  _
                $region145: #{net_forward.5} parent=142 // loop_header
                  %s1064 = sphi 0, %s1066
                  %p1065 = scmp.ge.s32.totalorder %s1064, %s1060
                  %s1069 = sphi 0, %s1202
                  %s1070 = sphi %s831, %s1205
                  %s1071 = sphi %s842, %s1206
                $region146: #{net_forward.5} parent=142 // loop_header_branch
                  %1068 = sbr.rel (%p1065) target = $region150
                $region147: #{net_forward.5} parent=142 // loop_body
                  %v1072 = vld [vmem:[%s1070] sm:$0xff]
                  %1073 = vst [vmem:[%s1071] sm:$0xff] %v1072
                  %v1074 = vld [vmem:[%s1070 + $0x8] sm:$0xff]
                  %1075 = vst [vmem:[%s1071 + $0x8] sm:$0xff] %v1074
                  %v1076 = vld [vmem:[%s1070 + $0x10] sm:$0xff]
                  %1077 = vst [vmem:[%s1071 + $0x10] sm:$0xff] %v1076
                  %v1078 = vld [vmem:[%s1070 + $0x18] sm:$0xff]
                  %1079 = vst [vmem:[%s1071 + $0x18] sm:$0xff] %v1078
                  %v1080 = vld [vmem:[%s1070 + $0x20] sm:$0xff]
                  %1081 = vst [vmem:[%s1071 + $0x20] sm:$0xff] %v1080
                  %v1082 = vld [vmem:[%s1070 + $0x28] sm:$0xff]
                  %1083 = vst [vmem:[%s1071 + $0x28] sm:$0xff] %v1082
                  %v1084 = vld [vmem:[%s1070 + $0x30] sm:$0xff]
                  %1085 = vst [vmem:[%s1071 + $0x30] sm:$0xff] %v1084
                  %v1086 = vld [vmem:[%s1070 + $0x38] sm:$0xff]
                  %1087 = vst [vmem:[%s1071 + $0x38] sm:$0xff] %v1086
                  %v1088 = vld [vmem:[%s1070 + $0x40] sm:$0xff]
                  %1089 = vst [vmem:[%s1071 + $0x40] sm:$0xff] %v1088
                  %v1090 = vld [vmem:[%s1070 + $0x48] sm:$0xff]
                  %1091 = vst [vmem:[%s1071 + $0x48] sm:$0xff] %v1090
                  %v1092 = vld [vmem:[%s1070 + $0x50] sm:$0xff]
                  %1093 = vst [vmem:[%s1071 + $0x50] sm:$0xff] %v1092
                  %v1094 = vld [vmem:[%s1070 + $0x58] sm:$0xff]
                  %1095 = vst [vmem:[%s1071 + $0x58] sm:$0xff] %v1094
                  %v1096 = vld [vmem:[%s1070 + $0x60] sm:$0xff]
                  %1097 = vst [vmem:[%s1071 + $0x60] sm:$0xff] %v1096
                  %v1098 = vld [vmem:[%s1070 + $0x68] sm:$0xff]
                  %1099 = vst [vmem:[%s1071 + $0x68] sm:$0xff] %v1098
                  %v1100 = vld [vmem:[%s1070 + $0x70] sm:$0xff]
                  %1101 = vst [vmem:[%s1071 + $0x70] sm:$0xff] %v1100
                  %v1102 = vld [vmem:[%s1070 + $0x78] sm:$0xff]
                  %1103 = vst [vmem:[%s1071 + $0x78] sm:$0xff] %v1102
                  %v1104 = vld [vmem:[%s1070 + $0x80] sm:$0xff]
                  %1105 = vst [vmem:[%s1071 + $0x80] sm:$0xff] %v1104
                  %v1106 = vld [vmem:[%s1070 + $0x88] sm:$0xff]
                  %1107 = vst [vmem:[%s1071 + $0x88] sm:$0xff] %v1106
                  %v1108 = vld [vmem:[%s1070 + $0x90] sm:$0xff]
                  %1109 = vst [vmem:[%s1071 + $0x90] sm:$0xff] %v1108
                  %v1110 = vld [vmem:[%s1070 + $0x98] sm:$0xff]
                  %1111 = vst [vmem:[%s1071 + $0x98] sm:$0xff] %v1110
                  %v1112 = vld [vmem:[%s1070 + $0xa0] sm:$0xff]
                  %1113 = vst [vmem:[%s1071 + $0xa0] sm:$0xff] %v1112
                  %v1114 = vld [vmem:[%s1070 + $0xa8] sm:$0xff]
                  %1115 = vst [vmem:[%s1071 + $0xa8] sm:$0xff] %v1114
                  %v1116 = vld [vmem:[%s1070 + $0xb0] sm:$0xff]
                  %1117 = vst [vmem:[%s1071 + $0xb0] sm:$0xff] %v1116
                  %v1118 = vld [vmem:[%s1070 + $0xb8] sm:$0xff]
                  %1119 = vst [vmem:[%s1071 + $0xb8] sm:$0xff] %v1118
                  %v1120 = vld [vmem:[%s1070 + $0xc0] sm:$0xff]
                  %1121 = vst [vmem:[%s1071 + $0xc0] sm:$0xff] %v1120
                  %v1122 = vld [vmem:[%s1070 + $0xc8] sm:$0xff]
                  %1123 = vst [vmem:[%s1071 + $0xc8] sm:$0xff] %v1122
                  %v1124 = vld [vmem:[%s1070 + $0xd0] sm:$0xff]
                  %1125 = vst [vmem:[%s1071 + $0xd0] sm:$0xff] %v1124
                  %v1126 = vld [vmem:[%s1070 + $0xd8] sm:$0xff]
                  %1127 = vst [vmem:[%s1071 + $0xd8] sm:$0xff] %v1126
                  %v1128 = vld [vmem:[%s1070 + $0xe0] sm:$0xff]
                  %1129 = vst [vmem:[%s1071 + $0xe0] sm:$0xff] %v1128
                  %v1130 = vld [vmem:[%s1070 + $0xe8] sm:$0xff]
                  %1131 = vst [vmem:[%s1071 + $0xe8] sm:$0xff] %v1130
                  %v1132 = vld [vmem:[%s1070 + $0xf0] sm:$0xff]
                  %1133 = vst [vmem:[%s1071 + $0xf0] sm:$0xff] %v1132
                  %v1134 = vld [vmem:[%s1070 + $0xf8] sm:$0xff]
                  %1135 = vst [vmem:[%s1071 + $0xf8] sm:$0xff] %v1134
                  %v1136 = vld [vmem:[%s1070 + $0x20] sm:$0xff]
                  %1137 = vst [vmem:[%s1071 + $0x48] sm:$0xff] %v1136
                  %v1138 = vld [vmem:[%s1070 + $0x28] sm:$0xff]
                  %1139 = vst [vmem:[%s1071 + $0x50] sm:$0xff] %v1138
                  %v1140 = vld [vmem:[%s1070 + $0x30] sm:$0xff]
                  %1141 = vst [vmem:[%s1071 + $0x58] sm:$0xff] %v1140
                  %v1142 = vld [vmem:[%s1070 + $0x38] sm:$0xff]
                  %1143 = vst [vmem:[%s1071 + $0x60] sm:$0xff] %v1142
                  %v1144 = vld [vmem:[%s1070 + $0x40] sm:$0xff]
                  %1145 = vst [vmem:[%s1071 + $0x68] sm:$0xff] %v1144
                  %v1146 = vld [vmem:[%s1070 + $0x48] sm:$0xff]
                  %1147 = vst [vmem:[%s1071 + $0x70] sm:$0xff] %v1146
                  %v1148 = vld [vmem:[%s1070 + $0x50] sm:$0xff]
                  %1149 = vst [vmem:[%s1071 + $0x78] sm:$0xff] %v1148
                  %v1150 = vld [vmem:[%s1070 + $0x58] sm:$0xff]
                  %1151 = vst [vmem:[%s1071 + $0x80] sm:$0xff] %v1150
                  %v1152 = vld [vmem:[%s1070 + $0x60] sm:$0xff]
                  %1153 = vst [vmem:[%s1071 + $0x88] sm:$0xff] %v1152
                  %v1154 = vld [vmem:[%s1070 + $0x68] sm:$0xff]
                  %1155 = vst [vmem:[%s1071 + $0x90] sm:$0xff] %v1154
                  %v1156 = vld [vmem:[%s1070 + $0x70] sm:$0xff]
                  %1157 = vst [vmem:[%s1071 + $0x98] sm:$0xff] %v1156
                  %v1158 = vld [vmem:[%s1070 + $0x78] sm:$0xff]
                  %1159 = vst [vmem:[%s1071 + $0xa0] sm:$0xff] %v1158
                  %v1160 = vld [vmem:[%s1070 + $0x80] sm:$0xff]
                  %1161 = vst [vmem:[%s1071 + $0xa8] sm:$0xff] %v1160
                  %v1162 = vld [vmem:[%s1070 + $0x88] sm:$0xff]
                  %1163 = vst [vmem:[%s1071 + $0xb0] sm:$0xff] %v1162
                  %v1164 = vld [vmem:[%s1070 + $0x90] sm:$0xff]
                  %1165 = vst [vmem:[%s1071 + $0xb8] sm:$0xff] %v1164
                  %v1166 = vld [vmem:[%s1070 + $0x98] sm:$0xff]
                  %1167 = vst [vmem:[%s1071 + $0xc0] sm:$0xff] %v1166
                  %v1168 = vld [vmem:[%s1070 + $0xa0] sm:$0xff]
                  %1169 = vst [vmem:[%s1071 + $0xc8] sm:$0xff] %v1168
                  %v1170 = vld [vmem:[%s1070 + $0xa8] sm:$0xff]
                  %1171 = vst [vmem:[%s1071 + $0xd0] sm:$0xff] %v1170
                  %v1172 = vld [vmem:[%s1070 + $0xb0] sm:$0xff]
                  %1173 = vst [vmem:[%s1071 + $0xd8] sm:$0xff] %v1172
                  %v1174 = vld [vmem:[%s1070 + $0xb8] sm:$0xff]
                  %1175 = vst [vmem:[%s1071 + $0xe0] sm:$0xff] %v1174
                  %v1176 = vld [vmem:[%s1070 + $0xc0] sm:$0xff]
                  %1177 = vst [vmem:[%s1071 + $0xe8] sm:$0xff] %v1176
                  %v1178 = vld [vmem:[%s1070 + $0xc8] sm:$0xff]
                  %1179 = vst [vmem:[%s1071 + $0xf0] sm:$0xff] %v1178
                  %v1180 = vld [vmem:[%s1070 + $0xd0] sm:$0xff]
                  %1181 = vst [vmem:[%s1071 + $0xf8] sm:$0xff] %v1180
                  %v1182 = vld [vmem:[%s1070 + $0xd8] sm:$0xff]
                  %1183 = vst [vmem:[%s1071 + $0x100] sm:$0xff] %v1182
                  %v1184 = vld [vmem:[%s1070 + $0xe0] sm:$0xff]
                  %1185 = vst [vmem:[%s1071 + $0x108] sm:$0xff] %v1184
                  %v1186 = vld [vmem:[%s1070 + $0xe8] sm:$0xff]
                  %1187 = vst [vmem:[%s1071 + $0x110] sm:$0xff] %v1186
                  %v1188 = vld [vmem:[%s1070 + $0xf0] sm:$0xff]
                  %1189 = vst [vmem:[%s1071 + $0x118] sm:$0xff] %v1188
                  %v1190 = vld [vmem:[%s1070 + $0xf8] sm:$0xff]
                  %1191 = vst [vmem:[%s1071 + $0x120] sm:$0xff] %v1190
                  %v1192 = vld [vmem:[%s1070 + $0x100] sm:$0xff]
                  %1193 = vst [vmem:[%s1071 + $0x128] sm:$0xff] %v1192
                  %v1194 = vld [vmem:[%s1070 + $0x108] sm:$0xff]
                  %1195 = vst [vmem:[%s1071 + $0x130] sm:$0xff] %v1194
                  %v1196 = vld [vmem:[%s1070 + $0x110] sm:$0xff]
                  %1197 = vst [vmem:[%s1071 + $0x138] sm:$0xff] %v1196
                  %v1198 = vld [vmem:[%s1070 + $0x118] sm:$0xff]
                  %1199 = vst [vmem:[%s1071 + $0x140] sm:$0xff] %v1198
                  %s1200 = sadd.s32 1, %s1069
                  %p1201 = scmp.ge.s32.totalorder %s1200, %s1060
                  %s1202 = scalar_select %p1201, 0, %s1200
                  %s1203 = smul.u32 %s1202, 256
                  %s1204 = smul.u32 %s1202, 256
                  %s1205 = scalar_lea.vmem %s831, %s1203 [#allocation3]
                  %s1206 = scalar_lea.vmem %s842, %s1204
                $region148: #{net_forward.5} parent=142 // loop_footer
                  %s1066 = sadd.s32 %s1064, 1
                $region149: #{net_forward.5} parent=142 // loop_footer_branch
                  %1063 = sbr.rel target = $region145
                $region150: #{net_forward.5} parent=142 // loop_exit
                  _
                %s1207 = sshrl.u32 %s1059, 5
                %s1208 = sand.u32 %s1059, 31
                %s1209 = smul.u32 %s1207, 32
                %s1210 = smul.u32 128, %s1209
                %s1211 = sshra.s32 %s1210, 4
                %s1212 = scalar_lea.vmem %s831, %s1211 [#allocation3]
                %s1213 = smul.u32 128, %s1209
                %s1214 = sshra.s32 %s1213, 4
                %s1215 = scalar_lea.vmem %s842, %s1214
                // While loop
                $region151: #{net_forward.5} parent=142 // loop_pre_header
                  _
                $region152: #{net_forward.5} parent=142 // loop_header
                  %s1219 = sphi 0, %s1221
                  %p1220 = scmp.ge.s32.totalorder %s1219, %s1208
                  %s1224 = sphi 0, %s1233
                  %s1225 = sphi %s1212, %s1236
                  %s1226 = sphi %s1215, %s1237
                $region153: #{net_forward.5} parent=142 // loop_header_branch
                  %1223 = sbr.rel (%p1220) target = $region157
                $region154: #{net_forward.5} parent=142 // loop_body
                  %v1227 = vld [vmem:[%s1225] sm:$0xff]
                  %1228 = vst [vmem:[%s1226] sm:$0xff] %v1227
                  %v1229 = vld [vmem:[%s1225 + $0x20] sm:$0xff]
                  %1230 = vst [vmem:[%s1226 + $0x48] sm:$0xff] %v1229
                  %s1231 = sadd.s32 1, %s1224
                  %p1232 = scmp.ge.s32.totalorder %s1231, %s1208
                  %s1233 = scalar_select %p1232, 0, %s1231
                  %s1234 = smul.u32 %s1233, 8
                  %s1235 = smul.u32 %s1233, 8
                  %s1236 = scalar_lea.vmem %s1212, %s1234 [#allocation3]
                  %s1237 = scalar_lea.vmem %s1215, %s1235
                $region155: #{net_forward.5} parent=142 // loop_footer
                  %s1221 = sadd.s32 %s1219, 1
                $region156: #{net_forward.5} parent=142 // loop_footer_branch
                  %1218 = sbr.rel target = $region152
                $region157: #{net_forward.5} parent=142 // loop_exit
                  _
                %s1238 = sshllo.u32 0, %s1054
                loop: start=0, step=1, limit=1
                $region158: #{net_forward.5} parent=142 // loop_pre_header
                  _
                $region159: #{net_forward.5} parent=142 // loop_header
                  %s1240 = sphi 0, %s1244
                  %p1241 = scmp.ge.s32.totalorder %s1240, 1
                  %s1245 = sphi %s1056, %s1056
                  %s1246 = sphi %s1058, %s1058
                $region160: #{net_forward.5} parent=142 // loop_header_branch
                  %1243 = sbr.rel (%p1241) target = $region164
                $region161: #{net_forward.5} parent=142 // loop_body
                  %v1247 = vld [vmem:[%s1245] sm:%s1238]
                  %1248 = vst [vmem:[%s1246] sm:%s1238] %v1247
                  %v1249 = vld [vmem:[%s1245 + $0x20] sm:%s1238]
                  %1250 = vst [vmem:[%s1246 + $0x48] sm:%s1238] %v1249
                $region162: #{net_forward.5} parent=142 // loop_footer
                  %s1244 = sadd.s32 1, %s1240
                $region163: #{net_forward.5} parent=142 // loop_footer_branch
                  %1239 = sbr.rel target = $region159
                $region164: #{net_forward.5} parent=142 // loop_exit
                  _
              $region143: #{net_forward.5} parent=109 // pred_fallthru
                _
            $region110: #{net_forward.5} parent=105 // pred_fallthru
              _
            // Predicated region
            $region111: #{net_forward.5} parent=105 // pred_check
              %p851 = pneg %p847
            $region112: #{net_forward.5} parent=105 // pred_check_branch
              %853 = sbr.rel (%p851) target = $region114
            $region113: #{net_forward.5} parent=105 // pred_region
              %s854 = sshllo.u32 0, %s843
              loop: start=0, step=1, limit=1
              $region115: #{net_forward.5} parent=113 // loop_pre_header
                _
              $region116: #{net_forward.5} parent=113 // loop_header
                %s856 = sphi 0, %s860
                %p857 = scmp.ge.s32.totalorder %s856, 1
                %s861 = sphi %s831, %s831
                %s862 = sphi %s842, %s842
              $region117: #{net_forward.5} parent=113 // loop_header_branch
                %859 = sbr.rel (%p857) target = $region121
              $region118: #{net_forward.5} parent=113 // loop_body
                %v863 = vld [vmem:[%s861] sm:%s854]
                %864 = vst [vmem:[%s862] sm:%s854] %v863
                %v865 = vld [vmem:[%s861 + $0x20] sm:%s854]
                %866 = vst [vmem:[%s862 + $0x48] sm:%s854] %v865
              $region119: #{net_forward.5} parent=113 // loop_footer
                %s860 = sadd.s32 1, %s856
              $region120: #{net_forward.5} parent=113 // loop_footer_branch
                %855 = sbr.rel target = $region116
              $region121: #{net_forward.5} parent=113 // loop_exit
                _
            $region114: #{net_forward.5} parent=105 // pred_fallthru
              _
          $region106: #{net_forward.5} parent=101 // pred_fallthru
            _
          %1251 = vnop
        $region102: #{net_forward.5} parent=93 // pred_fallthru
          _
      $region94: #{net_forward.5} parent=5 // pred_fallthru
        _
      %p1252 = scmp.le.s32.totalorder 2, %s9
      // Predicated region
      $region165: #{net_forward.5} parent=5 // pred_check
        %p1253 = pneg %p1252
      $region166: #{net_forward.5} parent=5 // pred_check_branch
        %1255 = sbr.rel (%p1253) target = $region168
      $region167: #{net_forward.5} parent=5 // pred_region
        %s1256 = ssub.s32 %s9, 2
        // Predicated region
        $region169: #{net_forward.5} parent=167 // pred_check
          %p1257 = pneg %p106
        $region170: #{net_forward.5} parent=167 // pred_check_branch
          %1259 = sbr.rel (%p1257) target = $region172
        $region171: #{net_forward.5} parent=167 // pred_region
          %s1260 = sand.u32 %s91, 1
          %s1261 = sand.u32 %s91, 1
          %s1262 = smul.addr %s1261, 64
          %s1263 = scalar_lea.vmem [#allocation3], %s1262
        $region172: #{net_forward.5} parent=167 // pred_fallthru
          _
      $region168: #{net_forward.5} parent=5 // pred_fallthru
        _
    $region6: #{net_forward.5} parent=1 // loop_footer
      %s13 = sadd.s32 1, %s9
    $region7: #{net_forward.5} parent=1 // loop_footer_branch
      %8 = sbr.rel target = $region3
    $region8: #{net_forward.5} parent=1 // loop_exit
      _

// kernel: net_forward.7
$region0: #{net_forward.7}
  #allocation0 [shape = 'u32[]', space=smem, size = 0x4, offset = 0x4, fixed_abs, tag = 'smem constant byte address 0x4 - core index']
  #allocation1 [shape = 'u32[144,128]{1,0:T(1,128)}', space=vmem, size = 0x12000, scoped, tag = 'internal scratch']
  %s0 = inlined_call_operand.vmem [shape: f32[20,250], index: 0, kind: input, shape index: {}]
  %s1 = inlined_call_operand.vmem [shape: f32[250,128], index: 1, kind: input, shape index: {}]
  %s2 = inlined_call_operand.vmem [shape: f32[20,1], index: 2, kind: input, shape index: {}]
  %s3 = inlined_call_operand.vmem [shape: f32[20,128], index: 3, kind: output, shape index: {}]
  %s4 = sld [smem:[#allocation0]]
  $region22: #{net_forward.7} parent=0
    _
  %s6 = ssub.s32 1, %s4
  %s7 = scalar_select 0, %s6, %s4
  // Predicated region
  $region2: #{net_forward.7} parent=0 // pred_check
    _
  $region3: #{net_forward.7} parent=0 // pred_check_branch
    %9 = sbr.rel (0) target = $region5
  $region4: #{net_forward.7} parent=0 // pred_region
    _
  $region5: #{net_forward.7} parent=0 // pred_fallthru
    _
  // Predicated region
  $region6: #{net_forward.7} parent=0 // pred_check
    _
  $region7: #{net_forward.7} parent=0 // pred_check_branch
    %11 = sbr.rel (0) target = $region9
  $region8: #{net_forward.7} parent=0 // pred_region
    _
  $region9: #{net_forward.7} parent=0 // pred_fallthru
    _
  // Predicated region
  $region10: #{net_forward.7} parent=0 // pred_check
    _
  $region11: #{net_forward.7} parent=0 // pred_check_branch
    %13 = sbr.rel (0) target = $region13
  $region12: #{net_forward.7} parent=0 // pred_region
    _
  $region13: #{net_forward.7} parent=0 // pred_fallthru
    _
  %v14 = vld [vmem:[%s0] sm:$0xff]
  %v15 = vld [vmem:[%s0 + $0x8] sm:$0xff]
  %v16 = vld [vmem:[%s0 + $0x10] sm:$0xff]
  %v17 = vld [vmem:[%s0 + $0x18] sm:$0xff]
  %v18 = vld [vmem:[%s0 + $0x20] sm:$0xf]
  %v19 = vld [vmem:[%s0 + $0x28] sm:$0xf]
  %v20 = vld [vmem:[%s1] sm:$0xff]
  %v21 = vld [vmem:[%s1 + $0x8] sm:$0xff]
  %v22 = vld [vmem:[%s1 + $0x10] sm:$0xff]
  %v23 = vld [vmem:[%s1 + $0x18] sm:$0xff]
  %v24 = vld [vmem:[%s1 + $0x20] sm:$0xff]
  %v25 = vld [vmem:[%s1 + $0x28] sm:$0xff]
  %v26 = vld [vmem:[%s1 + $0x30] sm:$0xff]
  %v27 = vld [vmem:[%s1 + $0x38] sm:$0xff]
  %v28 = vld [vmem:[%s1 + $0x40] sm:$0xff]
  %v29 = vld [vmem:[%s1 + $0x48] sm:$0xff]
  %v30 = vld [vmem:[%s1 + $0x50] sm:$0xff]
  %v31 = vld [vmem:[%s1 + $0x58] sm:$0xff]
  %v32 = vld [vmem:[%s1 + $0x60] sm:$0xff]
  %v33 = vld [vmem:[%s1 + $0x68] sm:$0xff]
  %v34 = vld [vmem:[%s1 + $0x70] sm:$0xff]
  %v35 = vld [vmem:[%s1 + $0x78] sm:$0xff]
  %v36 = vld [vmem:[%s1 + $0x80] sm:$0xff]
  %v37 = vld [vmem:[%s1 + $0x88] sm:$0xff]
  %v38 = vld [vmem:[%s1 + $0x90] sm:$0xff]
  %v39 = vld [vmem:[%s1 + $0x98] sm:$0xff]
  %v40 = vld [vmem:[%s1 + $0xa0] sm:$0xff]
  %v41 = vld [vmem:[%s1 + $0xa8] sm:$0xff]
  %v42 = vld [vmem:[%s1 + $0xb0] sm:$0xff]
  %v43 = vld [vmem:[%s1 + $0xb8] sm:$0xff]
  %v44 = vld [vmem:[%s1 + $0xc0] sm:$0xff]
  %v45 = vld [vmem:[%s1 + $0xc8] sm:$0xff]
  %v46 = vld [vmem:[%s1 + $0xd0] sm:$0xff]
  %v47 = vld [vmem:[%s1 + $0xd8] sm:$0xff]
  %v48 = vld [vmem:[%s1 + $0xe0] sm:$0xff]
  %v49 = vld [vmem:[%s1 + $0xe8] sm:$0xff]
  %v50 = vld [vmem:[%s1 + $0xf0] sm:$0xff]
  %v51 = vld [vmem:[%s1 + $0xf8] sm:$0x3]
  %v52 = vld [vmem:[%s2] sm:$0xff]
  %v53 = vld [vmem:[%s2 + $0x8] sm:$0xff]
  %v54 = vld [vmem:[%s2 + $0x10] sm:$0xf]
  %56 = vset.pattern.permute.xlu0 0
  %57 = vperm.xlu0 %56, %v52
  %v58 = vpop.permute.xlu0 %57
  %61 = vset.pattern.permute.xlu0 0
  %62 = vperm.xlu0 %61, %v53
  %v63 = vpop.permute.xlu0 %62
  %66 = vset.pattern.permute.xlu0 0
  %67 = vperm.xlu0 %66, %v54
  %v68 = vpop.permute.xlu0 %67
  %vm70 = vcmask 998400
  %v72 = vsel %vm70, %v15, 0
  %v75 = vsel %vm70, %v17, 0
  %v78 = vsel %vm70, %v19, 0
  %vm80 = vcmask 1041408
  %v82 = vsel %vm80, %v51, 0
  %84 = vmatprep.subr.mxu0 0.0
  %85 = vmatpush1.msra.mxu0 %v20
  %86 = vmatprep.subr.mxu0 0.0
  %87 = vmatpush1.msra.mxu0 %v21
  %88 = vmatprep.subr.mxu0 0.0
  %89 = vmatpush1.msra.mxu0 %v22
  %90 = vmatprep.subr.mxu0 0.0
  %91 = vmatpush1.msra.mxu0 %v23
  %92 = vmatprep.subr.mxu0 0.0
  %93 = vmatpush1.msra.mxu0 %v24
  %94 = vmatprep.subr.mxu0 0.0
  %95 = vmatpush1.msra.mxu0 %v25
  %96 = vmatprep.subr.mxu0 0.0
  %97 = vmatpush1.msra.mxu0 %v26
  %98 = vmatprep.subr.mxu0 0.0
  %99 = vmatpush1.msra.mxu0 %v27
  %100 = vmatprep.subr.mxu0 0.0
  %101 = vmatpush1.msra.mxu0 %v28
  %102 = vmatprep.subr.mxu0 0.0
  %103 = vmatpush1.msra.mxu0 %v29
  %104 = vmatprep.subr.mxu0 0.0
  %105 = vmatpush1.msra.mxu0 %v30
  %106 = vmatprep.subr.mxu0 0.0
  %107 = vmatpush1.msra.mxu0 %v31
  %108 = vmatprep.subr.mxu0 0.0
  %109 = vmatpush1.msra.mxu0 %v32
  %110 = vmatprep.subr.mxu0 0.0
  %111 = vmatpush1.msra.mxu0 %v33
  %112 = vmatprep.subr.mxu0 0.0
  %113 = vmatpush1.msra.mxu0 %v34
  %114 = vmatprep.subr.mxu0 0.0
  %115 = vmatpush1.msra.mxu0 %v35
  %116 = vmatprep.subr.mxu0 0.0
  %117 = vmatpush1.msra.mxu0 %v36
  %118 = vmatprep.subr.mxu0 0.0
  %119 = vmatpush1.msra.mxu0 %v37
  %120 = vmatprep.subr.mxu0 0.0
  %121 = vmatpush1.msra.mxu0 %v38
  %122 = vmatprep.subr.mxu0 0.0
  %123 = vmatpush1.msra.mxu0 %v39
  %124 = vmatprep.subr.mxu0 0.0
  %125 = vmatpush1.msra.mxu0 %v40
  %126 = vmatprep.subr.mxu0 0.0
  %127 = vmatpush1.msra.mxu0 %v41
  %128 = vmatprep.subr.mxu0 0.0
  %129 = vmatpush1.msra.mxu0 %v42
  %130 = vmatprep.subr.mxu0 0.0
  %131 = vmatpush1.msra.mxu0 %v43
  %132 = vmatprep.subr.mxu0 0.0
  %133 = vmatpush1.msra.mxu0 %v44
  %134 = vmatprep.subr.mxu0 0.0
  %135 = vmatpush1.msra.mxu0 %v45
  %136 = vmatprep.subr.mxu0 0.0
  %137 = vmatpush1.msra.mxu0 %v46
  %138 = vmatprep.subr.mxu0 0.0
  %139 = vmatpush1.msra.mxu0 %v47
  %140 = vmatprep.subr.mxu0 0.0
  %141 = vmatpush1.msra.mxu0 %v48
  %142 = vmatprep.subr.mxu0 0.0
  %143 = vmatpush1.msra.mxu0 %v49
  %144 = vmatprep.subr.mxu0 0.0
  %145 = vmatpush1.msra.mxu0 %v50
  %146 = vmatprep.subr.mxu0 0.0
  %147 = vmatpush1.msra.mxu0 %v82
  %148 = vmatprep.mubr.f32.mxu0 %v72
  %149 = vmatmul.mubr.f32.gmra.mrb[0].mxu0 %v14
  %v150 = vpop.f32.mrb[0].mxu0
  %v151 = vadd.f32 %v58, %v150
  %v152 = vpop.f32.mrb[0].mxu0
  %153 = vmatprep.mubr.f32.mxu0 %v75
  %154 = vmatmul.mubr.f32.gmra.mrb[0].mxu0 %v16
  %v155 = vpop.f32.mrb[0].mxu0
  %v156 = vadd.f32 %v63, %v155
  %v157 = vpop.f32.mrb[0].mxu0
  %158 = vmatprep.mubr.f32.mxu0 %v78
  %159 = vmatmul.mubr.f32.gmra.mrb[0].mxu0 %v18
  %v160 = vpop.f32.mrb[0].mxu0
  %v161 = vadd.f32 %v68, %v160
  %v162 = vpop.f32.mrb[0].mxu0
  %163 = vdwg.mxu0
  %v164 = vmax.f32 %v151, 0.0
  %v165 = vmax.f32 %v156, 0.0
  %v166 = vmax.f32 %v161, 0.0
  %167 = vst [vmem:[%s3] sm:$0xff] %v164
  %168 = vst [vmem:[%s3 + $0x8] sm:$0xff] %v165
  %169 = vst [vmem:[%s3 + $0x10] sm:$0xf] %v166
  // Predicated region
  $region14: #{net_forward.7} parent=0 // pred_check
    _
  $region15: #{net_forward.7} parent=0 // pred_check_branch
    %171 = sbr.rel (0) target = $region17
  $region16: #{net_forward.7} parent=0 // pred_region
    _
  $region17: #{net_forward.7} parent=0 // pred_fallthru
    _
  // Predicated region
  $region18: #{net_forward.7} parent=0 // pred_check
    _
  $region19: #{net_forward.7} parent=0 // pred_check_branch
    %173 = sbr.rel (0) target = $region21
  $region20: #{net_forward.7} parent=0 // pred_region
    _
  $region21: #{net_forward.7} parent=0 // pred_fallthru
    _

// kernel: net_forward.8
$region0: #{net_forward.8}
  #allocation0 [shape = 'u32[]', space=smem, size = 0x4, offset = 0x4, fixed_abs, tag = 'smem constant byte address 0x4 - core index']
  #allocation1 [shape = 'u32[144,128]{1,0:T(1,128)}', space=vmem, size = 0x12000, scoped, tag = 'internal scratch']
  %s0 = inlined_call_operand.vmem [shape: f32[20,32], index: 0, kind: input, shape index: {}]
  %s1 = inlined_call_operand.vmem [shape: f32[20,20], index: 1, kind: input, shape index: {}]
  %s2 = inlined_call_operand.vmem [shape: f32[20,1], index: 2, kind: input, shape index: {}]
  %s3 = inlined_call_operand.vmem [shape: f32[10,32], index: 3, kind: output, shape index: {}]
  %s4 = sld [smem:[#allocation0]]
  $region22: #{net_forward.8} parent=0
    _
  %s6 = ssub.s32 1, %s4
  %s7 = scalar_select 0, %s6, %s4
  // Predicated region
  $region2: #{net_forward.8} parent=0 // pred_check
    _
  $region3: #{net_forward.8} parent=0 // pred_check_branch
    %9 = sbr.rel (0) target = $region5
  $region4: #{net_forward.8} parent=0 // pred_region
    _
  $region5: #{net_forward.8} parent=0 // pred_fallthru
    _
  // Predicated region
  $region6: #{net_forward.8} parent=0 // pred_check
    _
  $region7: #{net_forward.8} parent=0 // pred_check_branch
    %11 = sbr.rel (0) target = $region9
  $region8: #{net_forward.8} parent=0 // pred_region
    _
  $region9: #{net_forward.8} parent=0 // pred_fallthru
    _
  // Predicated region
  $region10: #{net_forward.8} parent=0 // pred_check
    _
  $region11: #{net_forward.8} parent=0 // pred_check_branch
    %13 = sbr.rel (0) target = $region13
  $region12: #{net_forward.8} parent=0 // pred_region
    _
  $region13: #{net_forward.8} parent=0 // pred_fallthru
    _
  %v14 = vld [vmem:[%s0] sm:$0xff]
  %v15 = vld [vmem:[%s0 + $0x8] sm:$0xff]
  %v16 = vld [vmem:[%s0 + $0x10] sm:$0xf]
  %v17 = vld [vmem:[%s1] sm:$0xff]
  %v18 = vld [vmem:[%s1 + $0x8] sm:$0xff]
  %v19 = vld [vmem:[%s1 + $0x10] sm:$0xf]
  %v20 = vld [vmem:[%s2] sm:$0xff]
  %v21 = vld [vmem:[%s2 + $0x8] sm:$0xff]
  %v22 = vld [vmem:[%s2 + $0x10] sm:$0xf]
  %24 = vset.pattern.permute.xlu0 0
  %25 = vperm.xlu0 %24, %v20
  %v26 = vpop.permute.xlu0 %25
  %29 = vset.pattern.permute.xlu0 0
  %30 = vperm.xlu0 %29, %v21
  %v31 = vpop.permute.xlu0 %30
  %34 = vset.pattern.permute.xlu0 0
  %35 = vperm.xlu0 %34, %v22
  %v36 = vpop.permute.xlu0 %35
  %vm38 = vcmask 162816
  %v40 = vsel %vm38, %v17, 0
  %v43 = vsel %vm38, %v18, 0
  %v46 = vsel %vm38, %v19, 0
  %vm48 = vcmask 1043456
  %v50 = vsel %vm48, %v16, 0
  %52 = vmatprep.subr.mxu0 0.0
  %53 = vmatpush1.msra.mxu0 %v14
  %54 = vmatprep.subr.mxu0 0.0
  %55 = vmatpush1.msra.mxu0 %v15
  %56 = vmatprep.subr.mxu0 0.0
  %57 = vmatpush1.msra.mxu0 %v50
  %58 = vmatprep.subr.mxu0 0.0
  %59 = vmatpush1.msra.mxu0 0.0
  %60 = vmatprep.subr.mxu0 0.0
  %61 = vmatpush1.msra.mxu0 0.0
  %62 = vmatprep.subr.mxu0 0.0
  %63 = vmatpush1.msra.mxu0 0.0
  %64 = vmatprep.subr.mxu0 0.0
  %65 = vmatpush1.msra.mxu0 0.0
  %66 = vmatprep.subr.mxu0 0.0
  %67 = vmatpush1.msra.mxu0 0.0
  %68 = vmatprep.subr.mxu0 0.0
  %69 = vmatpush1.msra.mxu0 0.0
  %70 = vmatprep.subr.mxu0 0.0
  %71 = vmatpush1.msra.mxu0 0.0
  %72 = vmatprep.subr.mxu0 0.0
  %73 = vmatpush1.msra.mxu0 0.0
  %74 = vmatprep.subr.mxu0 0.0
  %75 = vmatpush1.msra.mxu0 0.0
  %76 = vmatprep.subr.mxu0 0.0
  %77 = vmatpush1.msra.mxu0 0.0
  %78 = vmatprep.subr.mxu0 0.0
  %79 = vmatpush1.msra.mxu0 0.0
  %80 = vmatprep.subr.mxu0 0.0
  %81 = vmatpush1.msra.mxu0 0.0
  %82 = vmatprep.subr.mxu0 0.0
  %83 = vmatpush1.msra.mxu0 0.0
  %84 = vmatprep.subr.mxu0 0.0
  %85 = vmatpush1.msra.mxu0 0.0
  %86 = vmatprep.subr.mxu0 0.0
  %87 = vmatpush1.msra.mxu0 0.0
  %88 = vmatprep.subr.mxu0 0.0
  %89 = vmatpush1.msra.mxu0 0.0
  %90 = vmatprep.subr.mxu0 0.0
  %91 = vmatpush1.msra.mxu0 0.0
  %92 = vmatprep.subr.mxu0 0.0
  %93 = vmatpush1.msra.mxu0 0.0
  %94 = vmatprep.subr.mxu0 0.0
  %95 = vmatpush1.msra.mxu0 0.0
  %96 = vmatprep.subr.mxu0 0.0
  %97 = vmatpush1.msra.mxu0 0.0
  %98 = vmatprep.subr.mxu0 0.0
  %99 = vmatpush1.msra.mxu0 0.0
  %100 = vmatprep.subr.mxu0 0.0
  %101 = vmatpush1.msra.mxu0 0.0
  %102 = vmatprep.subr.mxu0 0.0
  %103 = vmatpush1.msra.mxu0 0.0
  %104 = vmatprep.subr.mxu0 0.0
  %105 = vmatpush1.msra.mxu0 0.0
  %106 = vmatprep.subr.mxu0 0.0
  %107 = vmatpush1.msra.mxu0 0.0
  %108 = vmatprep.subr.mxu0 0.0
  %109 = vmatpush1.msra.mxu0 0.0
  %110 = vmatprep.subr.mxu0 0.0
  %111 = vmatpush1.msra.mxu0 0.0
  %112 = vmatprep.subr.mxu0 0.0
  %113 = vmatpush1.msra.mxu0 0.0
  %114 = vmatprep.subr.mxu0 0.0
  %115 = vmatpush1.msra.mxu0 0.0
  %116 = vmatprep.mubr.f32.mxu0 0.0
  %117 = vmatmul.mubr.f32.gmra.mrb[0].mxu0 %v40
  %v118 = vpop.f32.mrb[0].mxu0
  %v119 = vadd.f32 %v26, %v118
  %v120 = vpop.f32.mrb[0].mxu0
  %121 = vmatprep.mubr.f32.mxu0 0.0
  %122 = vmatmul.mubr.f32.gmra.mrb[0].mxu0 %v43
  %v123 = vpop.f32.mrb[0].mxu0
  %v124 = vadd.f32 %v31, %v123
  %v125 = vpop.f32.mrb[0].mxu0
  %126 = vmatprep.mubr.f32.mxu0 0.0
  %127 = vmatmul.mubr.f32.gmra.mrb[0].mxu0 %v46
  %v128 = vpop.f32.mrb[0].mxu0
  %v129 = vadd.f32 %v36, %v128
  %v130 = vpop.f32.mrb[0].mxu0
  %131 = vdwg.mxu0
  %v132 = vmax.f32 %v119, 0.0
  %v133 = vmax.f32 %v124, 0.0
  %v134 = vmul.f32 %v132, 1.442695
  %v135 = vpow.pop %v134
  %v136 = vmul.f32 %v133, 1.442695
  %v137 = vpow.pop %v136
  %v138 = vxor.u32 %v124, 2147483648
  %v139 = vxor.u32 %v129, 2147483648
  %v140 = vmul.f32 %v138, 1.442695
  %v141 = vpow.pop %v140
  %v142 = vmul.f32 %v139, 1.442695
  %v143 = vpow.pop %v142
  %v144 = vadd.f32 %v141, 1.0
  %v145 = vadd.f32 %v143, 1.0
  %v146 = vrcp.pop %v144
  %v147 = vmul.f32 1.0, %v146
  %v148 = vrcp.pop %v145
  %v149 = vmul.f32 1.0, %v148
  %v150 = vlaneseq
  %v151 = vshrl.u32 %v150, 7
  %v152 = vadd.s32 %v151, 8
  %v153 = vadd.s32 %v151, 16
  %v154 = vadd.s32 %v151, 24
  %v155 = vlaneseq
  %v156 = vand.u32 %v155, 127
  %v157 = vmul.u32 %v156, 16
  %vm158 = vcmp.ge.s32.totalorder %v151, %v157
  %vm159 = vcmp.ge.s32.totalorder %v152, %v157
  %vm160 = vcmp.ge.s32.totalorder %v153, %v157
  %vm161 = vcmp.ge.s32.totalorder %v154, %v157
  %v162 = vadd.s32 %v156, 1
  %v163 = vmul.u32 %v162, 16
  %vm164 = vcmp.lt.s32.totalorder %v151, %v163
  %vm165 = vcmp.lt.s32.totalorder %v152, %v163
  %vm166 = vcmp.lt.s32.totalorder %v153, %v163
  %vm167 = vcmp.lt.s32.totalorder %v154, %v163
  %vm168 = vmand %vm158, %vm164
  %vm169 = vmand %vm159, %vm165
  %vm170 = vmand %vm160, %vm166
  %vm171 = vmand %vm161, %vm167
  %v172 = vsel %vm168, 1, 0
  %v173 = vsel %vm169, 1, 0
  %v174 = vsel %vm170, 1, 0
  %v175 = vsel %vm171, 1, 0
  %v176 = vcvt.s32.f32 %v172
  %v177 = vcvt.s32.f32 %v173
  %v178 = vcvt.s32.f32 %v174
  %v179 = vcvt.s32.f32 %v175
  %v180 = vmul.u32 %v151, 16
  %vm181 = vcmp.ge.s32.totalorder %v156, %v180
  %v182 = vadd.s32 %v151, 1
  %v183 = vmul.u32 %v182, 16
  %vm184 = vcmp.lt.s32.totalorder %v156, %v183
  %vm185 = vmand %vm181, %vm184
  %v186 = vsel %vm185, 1, 0
  %v187 = vcvt.s32.f32 %v186
  %vm188 = vcmask 261120
  %v190 = vsel %vm188, %v135, 0
  %v193 = vsel %vm188, %v137, 0
  %195 = vmatprep.subr.mxu0 0.0
  %196 = vmatpush1.msra.mxu0 %v176
  %197 = vmatprep.subr.mxu0 0.0
  %198 = vmatpush1.msra.mxu0 %v177
  %199 = vmatprep.subr.mxu0 0.0
  %200 = vmatpush1.msra.mxu0 %v178
  %201 = vmatprep.subr.mxu0 0.0
  %202 = vmatpush1.msra.mxu0 %v179
  %203 = vmatprep.subr.mxu0 0.0
  %204 = vmatpush1.msra.mxu0 0.0
  %205 = vmatprep.subr.mxu0 0.0
  %206 = vmatpush1.msra.mxu0 0.0
  %207 = vmatprep.subr.mxu0 0.0
  %208 = vmatpush1.msra.mxu0 0.0
  %209 = vmatprep.subr.mxu0 0.0
  %210 = vmatpush1.msra.mxu0 0.0
  %211 = vmatprep.subr.mxu0 0.0
  %212 = vmatpush1.msra.mxu0 0.0
  %213 = vmatprep.subr.mxu0 0.0
  %214 = vmatpush1.msra.mxu0 0.0
  %215 = vmatprep.subr.mxu0 0.0
  %216 = vmatpush1.msra.mxu0 0.0
  %217 = vmatprep.subr.mxu0 0.0
  %218 = vmatpush1.msra.mxu0 0.0
  %219 = vmatprep.subr.mxu0 0.0
  %220 = vmatpush1.msra.mxu0 0.0
  %221 = vmatprep.subr.mxu0 0.0
  %222 = vmatpush1.msra.mxu0 0.0
  %223 = vmatprep.subr.mxu0 0.0
  %224 = vmatpush1.msra.mxu0 0.0
  %225 = vmatprep.subr.mxu0 0.0
  %226 = vmatpush1.msra.mxu0 0.0
  %227 = vmatprep.subr.mxu0 0.0
  %228 = vmatpush1.msra.mxu0 0.0
  %229 = vmatprep.subr.mxu0 0.0
  %230 = vmatpush1.msra.mxu0 0.0
  %231 = vmatprep.subr.mxu0 0.0
  %232 = vmatpush1.msra.mxu0 0.0
  %233 = vmatprep.subr.mxu0 0.0
  %234 = vmatpush1.msra.mxu0 0.0
  %235 = vmatprep.subr.mxu0 0.0
  %236 = vmatpush1.msra.mxu0 0.0
  %237 = vmatprep.subr.mxu0 0.0
  %238 = vmatpush1.msra.mxu0 0.0
  %239 = vmatprep.subr.mxu0 0.0
  %240 = vmatpush1.msra.mxu0 0.0
  %241 = vmatprep.subr.mxu0 0.0
  %242 = vmatpush1.msra.mxu0 0.0
  %243 = vmatprep.subr.mxu0 0.0
  %244 = vmatpush1.msra.mxu0 0.0
  %245 = vmatprep.subr.mxu0 0.0
  %246 = vmatpush1.msra.mxu0 0.0
  %247 = vmatprep.subr.mxu0 0.0
  %248 = vmatpush1.msra.mxu0 0.0
  %249 = vmatprep.subr.mxu0 0.0
  %250 = vmatpush1.msra.mxu0 0.0
  %251 = vmatprep.subr.mxu0 0.0
  %252 = vmatpush1.msra.mxu0 0.0
  %253 = vmatprep.subr.mxu0 0.0
  %254 = vmatpush1.msra.mxu0 0.0
  %255 = vmatprep.subr.mxu0 0.0
  %256 = vmatpush1.msra.mxu0 0.0
  %257 = vmatprep.subr.mxu0 0.0
  %258 = vmatpush1.msra.mxu0 0.0
  %259 = vmatprep.mubr.f32.mxu0 0.0
  %260 = vmatmul.mubr.f32.gmra.mrb[0].mxu0 %v190
  %v261 = vpop.f32.mrb[0].mxu0
  %v262 = vadd.f32 0.0, %v261
  %v263 = vpop.f32.mrb[0].mxu0
  %264 = vmatprep.mubr.f32.mxu0 0.0
  %265 = vmatmul.mubr.f32.gmra.mrb[0].mxu0 %v193
  %v266 = vpop.f32.mrb[0].mxu0
  %v267 = vadd.f32 0.0, %v266
  %v268 = vpop.f32.mrb[0].mxu0
  %269 = vdwg.mxu0
  %vm270 = vcmask 15360
  %v272 = vsel %vm270, %v262, 0
  %v275 = vsel %vm270, %v267, 0
  %vm277 = vcmask 1041408
  %v279 = vsel %vm277, %v187, 0
  %281 = vmatprep.subr.mxu0 0.0
  %282 = vmatpush1.msra.mxu0 %v279
  %283 = vmatprep.subr.mxu0 0.0
  %284 = vmatpush1.msra.mxu0 0.0
  %285 = vmatprep.subr.mxu0 0.0
  %286 = vmatpush1.msra.mxu0 0.0
  %287 = vmatprep.subr.mxu0 0.0
  %288 = vmatpush1.msra.mxu0 0.0
  %289 = vmatprep.subr.mxu0 0.0
  %290 = vmatpush1.msra.mxu0 0.0
  %291 = vmatprep.subr.mxu0 0.0
  %292 = vmatpush1.msra.mxu0 0.0
  %293 = vmatprep.subr.mxu0 0.0
  %294 = vmatpush1.msra.mxu0 0.0
  %295 = vmatprep.subr.mxu0 0.0
  %296 = vmatpush1.msra.mxu0 0.0
  %297 = vmatprep.subr.mxu0 0.0
  %298 = vmatpush1.msra.mxu0 0.0
  %299 = vmatprep.subr.mxu0 0.0
  %300 = vmatpush1.msra.mxu0 0.0
  %301 = vmatprep.subr.mxu0 0.0
  %302 = vmatpush1.msra.mxu0 0.0
  %303 = vmatprep.subr.mxu0 0.0
  %304 = vmatpush1.msra.mxu0 0.0
  %305 = vmatprep.subr.mxu0 0.0
  %306 = vmatpush1.msra.mxu0 0.0
  %307 = vmatprep.subr.mxu0 0.0
  %308 = vmatpush1.msra.mxu0 0.0
  %309 = vmatprep.subr.mxu0 0.0
  %310 = vmatpush1.msra.mxu0 0.0
  %311 = vmatprep.subr.mxu0 0.0
  %312 = vmatpush1.msra.mxu0 0.0
  %313 = vmatprep.subr.mxu0 0.0
  %314 = vmatpush1.msra.mxu0 0.0
  %315 = vmatprep.subr.mxu0 0.0
  %316 = vmatpush1.msra.mxu0 0.0
  %317 = vmatprep.subr.mxu0 0.0
  %318 = vmatpush1.msra.mxu0 0.0
  %319 = vmatprep.subr.mxu0 0.0
  %320 = vmatpush1.msra.mxu0 0.0
  %321 = vmatprep.subr.mxu0 0.0
  %322 = vmatpush1.msra.mxu0 0.0
  %323 = vmatprep.subr.mxu0 0.0
  %324 = vmatpush1.msra.mxu0 0.0
  %325 = vmatprep.subr.mxu0 0.0
  %326 = vmatpush1.msra.mxu0 0.0
  %327 = vmatprep.subr.mxu0 0.0
  %328 = vmatpush1.msra.mxu0 0.0
  %329 = vmatprep.subr.mxu0 0.0
  %330 = vmatpush1.msra.mxu0 0.0
  %331 = vmatprep.subr.mxu0 0.0
  %332 = vmatpush1.msra.mxu0 0.0
  %333 = vmatprep.subr.mxu0 0.0
  %334 = vmatpush1.msra.mxu0 0.0
  %335 = vmatprep.subr.mxu0 0.0
  %336 = vmatpush1.msra.mxu0 0.0
  %337 = vmatprep.subr.mxu0 0.0
  %338 = vmatpush1.msra.mxu0 0.0
  %339 = vmatprep.subr.mxu0 0.0
  %340 = vmatpush1.msra.mxu0 0.0
  %341 = vmatprep.subr.mxu0 0.0
  %342 = vmatpush1.msra.mxu0 0.0
  %343 = vmatprep.subr.mxu0 0.0
  %344 = vmatpush1.msra.mxu0 0.0
  %345 = vmatprep.mubr.f32.mxu0 0.0
  %346 = vmatmul.mubr.f32.gmra.mrb[0].mxu0 %v272
  %v347 = vpop.f32.mrb[0].mxu0
  %v348 = vadd.f32 0.0, %v347
  %v349 = vpop.f32.mrb[0].mxu0
  %350 = vmatprep.mubr.f32.mxu0 0.0
  %351 = vmatmul.mubr.f32.gmra.mrb[0].mxu0 %v275
  %v352 = vpop.f32.mrb[0].mxu0
  %v353 = vadd.f32 0.0, %v352
  %v354 = vpop.f32.mrb[0].mxu0
  %355 = vdwg.mxu0
  %v356 = vrcp.pop %v348
  %v357 = vmul.f32 %v135, %v356
  %v358 = vrcp.pop %v353
  %v359 = vmul.f32 %v137, %v358
  %vm362 = vcmask 1045504
  %v363 = vrot.slane %v147, 2
  %v364 = vrot.slane %v149, 2
  %v365 = vsel %vm362, %v363, %v364
  %v368 = vmul.f32 %v357, %v365
  %v369 = vmul.f32 %v359, %v364
  %370 = vst.msk [vmem:[%s3] sm:$0xff] %vm188, %v368
  %vm371 = vcmask 254976
  %372 = vst.msk [vmem:[%s3 + $0x8] sm:$0x3] %vm371, %v369
  // Predicated region
  $region14: #{net_forward.8} parent=0 // pred_check
    _
  $region15: #{net_forward.8} parent=0 // pred_check_branch
    %374 = sbr.rel (0) target = $region17
  $region16: #{net_forward.8} parent=0 // pred_region
    _
  $region17: #{net_forward.8} parent=0 // pred_fallthru
    _
  // Predicated region
  $region18: #{net_forward.8} parent=0 // pred_check
    _
  $region19: #{net_forward.8} parent=0 // pred_check_branch
    %376 = sbr.rel (0) target = $region21
  $region20: #{net_forward.8} parent=0 // pred_region
    _
  $region21: #{net_forward.8} parent=0 // pred_fallthru
    _

// kernel: net_forward.6
$region0: #{net_forward.6}
  #allocation0 [shape = 'u32[]', space=smem, size = 0x4, offset = 0x4, fixed_abs, tag = 'smem constant byte address 0x4 - core index']
  #allocation1 [shape = 'u32[144,128]{1,0:T(1,128)}', space=vmem, size = 0x12000, scoped, tag = 'internal scratch']
  %s0 = inlined_call_operand.vmem [shape: f32[10,288], index: 0, kind: input, shape index: {}]
  %s1 = inlined_call_operand.vmem [shape: f32[20,10], index: 1, kind: input, shape index: {}]
  %s2 = inlined_call_operand.vmem [shape: f32[20,1], index: 2, kind: input, shape index: {}]
  %s3 = inlined_call_operand.vmem [shape: f32[10,288], index: 3, kind: output, shape index: {}]
  %s4 = sld [smem:[#allocation0]]
  $region22: #{net_forward.6} parent=0
    _
  %s6 = ssub.s32 1, %s4
  %s7 = scalar_select 0, %s6, %s4
  // Predicated region
  $region2: #{net_forward.6} parent=0 // pred_check
    _
  $region3: #{net_forward.6} parent=0 // pred_check_branch
    %9 = sbr.rel (0) target = $region5
  $region4: #{net_forward.6} parent=0 // pred_region
    _
  $region5: #{net_forward.6} parent=0 // pred_fallthru
    _
  // Predicated region
  $region6: #{net_forward.6} parent=0 // pred_check
    _
  $region7: #{net_forward.6} parent=0 // pred_check_branch
    %11 = sbr.rel (0) target = $region9
  $region8: #{net_forward.6} parent=0 // pred_region
    _
  $region9: #{net_forward.6} parent=0 // pred_fallthru
    _
  // Predicated region
  $region10: #{net_forward.6} parent=0 // pred_check
    _
  $region11: #{net_forward.6} parent=0 // pred_check_branch
    %13 = sbr.rel (0) target = $region13
  $region12: #{net_forward.6} parent=0 // pred_region
    _
  $region13: #{net_forward.6} parent=0 // pred_fallthru
    _
  %v14 = vld [vmem:[%s0] sm:$0xff]
  %v15 = vld [vmem:[%s0 + $0x8] sm:$0xff]
  %v16 = vld [vmem:[%s0 + $0x10] sm:$0xff]
  %v17 = vld [vmem:[%s0 + $0x18] sm:$0x3]
  %v18 = vld [vmem:[%s0 + $0x20] sm:$0x3]
  %v19 = vld [vmem:[%s0 + $0x28] sm:$0x3]
  %v20 = vld [vmem:[%s1] sm:$0xff]
  %v21 = vld [vmem:[%s1 + $0x8] sm:$0xff]
  %v22 = vld [vmem:[%s1 + $0x10] sm:$0xf]
  %v23 = vld [vmem:[%s2] sm:$0xff]
  %v24 = vld [vmem:[%s2 + $0x8] sm:$0xff]
  %v25 = vld [vmem:[%s2 + $0x10] sm:$0xf]
  %27 = vset.pattern.permute.xlu0 0
  %28 = vperm.xlu0 %27, %v23
  %v29 = vpop.permute.xlu0 %28
  %32 = vset.pattern.permute.xlu0 0
  %33 = vperm.xlu0 %32, %v24
  %v34 = vpop.permute.xlu0 %33
  %37 = vset.pattern.permute.xlu0 0
  %38 = vperm.xlu0 %37, %v25
  %v39 = vpop.permute.xlu0 %38
  %vm41 = vcmask 80896
  %v43 = vsel %vm41, %v20, 0
  %v46 = vsel %vm41, %v21, 0
  %v49 = vsel %vm41, %v22, 0
  %vm51 = vcmask 1041408
  %v53 = vsel %vm51, %v17, 0
  %v56 = vsel %vm51, %v18, 0
  %v59 = vsel %vm51, %v19, 0
  %61 = vmatprep.subr.mxu0 %v15
  %62 = vmatpush1.msra.mxu0 %v14
  %63 = vmatprep.subr.mxu0 %v56
  %64 = vmatpush1.msra.mxu0 %v53
  %65 = vmatprep.subr.mxu0 0.0
  %66 = vmatpush1.msra.mxu0 0.0
  %67 = vmatprep.subr.mxu0 0.0
  %68 = vmatpush1.msra.mxu0 0.0
  %69 = vmatprep.subr.mxu0 0.0
  %70 = vmatpush1.msra.mxu0 0.0
  %71 = vmatprep.subr.mxu0 0.0
  %72 = vmatpush1.msra.mxu0 0.0
  %73 = vmatprep.subr.mxu0 0.0
  %74 = vmatpush1.msra.mxu0 0.0
  %75 = vmatprep.subr.mxu0 0.0
  %76 = vmatpush1.msra.mxu0 0.0
  %77 = vmatprep.subr.mxu0 0.0
  %78 = vmatpush1.msra.mxu0 0.0
  %79 = vmatprep.subr.mxu0 0.0
  %80 = vmatpush1.msra.mxu0 0.0
  %81 = vmatprep.subr.mxu0 0.0
  %82 = vmatpush1.msra.mxu0 0.0
  %83 = vmatprep.subr.mxu0 0.0
  %84 = vmatpush1.msra.mxu0 0.0
  %85 = vmatprep.subr.mxu0 0.0
  %86 = vmatpush1.msra.mxu0 0.0
  %87 = vmatprep.subr.mxu0 0.0
  %88 = vmatpush1.msra.mxu0 0.0
  %89 = vmatprep.subr.mxu0 0.0
  %90 = vmatpush1.msra.mxu0 0.0
  %91 = vmatprep.subr.mxu0 0.0
  %92 = vmatpush1.msra.mxu0 0.0
  %93 = vmatprep.subr.mxu0 0.0
  %94 = vmatpush1.msra.mxu0 0.0
  %95 = vmatprep.subr.mxu0 0.0
  %96 = vmatpush1.msra.mxu0 0.0
  %97 = vmatprep.subr.mxu0 0.0
  %98 = vmatpush1.msra.mxu0 0.0
  %99 = vmatprep.subr.mxu0 0.0
  %100 = vmatpush1.msra.mxu0 0.0
  %101 = vmatprep.subr.mxu0 0.0
  %102 = vmatpush1.msra.mxu0 0.0
  %103 = vmatprep.subr.mxu0 0.0
  %104 = vmatpush1.msra.mxu0 0.0
  %105 = vmatprep.subr.mxu0 0.0
  %106 = vmatpush1.msra.mxu0 0.0
  %107 = vmatprep.subr.mxu0 0.0
  %108 = vmatpush1.msra.mxu0 0.0
  %109 = vmatprep.subr.mxu0 0.0
  %110 = vmatpush1.msra.mxu0 0.0
  %111 = vmatprep.subr.mxu0 0.0
  %112 = vmatpush1.msra.mxu0 0.0
  %113 = vmatprep.subr.mxu0 0.0
  %114 = vmatpush1.msra.mxu0 0.0
  %115 = vmatprep.subr.mxu0 0.0
  %116 = vmatpush1.msra.mxu0 0.0
  %117 = vmatprep.subr.mxu0 0.0
  %118 = vmatpush1.msra.mxu0 0.0
  %119 = vmatprep.subr.mxu0 0.0
  %120 = vmatpush1.msra.mxu0 0.0
  %121 = vmatprep.subr.mxu0 0.0
  %122 = vmatpush1.msra.mxu0 0.0
  %123 = vmatprep.subr.mxu0 0.0
  %124 = vmatpush1.msra.mxu0 0.0
  %125 = vmatprep.mubr.f32.mxu0 0.0
  %126 = vmatmul.mubr.f32.gmra.mrb[0].mxu0 %v43
  %v127 = vpop.f32.mrb[0].mxu0
  %v128 = vadd.f32 %v29, %v127
  %v129 = vpop.f32.mrb[0].mxu0
  %v130 = vadd.f32 %v29, %v129
  %131 = vmatprep.mubr.f32.mxu0 0.0
  %132 = vmatmul.mubr.f32.gmra.mrb[0].mxu0 %v46
  %v133 = vpop.f32.mrb[0].mxu0
  %v134 = vadd.f32 %v34, %v133
  %v135 = vpop.f32.mrb[0].mxu0
  %v136 = vadd.f32 %v34, %v135
  %137 = vmatprep.mubr.f32.mxu0 0.0
  %138 = vmatmul.mubr.f32.gmra.mrb[0].mxu0 %v49
  %v139 = vpop.f32.mrb[0].mxu0
  %v140 = vadd.f32 %v39, %v139
  %v141 = vpop.f32.mrb[0].mxu0
  %v142 = vadd.f32 %v39, %v141
  %143 = vdwg.mxu0
  %144 = vmatprep.subr.mxu0 0.0
  %145 = vmatpush1.msra.mxu0 %v16
  %146 = vmatprep.subr.mxu0 0.0
  %147 = vmatpush1.msra.mxu0 %v59
  %148 = vmatprep.subr.mxu0 0.0
  %149 = vmatpush1.msra.mxu0 0.0
  %150 = vmatprep.subr.mxu0 0.0
  %151 = vmatpush1.msra.mxu0 0.0
  %152 = vmatprep.subr.mxu0 0.0
  %153 = vmatpush1.msra.mxu0 0.0
  %154 = vmatprep.subr.mxu0 0.0
  %155 = vmatpush1.msra.mxu0 0.0
  %156 = vmatprep.subr.mxu0 0.0
  %157 = vmatpush1.msra.mxu0 0.0
  %158 = vmatprep.subr.mxu0 0.0
  %159 = vmatpush1.msra.mxu0 0.0
  %160 = vmatprep.subr.mxu0 0.0
  %161 = vmatpush1.msra.mxu0 0.0
  %162 = vmatprep.subr.mxu0 0.0
  %163 = vmatpush1.msra.mxu0 0.0
  %164 = vmatprep.subr.mxu0 0.0
  %165 = vmatpush1.msra.mxu0 0.0
  %166 = vmatprep.subr.mxu0 0.0
  %167 = vmatpush1.msra.mxu0 0.0
  %168 = vmatprep.subr.mxu0 0.0
  %169 = vmatpush1.msra.mxu0 0.0
  %170 = vmatprep.subr.mxu0 0.0
  %171 = vmatpush1.msra.mxu0 0.0
  %172 = vmatprep.subr.mxu0 0.0
  %173 = vmatpush1.msra.mxu0 0.0
  %174 = vmatprep.subr.mxu0 0.0
  %175 = vmatpush1.msra.mxu0 0.0
  %176 = vmatprep.subr.mxu0 0.0
  %177 = vmatpush1.msra.mxu0 0.0
  %178 = vmatprep.subr.mxu0 0.0
  %179 = vmatpush1.msra.mxu0 0.0
  %180 = vmatprep.subr.mxu0 0.0
  %181 = vmatpush1.msra.mxu0 0.0
  %182 = vmatprep.subr.mxu0 0.0
  %183 = vmatpush1.msra.mxu0 0.0
  %184 = vmatprep.subr.mxu0 0.0
  %185 = vmatpush1.msra.mxu0 0.0
  %186 = vmatprep.subr.mxu0 0.0
  %187 = vmatpush1.msra.mxu0 0.0
  %188 = vmatprep.subr.mxu0 0.0
  %189 = vmatpush1.msra.mxu0 0.0
  %190 = vmatprep.subr.mxu0 0.0
  %191 = vmatpush1.msra.mxu0 0.0
  %192 = vmatprep.subr.mxu0 0.0
  %193 = vmatpush1.msra.mxu0 0.0
  %194 = vmatprep.subr.mxu0 0.0
  %195 = vmatpush1.msra.mxu0 0.0
  %196 = vmatprep.subr.mxu0 0.0
  %197 = vmatpush1.msra.mxu0 0.0
  %198 = vmatprep.subr.mxu0 0.0
  %199 = vmatpush1.msra.mxu0 0.0
  %200 = vmatprep.subr.mxu0 0.0
  %201 = vmatpush1.msra.mxu0 0.0
  %202 = vmatprep.subr.mxu0 0.0
  %203 = vmatpush1.msra.mxu0 0.0
  %204 = vmatprep.subr.mxu0 0.0
  %205 = vmatpush1.msra.mxu0 0.0
  %206 = vmatprep.subr.mxu0 0.0
  %207 = vmatpush1.msra.mxu0 0.0
  %208 = vmatprep.mubr.f32.mxu0 0.0
  %209 = vmatmul.mubr.f32.gmra.mrb[0].mxu0 %v43
  %v210 = vpop.f32.mrb[0].mxu0
  %v211 = vadd.f32 %v29, %v210
  %v212 = vpop.f32.mrb[0].mxu0
  %213 = vmatprep.mubr.f32.mxu0 0.0
  %214 = vmatmul.mubr.f32.gmra.mrb[0].mxu0 %v46
  %v215 = vpop.f32.mrb[0].mxu0
  %v216 = vadd.f32 %v34, %v215
  %v217 = vpop.f32.mrb[0].mxu0
  %218 = vmatprep.mubr.f32.mxu0 0.0
  %219 = vmatmul.mubr.f32.gmra.mrb[0].mxu0 %v49
  %v220 = vpop.f32.mrb[0].mxu0
  %v221 = vadd.f32 %v39, %v220
  %v222 = vpop.f32.mrb[0].mxu0
  %223 = vdwg.mxu0
  %v224 = vmax.f32 %v128, 0.0
  %v225 = vmax.f32 %v130, 0.0
  %v226 = vmax.f32 %v211, 0.0
  %v227 = vmax.f32 %v134, 0.0
  %v228 = vmax.f32 %v136, 0.0
  %v229 = vmax.f32 %v216, 0.0
  %v230 = vmul.f32 %v224, 1.442695
  %v231 = vpow.pop %v230
  %v232 = vmul.f32 %v225, 1.442695
  %v233 = vpow.pop %v232
  %v234 = vmul.f32 %v226, 1.442695
  %v235 = vpow.pop %v234
  %v236 = vmul.f32 %v227, 1.442695
  %v237 = vpow.pop %v236
  %v238 = vmul.f32 %v228, 1.442695
  %v239 = vpow.pop %v238
  %v240 = vmul.f32 %v229, 1.442695
  %v241 = vpow.pop %v240
  %v242 = vxor.u32 %v134, 2147483648
  %v243 = vxor.u32 %v136, 2147483648
  %v244 = vxor.u32 %v216, 2147483648
  %v245 = vxor.u32 %v140, 2147483648
  %v246 = vxor.u32 %v142, 2147483648
  %v247 = vxor.u32 %v221, 2147483648
  %v248 = vmul.f32 %v242, 1.442695
  %v249 = vpow.pop %v248
  %v250 = vmul.f32 %v243, 1.442695
  %v251 = vpow.pop %v250
  %v252 = vmul.f32 %v244, 1.442695
  %v253 = vpow.pop %v252
  %v254 = vmul.f32 %v245, 1.442695
  %v255 = vpow.pop %v254
  %v256 = vmul.f32 %v246, 1.442695
  %v257 = vpow.pop %v256
  %v258 = vmul.f32 %v247, 1.442695
  %v259 = vpow.pop %v258
  %v260 = vadd.f32 %v249, 1.0
  %v261 = vadd.f32 %v251, 1.0
  %v262 = vadd.f32 %v253, 1.0
  %v263 = vadd.f32 %v255, 1.0
  %v264 = vadd.f32 %v257, 1.0
  %v265 = vadd.f32 %v259, 1.0
  %v266 = vrcp.pop %v260
  %v267 = vmul.f32 1.0, %v266
  %v268 = vrcp.pop %v261
  %v269 = vmul.f32 1.0, %v268
  %v270 = vrcp.pop %v262
  %v271 = vmul.f32 1.0, %v270
  %v272 = vrcp.pop %v263
  %v273 = vmul.f32 1.0, %v272
  %v274 = vrcp.pop %v264
  %v275 = vmul.f32 1.0, %v274
  %v276 = vrcp.pop %v265
  %v277 = vmul.f32 1.0, %v276
  %v278 = vlaneseq
  %v279 = vshrl.u32 %v278, 7
  %v280 = vadd.s32 %v279, 8
  %v281 = vadd.s32 %v279, 16
  %v282 = vadd.s32 %v279, 24
  %v283 = vadd.s32 %v279, 32
  %v284 = vadd.s32 %v279, 40
  %v285 = vadd.s32 %v279, 48
  %v286 = vadd.s32 %v279, 56
  %v287 = vadd.s32 %v279, 64
  %v288 = vadd.s32 %v279, 72
  %v289 = vadd.s32 %v279, 80
  %v290 = vadd.s32 %v279, 88
  %v291 = vadd.s32 %v279, 96
  %v292 = vadd.s32 %v279, 104
  %v293 = vadd.s32 %v279, 112
  %v294 = vadd.s32 %v279, 120
  %v295 = vadd.s32 %v279, 128
  %v296 = vadd.s32 %v279, 136
  %v297 = vadd.s32 %v279, 144
  %v298 = vadd.s32 %v279, 152
  %v299 = vadd.s32 %v279, 160
  %v300 = vadd.s32 %v279, 168
  %v301 = vadd.s32 %v279, 176
  %v302 = vadd.s32 %v279, 184
  %v303 = vadd.s32 %v279, 192
  %v304 = vadd.s32 %v279, 200
  %v305 = vadd.s32 %v279, 208
  %v306 = vadd.s32 %v279, 216
  %v307 = vadd.s32 %v279, 224
  %v308 = vadd.s32 %v279, 232
  %v309 = vadd.s32 %v279, 240
  %v310 = vadd.s32 %v279, 248
  %v311 = vadd.s32 %v279, 256
  %v312 = vadd.s32 %v279, 264
  %v313 = vadd.s32 %v279, 272
  %v314 = vadd.s32 %v279, 280
  %v315 = vlaneseq
  %v316 = vand.u32 %v315, 127
  %v317 = vmul.u32 %v316, 144
  %vm318 = vcmp.ge.s32.totalorder %v279, %v317
  %vm319 = vcmp.ge.s32.totalorder %v280, %v317
  %vm320 = vcmp.ge.s32.totalorder %v281, %v317
  %vm321 = vcmp.ge.s32.totalorder %v282, %v317
  %vm322 = vcmp.ge.s32.totalorder %v283, %v317
  %vm323 = vcmp.ge.s32.totalorder %v284, %v317
  %vm324 = vcmp.ge.s32.totalorder %v285, %v317
  %vm325 = vcmp.ge.s32.totalorder %v286, %v317
  %vm326 = vcmp.ge.s32.totalorder %v287, %v317
  %vm327 = vcmp.ge.s32.totalorder %v288, %v317
  %vm328 = vcmp.ge.s32.totalorder %v289, %v317
  %vm329 = vcmp.ge.s32.totalorder %v290, %v317
  %vm330 = vcmp.ge.s32.totalorder %v291, %v317
  %vm331 = vcmp.ge.s32.totalorder %v292, %v317
  %vm332 = vcmp.ge.s32.totalorder %v293, %v317
  %vm333 = vcmp.ge.s32.totalorder %v294, %v317
  %vm334 = vcmp.ge.s32.totalorder %v295, %v317
  %vm335 = vcmp.ge.s32.totalorder %v296, %v317
  %vm336 = vcmp.ge.s32.totalorder %v297, %v317
  %vm337 = vcmp.ge.s32.totalorder %v298, %v317
  %vm338 = vcmp.ge.s32.totalorder %v299, %v317
  %vm339 = vcmp.ge.s32.totalorder %v300, %v317
  %vm340 = vcmp.ge.s32.totalorder %v301, %v317
  %vm341 = vcmp.ge.s32.totalorder %v302, %v317
  %vm342 = vcmp.ge.s32.totalorder %v303, %v317
  %vm343 = vcmp.ge.s32.totalorder %v304, %v317
  %vm344 = vcmp.ge.s32.totalorder %v305, %v317
  %vm345 = vcmp.ge.s32.totalorder %v306, %v317
  %vm346 = vcmp.ge.s32.totalorder %v307, %v317
  %vm347 = vcmp.ge.s32.totalorder %v308, %v317
  %vm348 = vcmp.ge.s32.totalorder %v309, %v317
  %vm349 = vcmp.ge.s32.totalorder %v310, %v317
  %vm350 = vcmp.ge.s32.totalorder %v311, %v317
  %vm351 = vcmp.ge.s32.totalorder %v312, %v317
  %vm352 = vcmp.ge.s32.totalorder %v313, %v317
  %vm353 = vcmp.ge.s32.totalorder %v314, %v317
  %v354 = vadd.s32 %v316, 1
  %v355 = vmul.u32 %v354, 144
  %vm356 = vcmp.lt.s32.totalorder %v279, %v355
  %vm357 = vcmp.lt.s32.totalorder %v280, %v355
  %vm358 = vcmp.lt.s32.totalorder %v281, %v355
  %vm359 = vcmp.lt.s32.totalorder %v282, %v355
  %vm360 = vcmp.lt.s32.totalorder %v283, %v355
  %vm361 = vcmp.lt.s32.totalorder %v284, %v355
  %vm362 = vcmp.lt.s32.totalorder %v285, %v355
  %vm363 = vcmp.lt.s32.totalorder %v286, %v355
  %vm364 = vcmp.lt.s32.totalorder %v287, %v355
  %vm365 = vcmp.lt.s32.totalorder %v288, %v355
  %vm366 = vcmp.lt.s32.totalorder %v289, %v355
  %vm367 = vcmp.lt.s32.totalorder %v290, %v355
  %vm368 = vcmp.lt.s32.totalorder %v291, %v355
  %vm369 = vcmp.lt.s32.totalorder %v292, %v355
  %vm370 = vcmp.lt.s32.totalorder %v293, %v355
  %vm371 = vcmp.lt.s32.totalorder %v294, %v355
  %vm372 = vcmp.lt.s32.totalorder %v295, %v355
  %vm373 = vcmp.lt.s32.totalorder %v296, %v355
  %vm374 = vcmp.lt.s32.totalorder %v297, %v355
  %vm375 = vcmp.lt.s32.totalorder %v298, %v355
  %vm376 = vcmp.lt.s32.totalorder %v299, %v355
  %vm377 = vcmp.lt.s32.totalorder %v300, %v355
  %vm378 = vcmp.lt.s32.totalorder %v301, %v355
  %vm379 = vcmp.lt.s32.totalorder %v302, %v355
  %vm380 = vcmp.lt.s32.totalorder %v303, %v355
  %vm381 = vcmp.lt.s32.totalorder %v304, %v355
  %vm382 = vcmp.lt.s32.totalorder %v305, %v355
  %vm383 = vcmp.lt.s32.totalorder %v306, %v355
  %vm384 = vcmp.lt.s32.totalorder %v307, %v355
  %vm385 = vcmp.lt.s32.totalorder %v308, %v355
  %vm386 = vcmp.lt.s32.totalorder %v309, %v355
  %vm387 = vcmp.lt.s32.totalorder %v310, %v355
  %vm388 = vcmp.lt.s32.totalorder %v311, %v355
  %vm389 = vcmp.lt.s32.totalorder %v312, %v355
  %vm390 = vcmp.lt.s32.totalorder %v313, %v355
  %vm391 = vcmp.lt.s32.totalorder %v314, %v355
  %vm392 = vmand %vm318, %vm356
  %vm393 = vmand %vm319, %vm357
  %vm394 = vmand %vm320, %vm358
  %vm395 = vmand %vm321, %vm359
  %vm396 = vmand %vm322, %vm360
  %vm397 = vmand %vm323, %vm361
  %vm398 = vmand %vm324, %vm362
  %vm399 = vmand %vm325, %vm363
  %vm400 = vmand %vm326, %vm364
  %vm401 = vmand %vm327, %vm365
  %vm402 = vmand %vm328, %vm366
  %vm403 = vmand %vm329, %vm367
  %vm404 = vmand %vm330, %vm368
  %vm405 = vmand %vm331, %vm369
  %vm406 = vmand %vm332, %vm370
  %vm407 = vmand %vm333, %vm371
  %vm408 = vmand %vm334, %vm372
  %vm409 = vmand %vm335, %vm373
  %vm410 = vmand %vm336, %vm374
  %vm411 = vmand %vm337, %vm375
  %vm412 = vmand %vm338, %vm376
  %vm413 = vmand %vm339, %vm377
  %vm414 = vmand %vm340, %vm378
  %vm415 = vmand %vm341, %vm379
  %vm416 = vmand %vm342, %vm380
  %vm417 = vmand %vm343, %vm381
  %vm418 = vmand %vm344, %vm382
  %vm419 = vmand %vm345, %vm383
  %vm420 = vmand %vm346, %vm384
  %vm421 = vmand %vm347, %vm385
  %vm422 = vmand %vm348, %vm386
  %vm423 = vmand %vm349, %vm387
  %vm424 = vmand %vm350, %vm388
  %vm425 = vmand %vm351, %vm389
  %vm426 = vmand %vm352, %vm390
  %vm427 = vmand %vm353, %vm391
  %v428 = vsel %vm392, 1, 0
  %v429 = vsel %vm393, 1, 0
  %v430 = vsel %vm394, 1, 0
  %v431 = vsel %vm395, 1, 0
  %v432 = vsel %vm396, 1, 0
  %v433 = vsel %vm397, 1, 0
  %v434 = vsel %vm398, 1, 0
  %v435 = vsel %vm399, 1, 0
  %v436 = vsel %vm400, 1, 0
  %v437 = vsel %vm401, 1, 0
  %v438 = vsel %vm402, 1, 0
  %v439 = vsel %vm403, 1, 0
  %v440 = vsel %vm404, 1, 0
  %v441 = vsel %vm405, 1, 0
  %v442 = vsel %vm406, 1, 0
  %v443 = vsel %vm407, 1, 0
  %v444 = vsel %vm408, 1, 0
  %v445 = vsel %vm409, 1, 0
  %v446 = vsel %vm410, 1, 0
  %v447 = vsel %vm411, 1, 0
  %v448 = vsel %vm412, 1, 0
  %v449 = vsel %vm413, 1, 0
  %v450 = vsel %vm414, 1, 0
  %v451 = vsel %vm415, 1, 0
  %v452 = vsel %vm416, 1, 0
  %v453 = vsel %vm417, 1, 0
  %v454 = vsel %vm418, 1, 0
  %v455 = vsel %vm419, 1, 0
  %v456 = vsel %vm420, 1, 0
  %v457 = vsel %vm421, 1, 0
  %v458 = vsel %vm422, 1, 0
  %v459 = vsel %vm423, 1, 0
  %v460 = vsel %vm424, 1, 0
  %v461 = vsel %vm425, 1, 0
  %v462 = vsel %vm426, 1, 0
  %v463 = vsel %vm427, 1, 0
  %v464 = vcvt.s32.f32 %v428
  %v465 = vcvt.s32.f32 %v429
  %v466 = vcvt.s32.f32 %v430
  %v467 = vcvt.s32.f32 %v431
  %v468 = vcvt.s32.f32 %v432
  %v469 = vcvt.s32.f32 %v433
  %v470 = vcvt.s32.f32 %v434
  %v471 = vcvt.s32.f32 %v435
  %v472 = vcvt.s32.f32 %v436
  %v473 = vcvt.s32.f32 %v437
  %v474 = vcvt.s32.f32 %v438
  %v475 = vcvt.s32.f32 %v439
  %v476 = vcvt.s32.f32 %v440
  %v477 = vcvt.s32.f32 %v441
  %v478 = vcvt.s32.f32 %v442
  %v479 = vcvt.s32.f32 %v443
  %v480 = vcvt.s32.f32 %v444
  %v481 = vcvt.s32.f32 %v445
  %v482 = vcvt.s32.f32 %v446
  %v483 = vcvt.s32.f32 %v447
  %v484 = vcvt.s32.f32 %v448
  %v485 = vcvt.s32.f32 %v449
  %v486 = vcvt.s32.f32 %v450
  %v487 = vcvt.s32.f32 %v451
  %v488 = vcvt.s32.f32 %v452
  %v489 = vcvt.s32.f32 %v453
  %v490 = vcvt.s32.f32 %v454
  %v491 = vcvt.s32.f32 %v455
  %v492 = vcvt.s32.f32 %v456
  %v493 = vcvt.s32.f32 %v457
  %v494 = vcvt.s32.f32 %v458
  %v495 = vcvt.s32.f32 %v459
  %v496 = vcvt.s32.f32 %v460
  %v497 = vcvt.s32.f32 %v461
  %v498 = vcvt.s32.f32 %v462
  %v499 = vcvt.s32.f32 %v463
  %v500 = vadd.s32 %v316, 128
  %v501 = vadd.s32 %v316, 256
  %v502 = vmul.u32 %v279, 144
  %vm503 = vcmp.ge.s32.totalorder %v316, %v502
  %vm504 = vcmp.ge.s32.totalorder %v500, %v502
  %vm505 = vcmp.ge.s32.totalorder %v501, %v502
  %v506 = vadd.s32 %v279, 1
  %v507 = vmul.u32 %v506, 144
  %vm508 = vcmp.lt.s32.totalorder %v316, %v507
  %vm509 = vcmp.lt.s32.totalorder %v500, %v507
  %vm510 = vcmp.lt.s32.totalorder %v501, %v507
  %vm511 = vmand %vm503, %vm508
  %vm512 = vmand %vm504, %vm509
  %vm513 = vmand %vm505, %vm510
  %v514 = vsel %vm511, 1, 0
  %v515 = vsel %vm512, 1, 0
  %v516 = vsel %vm513, 1, 0
  %v517 = vcvt.s32.f32 %v514
  %v518 = vcvt.s32.f32 %v515
  %v519 = vcvt.s32.f32 %v516
  %vm520 = vcmask 261120
  %v522 = vsel %vm520, %v235, 0
  %v525 = vsel %vm520, %v241, 0
  %527 = vmatprep.subr.mxu0 0.0
  %528 = vmatpush1.msra.mxu0 %v464
  %529 = vmatprep.subr.mxu0 0.0
  %530 = vmatpush1.msra.mxu0 %v465
  %531 = vmatprep.subr.mxu0 0.0
  %532 = vmatpush1.msra.mxu0 %v466
  %533 = vmatprep.subr.mxu0 0.0
  %534 = vmatpush1.msra.mxu0 %v467
  %535 = vmatprep.subr.mxu0 0.0
  %536 = vmatpush1.msra.mxu0 %v468
  %537 = vmatprep.subr.mxu0 0.0
  %538 = vmatpush1.msra.mxu0 %v469
  %539 = vmatprep.subr.mxu0 0.0
  %540 = vmatpush1.msra.mxu0 %v470
  %541 = vmatprep.subr.mxu0 0.0
  %542 = vmatpush1.msra.mxu0 %v471
  %543 = vmatprep.subr.mxu0 0.0
  %544 = vmatpush1.msra.mxu0 %v472
  %545 = vmatprep.subr.mxu0 0.0
  %546 = vmatpush1.msra.mxu0 %v473
  %547 = vmatprep.subr.mxu0 0.0
  %548 = vmatpush1.msra.mxu0 %v474
  %549 = vmatprep.subr.mxu0 0.0
  %550 = vmatpush1.msra.mxu0 %v475
  %551 = vmatprep.subr.mxu0 0.0
  %552 = vmatpush1.msra.mxu0 %v476
  %553 = vmatprep.subr.mxu0 0.0
  %554 = vmatpush1.msra.mxu0 %v477
  %555 = vmatprep.subr.mxu0 0.0
  %556 = vmatpush1.msra.mxu0 %v478
  %557 = vmatprep.subr.mxu0 0.0
  %558 = vmatpush1.msra.mxu0 %v479
  %559 = vmatprep.subr.mxu0 0.0
  %560 = vmatpush1.msra.mxu0 %v480
  %561 = vmatprep.subr.mxu0 0.0
  %562 = vmatpush1.msra.mxu0 %v481
  %563 = vmatprep.subr.mxu0 0.0
  %564 = vmatpush1.msra.mxu0 %v482
  %565 = vmatprep.subr.mxu0 0.0
  %566 = vmatpush1.msra.mxu0 %v483
  %567 = vmatprep.subr.mxu0 0.0
  %568 = vmatpush1.msra.mxu0 %v484
  %569 = vmatprep.subr.mxu0 0.0
  %570 = vmatpush1.msra.mxu0 %v485
  %571 = vmatprep.subr.mxu0 0.0
  %572 = vmatpush1.msra.mxu0 %v486
  %573 = vmatprep.subr.mxu0 0.0
  %574 = vmatpush1.msra.mxu0 %v487
  %575 = vmatprep.subr.mxu0 0.0
  %576 = vmatpush1.msra.mxu0 %v488
  %577 = vmatprep.subr.mxu0 0.0
  %578 = vmatpush1.msra.mxu0 %v489
  %579 = vmatprep.subr.mxu0 0.0
  %580 = vmatpush1.msra.mxu0 %v490
  %581 = vmatprep.subr.mxu0 0.0
  %582 = vmatpush1.msra.mxu0 %v491
  %583 = vmatprep.subr.mxu0 0.0
  %584 = vmatpush1.msra.mxu0 %v492
  %585 = vmatprep.subr.mxu0 0.0
  %586 = vmatpush1.msra.mxu0 %v493
  %587 = vmatprep.subr.mxu0 0.0
  %588 = vmatpush1.msra.mxu0 %v494
  %589 = vmatprep.subr.mxu0 0.0
  %590 = vmatpush1.msra.mxu0 %v495
  %591 = vmatprep.mubr.f32.mxu0 %v233
  %592 = vmatmul.mubr.f32.gmra.mrb[0].mxu0 %v231
  %v593 = vpop.f32.mrb[0].mxu0
  %v594 = vadd.f32 0.0, %v593
  %v595 = vpop.f32.mrb[0].mxu0
  %596 = vmatprep.mubr.f32.mxu0 %v239
  %597 = vmatmul.mubr.f32.gmra.mrb[0].mxu0 %v237
  %v598 = vpop.f32.mrb[0].mxu0
  %v599 = vadd.f32 0.0, %v598
  %v600 = vpop.f32.mrb[0].mxu0
  %601 = vdwg.mxu0
  %602 = vmatprep.subr.mxu0 0.0
  %603 = vmatpush1.msra.mxu0 %v496
  %604 = vmatprep.subr.mxu0 0.0
  %605 = vmatpush1.msra.mxu0 %v497
  %606 = vmatprep.subr.mxu0 0.0
  %607 = vmatpush1.msra.mxu0 %v498
  %608 = vmatprep.subr.mxu0 0.0
  %609 = vmatpush1.msra.mxu0 %v499
  %610 = vmatprep.subr.mxu0 0.0
  %611 = vmatpush1.msra.mxu0 0.0
  %612 = vmatprep.subr.mxu0 0.0
  %613 = vmatpush1.msra.mxu0 0.0
  %614 = vmatprep.subr.mxu0 0.0
  %615 = vmatpush1.msra.mxu0 0.0
  %616 = vmatprep.subr.mxu0 0.0
  %617 = vmatpush1.msra.mxu0 0.0
  %618 = vmatprep.subr.mxu0 0.0
  %619 = vmatpush1.msra.mxu0 0.0
  %620 = vmatprep.subr.mxu0 0.0
  %621 = vmatpush1.msra.mxu0 0.0
  %622 = vmatprep.subr.mxu0 0.0
  %623 = vmatpush1.msra.mxu0 0.0
  %624 = vmatprep.subr.mxu0 0.0
  %625 = vmatpush1.msra.mxu0 0.0
  %626 = vmatprep.subr.mxu0 0.0
  %627 = vmatpush1.msra.mxu0 0.0
  %628 = vmatprep.subr.mxu0 0.0
  %629 = vmatpush1.msra.mxu0 0.0
  %630 = vmatprep.subr.mxu0 0.0
  %631 = vmatpush1.msra.mxu0 0.0
  %632 = vmatprep.subr.mxu0 0.0
  %633 = vmatpush1.msra.mxu0 0.0
  %634 = vmatprep.subr.mxu0 0.0
  %635 = vmatpush1.msra.mxu0 0.0
  %636 = vmatprep.subr.mxu0 0.0
  %637 = vmatpush1.msra.mxu0 0.0
  %638 = vmatprep.subr.mxu0 0.0
  %639 = vmatpush1.msra.mxu0 0.0
  %640 = vmatprep.subr.mxu0 0.0
  %641 = vmatpush1.msra.mxu0 0.0
  %642 = vmatprep.subr.mxu0 0.0
  %643 = vmatpush1.msra.mxu0 0.0
  %644 = vmatprep.subr.mxu0 0.0
  %645 = vmatpush1.msra.mxu0 0.0
  %646 = vmatprep.subr.mxu0 0.0
  %647 = vmatpush1.msra.mxu0 0.0
  %648 = vmatprep.subr.mxu0 0.0
  %649 = vmatpush1.msra.mxu0 0.0
  %650 = vmatprep.subr.mxu0 0.0
  %651 = vmatpush1.msra.mxu0 0.0
  %652 = vmatprep.subr.mxu0 0.0
  %653 = vmatpush1.msra.mxu0 0.0
  %654 = vmatprep.subr.mxu0 0.0
  %655 = vmatpush1.msra.mxu0 0.0
  %656 = vmatprep.subr.mxu0 0.0
  %657 = vmatpush1.msra.mxu0 0.0
  %658 = vmatprep.subr.mxu0 0.0
  %659 = vmatpush1.msra.mxu0 0.0
  %660 = vmatprep.subr.mxu0 0.0
  %661 = vmatpush1.msra.mxu0 0.0
  %662 = vmatprep.subr.mxu0 0.0
  %663 = vmatpush1.msra.mxu0 0.0
  %664 = vmatprep.subr.mxu0 0.0
  %665 = vmatpush1.msra.mxu0 0.0
  %666 = vmatprep.mubr.f32.mxu0 0.0
  %667 = vmatmul.mubr.f32.gmra.mrb[0].mxu0 %v522
  %v668 = vpop.f32.mrb[0].mxu0
  %v669 = vadd.f32 %v594, %v668
  %v670 = vpop.f32.mrb[0].mxu0
  %671 = vmatprep.mubr.f32.mxu0 0.0
  %672 = vmatmul.mubr.f32.gmra.mrb[0].mxu0 %v525
  %v673 = vpop.f32.mrb[0].mxu0
  %v674 = vadd.f32 %v599, %v673
  %v675 = vpop.f32.mrb[0].mxu0
  %676 = vdwg.mxu0
  %vm677 = vcmask 15360
  %v679 = vsel %vm677, %v669, 0
  %v682 = vsel %vm677, %v674, 0
  %v685 = vsel %vm51, %v517, 0
  %v688 = vsel %vm51, %v518, 0
  %v691 = vsel %vm51, %v519, 0
  %693 = vmatprep.subr.mxu0 %v688
  %694 = vmatpush1.msra.mxu0 %v685
  %695 = vmatprep.subr.mxu0 0.0
  %696 = vmatpush1.msra.mxu0 0.0
  %697 = vmatprep.subr.mxu0 0.0
  %698 = vmatpush1.msra.mxu0 0.0
  %699 = vmatprep.subr.mxu0 0.0
  %700 = vmatpush1.msra.mxu0 0.0
  %701 = vmatprep.subr.mxu0 0.0
  %702 = vmatpush1.msra.mxu0 0.0
  %703 = vmatprep.subr.mxu0 0.0
  %704 = vmatpush1.msra.mxu0 0.0
  %705 = vmatprep.subr.mxu0 0.0
  %706 = vmatpush1.msra.mxu0 0.0
  %707 = vmatprep.subr.mxu0 0.0
  %708 = vmatpush1.msra.mxu0 0.0
  %709 = vmatprep.subr.mxu0 0.0
  %710 = vmatpush1.msra.mxu0 0.0
  %711 = vmatprep.subr.mxu0 0.0
  %712 = vmatpush1.msra.mxu0 0.0
  %713 = vmatprep.subr.mxu0 0.0
  %714 = vmatpush1.msra.mxu0 0.0
  %715 = vmatprep.subr.mxu0 0.0
  %716 = vmatpush1.msra.mxu0 0.0
  %717 = vmatprep.subr.mxu0 0.0
  %718 = vmatpush1.msra.mxu0 0.0
  %719 = vmatprep.subr.mxu0 0.0
  %720 = vmatpush1.msra.mxu0 0.0
  %721 = vmatprep.subr.mxu0 0.0
  %722 = vmatpush1.msra.mxu0 0.0
  %723 = vmatprep.subr.mxu0 0.0
  %724 = vmatpush1.msra.mxu0 0.0
  %725 = vmatprep.subr.mxu0 0.0
  %726 = vmatpush1.msra.mxu0 0.0
  %727 = vmatprep.subr.mxu0 0.0
  %728 = vmatpush1.msra.mxu0 0.0
  %729 = vmatprep.subr.mxu0 0.0
  %730 = vmatpush1.msra.mxu0 0.0
  %731 = vmatprep.subr.mxu0 0.0
  %732 = vmatpush1.msra.mxu0 0.0
  %733 = vmatprep.subr.mxu0 0.0
  %734 = vmatpush1.msra.mxu0 0.0
  %735 = vmatprep.subr.mxu0 0.0
  %736 = vmatpush1.msra.mxu0 0.0
  %737 = vmatprep.subr.mxu0 0.0
  %738 = vmatpush1.msra.mxu0 0.0
  %739 = vmatprep.subr.mxu0 0.0
  %740 = vmatpush1.msra.mxu0 0.0
  %741 = vmatprep.subr.mxu0 0.0
  %742 = vmatpush1.msra.mxu0 0.0
  %743 = vmatprep.subr.mxu0 0.0
  %744 = vmatpush1.msra.mxu0 0.0
  %745 = vmatprep.subr.mxu0 0.0
  %746 = vmatpush1.msra.mxu0 0.0
  %747 = vmatprep.subr.mxu0 0.0
  %748 = vmatpush1.msra.mxu0 0.0
  %749 = vmatprep.subr.mxu0 0.0
  %750 = vmatpush1.msra.mxu0 0.0
  %751 = vmatprep.subr.mxu0 0.0
  %752 = vmatpush1.msra.mxu0 0.0
  %753 = vmatprep.subr.mxu0 0.0
  %754 = vmatpush1.msra.mxu0 0.0
  %755 = vmatprep.subr.mxu0 0.0
  %756 = vmatpush1.msra.mxu0 0.0
  %757 = vmatprep.mubr.f32.mxu0 0.0
  %758 = vmatmul.mubr.f32.gmra.mrb[0].mxu0 %v679
  %v759 = vpop.f32.mrb[0].mxu0
  %v760 = vadd.f32 0.0, %v759
  %v761 = vpop.f32.mrb[0].mxu0
  %v762 = vadd.f32 0.0, %v761
  %763 = vmatprep.mubr.f32.mxu0 0.0
  %764 = vmatmul.mubr.f32.gmra.mrb[0].mxu0 %v682
  %v765 = vpop.f32.mrb[0].mxu0
  %v766 = vadd.f32 0.0, %v765
  %v767 = vpop.f32.mrb[0].mxu0
  %v768 = vadd.f32 0.0, %v767
  %769 = vdwg.mxu0
  %770 = vmatprep.subr.mxu0 0.0
  %771 = vmatpush1.msra.mxu0 %v691
  %772 = vmatprep.subr.mxu0 0.0
  %773 = vmatpush1.msra.mxu0 0.0
  %774 = vmatprep.subr.mxu0 0.0
  %775 = vmatpush1.msra.mxu0 0.0
  %776 = vmatprep.subr.mxu0 0.0
  %777 = vmatpush1.msra.mxu0 0.0
  %778 = vmatprep.subr.mxu0 0.0
  %779 = vmatpush1.msra.mxu0 0.0
  %780 = vmatprep.subr.mxu0 0.0
  %781 = vmatpush1.msra.mxu0 0.0
  %782 = vmatprep.subr.mxu0 0.0
  %783 = vmatpush1.msra.mxu0 0.0
  %784 = vmatprep.subr.mxu0 0.0
  %785 = vmatpush1.msra.mxu0 0.0
  %786 = vmatprep.subr.mxu0 0.0
  %787 = vmatpush1.msra.mxu0 0.0
  %788 = vmatprep.subr.mxu0 0.0
  %789 = vmatpush1.msra.mxu0 0.0
  %790 = vmatprep.subr.mxu0 0.0
  %791 = vmatpush1.msra.mxu0 0.0
  %792 = vmatprep.subr.mxu0 0.0
  %793 = vmatpush1.msra.mxu0 0.0
  %794 = vmatprep.subr.mxu0 0.0
  %795 = vmatpush1.msra.mxu0 0.0
  %796 = vmatprep.subr.mxu0 0.0
  %797 = vmatpush1.msra.mxu0 0.0
  %798 = vmatprep.subr.mxu0 0.0
  %799 = vmatpush1.msra.mxu0 0.0
  %800 = vmatprep.subr.mxu0 0.0
  %801 = vmatpush1.msra.mxu0 0.0
  %802 = vmatprep.subr.mxu0 0.0
  %803 = vmatpush1.msra.mxu0 0.0
  %804 = vmatprep.subr.mxu0 0.0
  %805 = vmatpush1.msra.mxu0 0.0
  %806 = vmatprep.subr.mxu0 0.0
  %807 = vmatpush1.msra.mxu0 0.0
  %808 = vmatprep.subr.mxu0 0.0
  %809 = vmatpush1.msra.mxu0 0.0
  %810 = vmatprep.subr.mxu0 0.0
  %811 = vmatpush1.msra.mxu0 0.0
  %812 = vmatprep.subr.mxu0 0.0
  %813 = vmatpush1.msra.mxu0 0.0
  %814 = vmatprep.subr.mxu0 0.0
  %815 = vmatpush1.msra.mxu0 0.0
  %816 = vmatprep.subr.mxu0 0.0
  %817 = vmatpush1.msra.mxu0 0.0
  %818 = vmatprep.subr.mxu0 0.0
  %819 = vmatpush1.msra.mxu0 0.0
  %820 = vmatprep.subr.mxu0 0.0
  %821 = vmatpush1.msra.mxu0 0.0
  %822 = vmatprep.subr.mxu0 0.0
  %823 = vmatpush1.msra.mxu0 0.0
  %824 = vmatprep.subr.mxu0 0.0
  %825 = vmatpush1.msra.mxu0 0.0
  %826 = vmatprep.subr.mxu0 0.0
  %827 = vmatpush1.msra.mxu0 0.0
  %828 = vmatprep.subr.mxu0 0.0
  %829 = vmatpush1.msra.mxu0 0.0
  %830 = vmatprep.subr.mxu0 0.0
  %831 = vmatpush1.msra.mxu0 0.0
  %832 = vmatprep.subr.mxu0 0.0
  %833 = vmatpush1.msra.mxu0 0.0
  %834 = vmatprep.mubr.f32.mxu0 0.0
  %835 = vmatmul.mubr.f32.gmra.mrb[0].mxu0 %v679
  %v836 = vpop.f32.mrb[0].mxu0
  %v837 = vadd.f32 0.0, %v836
  %v838 = vpop.f32.mrb[0].mxu0
  %839 = vmatprep.mubr.f32.mxu0 0.0
  %840 = vmatmul.mubr.f32.gmra.mrb[0].mxu0 %v682
  %v841 = vpop.f32.mrb[0].mxu0
  %v842 = vadd.f32 0.0, %v841
  %v843 = vpop.f32.mrb[0].mxu0
  %844 = vdwg.mxu0
  %v845 = vrcp.pop %v760
  %v846 = vmul.f32 %v231, %v845
  %v847 = vrcp.pop %v762
  %v848 = vmul.f32 %v233, %v847
  %v849 = vrcp.pop %v837
  %v850 = vmul.f32 %v235, %v849
  %v851 = vrcp.pop %v766
  %v852 = vmul.f32 %v237, %v851
  %v853 = vrcp.pop %v768
  %v854 = vmul.f32 %v239, %v853
  %v855 = vrcp.pop %v842
  %v856 = vmul.f32 %v241, %v855
  %vm863 = vcmask 1045504
  %v864 = vrot.slane %v267, 2
  %v865 = vrot.slane %v273, 2
  %v866 = vsel %vm863, %v864, %v865
  %v867 = vrot.slane %v269, 2
  %v868 = vrot.slane %v275, 2
  %v869 = vsel %vm863, %v867, %v868
  %v870 = vrot.slane %v271, 2
  %v871 = vrot.slane %v277, 2
  %v872 = vsel %vm863, %v870, %v871
  %v879 = vmul.f32 %v846, %v866
  %v880 = vmul.f32 %v848, %v869
  %v881 = vmul.f32 %v850, %v872
  %v882 = vmul.f32 %v852, %v865
  %v883 = vmul.f32 %v854, %v868
  %v884 = vmul.f32 %v856, %v871
  %885 = vst [vmem:[%s3] sm:$0xff] %v879
  %886 = vst [vmem:[%s3 + $0x8] sm:$0xff] %v880
  %887 = vst.msk [vmem:[%s3 + $0x10] sm:$0xff] %vm520, %v881
  %888 = vst [vmem:[%s3 + $0x18] sm:$0x3] %v882
  %889 = vst [vmem:[%s3 + $0x20] sm:$0x3] %v883
  %vm890 = vcmask 254976
  %891 = vst.msk [vmem:[%s3 + $0x28] sm:$0x3] %vm890, %v884
  // Predicated region
  $region14: #{net_forward.6} parent=0 // pred_check
    _
  $region15: #{net_forward.6} parent=0 // pred_check_branch
    %893 = sbr.rel (0) target = $region17
  $region16: #{net_forward.6} parent=0 // pred_region
    _
  $region17: #{net_forward.6} parent=0 // pred_fallthru
    _
  // Predicated region
  $region18: #{net_forward.6} parent=0 // pred_check
    _
  $region19: #{net_forward.6} parent=0 // pred_check_branch
    %895 = sbr.rel (0) target = $region21
  $region20: #{net_forward.6} parent=0 // pred_region
    _
  $region21: #{net_forward.6} parent=0 // pred_fallthru
    _

// kernel: net_forward.9
$region0: #{net_forward.9}
  #allocation0 [shape = 'u32[]', space=smem, size = 0x4, offset = 0x4, fixed_abs, tag = 'smem constant byte address 0x4 - core index']
  #allocation1 [shape = 'u32[144,128]{1,0:T(1,128)}', space=vmem, size = 0x12000, scoped, tag = 'internal scratch']
  %s0 = inlined_call_operand.vmem [shape: f32[2,320], index: 0, kind: input, shape index: {}]
  %s1 = inlined_call_operand.vmem [shape: f32[2,1440], index: 1, kind: input, shape index: {}]
  %s2 = inlined_call_operand.vmem [shape: f32[2,160], index: 2, kind: input, shape index: {}]
  %s3 = inlined_call_operand.vmem [shape: f32[320,50], index: 3, kind: input, shape index: {}]
  %s4 = inlined_call_operand.vmem [shape: f32[1,50], index: 4, kind: input, shape index: {}]
  %s5 = inlined_call_operand.vmem [shape: f32[50,10], index: 5, kind: input, shape index: {}]
  %s6 = inlined_call_operand.vmem [shape: f32[1,10], index: 6, kind: input, shape index: {}]
  %s7 = inlined_call_operand.vmem [shape: f32[1440,128], index: 7, kind: input, shape index: {}]
  %s8 = inlined_call_operand.vmem [shape: f32[1,128], index: 8, kind: input, shape index: {}]
  %s9 = inlined_call_operand.vmem [shape: f32[128,10], index: 9, kind: input, shape index: {}]
  %s10 = inlined_call_operand.vmem [shape: f32[1,10], index: 10, kind: input, shape index: {}]
  %s11 = inlined_call_operand.vmem [shape: f32[160,32], index: 11, kind: input, shape index: {}]
  %s12 = inlined_call_operand.vmem [shape: f32[1,32], index: 12, kind: input, shape index: {}]
  %s13 = inlined_call_operand.vmem [shape: f32[32,10], index: 13, kind: input, shape index: {}]
  %s14 = inlined_call_operand.vmem [shape: f32[1,10], index: 14, kind: input, shape index: {}]
  %s15 = inlined_call_operand.hbm [shape: f32[2,10], index: 15, kind: output, shape index: {0}]
  %s16 = inlined_call_operand.hbm [shape: f32[2,10], index: 16, kind: output, shape index: {1}]
  %s17 = inlined_call_operand.hbm [shape: f32[2,10], index: 17, kind: output, shape index: {2}]
  %18 = xla_tuple %s15, %s16, %s17
  %s19 = sld [smem:[#allocation0]]
  $region86: #{net_forward.9} parent=0
    _
  %s21 = ssub.s32 1, %s19
  %s22 = scalar_select 0, %s21, %s19
  $region1: #{net_forward.9} parent=0
    #allocation2 [shape = 'u8[1024]{0}', space=vmem, size = 0x400, scoped, tag = 'output window, operand 0, single buffered']
    #allocation3 [shape = 's32[1]{0}', space=sflag, size = 0x4, scoped, tag = 'scoped memory for net_forward.9']
    #allocation4 [shape = 'u8[1024]{0}', space=vmem, size = 0x400, scoped, tag = 'output window, operand 1, single buffered']
    #allocation5 [shape = 's32[1]{0}', space=sflag, size = 0x4, scoped, tag = 'scoped memory for net_forward.9']
    #allocation6 [shape = 'u8[1024]{0}', space=vmem, size = 0x400, scoped, tag = 'output window, operand 2, single buffered']
    %23 = vsyncpa [#allocation3], 0
    %24 = vsyncpa [#allocation5], 0
    // Predicated region
    $region2: #{net_forward.9} parent=1 // pred_check
      _
    $region3: #{net_forward.9} parent=1 // pred_check_branch
      %26 = sbr.rel (0) target = $region5
    $region4: #{net_forward.9} parent=1 // pred_region
      _
    $region5: #{net_forward.9} parent=1 // pred_fallthru
      _
    // Predicated region
    $region6: #{net_forward.9} parent=1 // pred_check
      _
    $region7: #{net_forward.9} parent=1 // pred_check_branch
      %28 = sbr.rel (0) target = $region9
    $region8: #{net_forward.9} parent=1 // pred_region
      _
    $region9: #{net_forward.9} parent=1 // pred_fallthru
      _
    // Predicated region
    $region10: #{net_forward.9} parent=1 // pred_check
      _
    $region11: #{net_forward.9} parent=1 // pred_check_branch
      %30 = sbr.rel (0) target = $region13
    $region12: #{net_forward.9} parent=1 // pred_region
      _
    $region13: #{net_forward.9} parent=1 // pred_fallthru
      _
    // Predicated region
    $region14: #{net_forward.9} parent=1 // pred_check
      _
    $region15: #{net_forward.9} parent=1 // pred_check_branch
      %32 = sbr.rel (0) target = $region17
    $region16: #{net_forward.9} parent=1 // pred_region
      _
    $region17: #{net_forward.9} parent=1 // pred_fallthru
      _
    // Predicated region
    $region18: #{net_forward.9} parent=1 // pred_check
      _
    $region19: #{net_forward.9} parent=1 // pred_check_branch
      %34 = sbr.rel (0) target = $region21
    $region20: #{net_forward.9} parent=1 // pred_region
      _
    $region21: #{net_forward.9} parent=1 // pred_fallthru
      _
    // Predicated region
    $region22: #{net_forward.9} parent=1 // pred_check
      _
    $region23: #{net_forward.9} parent=1 // pred_check_branch
      %36 = sbr.rel (0) target = $region25
    $region24: #{net_forward.9} parent=1 // pred_region
      _
    $region25: #{net_forward.9} parent=1 // pred_fallthru
      _
    // Predicated region
    $region26: #{net_forward.9} parent=1 // pred_check
      _
    $region27: #{net_forward.9} parent=1 // pred_check_branch
      %38 = sbr.rel (0) target = $region29
    $region28: #{net_forward.9} parent=1 // pred_region
      _
    $region29: #{net_forward.9} parent=1 // pred_fallthru
      _
    // Predicated region
    $region30: #{net_forward.9} parent=1 // pred_check
      _
    $region31: #{net_forward.9} parent=1 // pred_check_branch
      %40 = sbr.rel (0) target = $region33
    $region32: #{net_forward.9} parent=1 // pred_region
      _
    $region33: #{net_forward.9} parent=1 // pred_fallthru
      _
    // Predicated region
    $region34: #{net_forward.9} parent=1 // pred_check
      _
    $region35: #{net_forward.9} parent=1 // pred_check_branch
      %42 = sbr.rel (0) target = $region37
    $region36: #{net_forward.9} parent=1 // pred_region
      _
    $region37: #{net_forward.9} parent=1 // pred_fallthru
      _
    // Predicated region
    $region38: #{net_forward.9} parent=1 // pred_check
      _
    $region39: #{net_forward.9} parent=1 // pred_check_branch
      %44 = sbr.rel (0) target = $region41
    $region40: #{net_forward.9} parent=1 // pred_region
      _
    $region41: #{net_forward.9} parent=1 // pred_fallthru
      _
    // Predicated region
    $region42: #{net_forward.9} parent=1 // pred_check
      _
    $region43: #{net_forward.9} parent=1 // pred_check_branch
      %46 = sbr.rel (0) target = $region45
    $region44: #{net_forward.9} parent=1 // pred_region
      _
    $region45: #{net_forward.9} parent=1 // pred_fallthru
      _
    // Predicated region
    $region46: #{net_forward.9} parent=1 // pred_check
      _
    $region47: #{net_forward.9} parent=1 // pred_check_branch
      %48 = sbr.rel (0) target = $region49
    $region48: #{net_forward.9} parent=1 // pred_region
      _
    $region49: #{net_forward.9} parent=1 // pred_fallthru
      _
    // Predicated region
    $region50: #{net_forward.9} parent=1 // pred_check
      _
    $region51: #{net_forward.9} parent=1 // pred_check_branch
      %50 = sbr.rel (0) target = $region53
    $region52: #{net_forward.9} parent=1 // pred_region
      _
    $region53: #{net_forward.9} parent=1 // pred_fallthru
      _
    // Predicated region
    $region54: #{net_forward.9} parent=1 // pred_check
      _
    $region55: #{net_forward.9} parent=1 // pred_check_branch
      %52 = sbr.rel (0) target = $region57
    $region56: #{net_forward.9} parent=1 // pred_region
      _
    $region57: #{net_forward.9} parent=1 // pred_fallthru
      _
    // Predicated region
    $region58: #{net_forward.9} parent=1 // pred_check
      _
    $region59: #{net_forward.9} parent=1 // pred_check_branch
      %54 = sbr.rel (0) target = $region61
    $region60: #{net_forward.9} parent=1 // pred_region
      _
    $region61: #{net_forward.9} parent=1 // pred_fallthru
      _
    %v55 = vld [vmem:[%s0] sm:$0x3f]
    %v56 = vld [vmem:[%s3] sm:$0xff]
    %v57 = vld [vmem:[%s3 + $0x8] sm:$0xff]
    %v58 = vld [vmem:[%s3 + $0x10] sm:$0xff]
    %v59 = vld [vmem:[%s3 + $0x18] sm:$0xff]
    %v60 = vld [vmem:[%s3 + $0x20] sm:$0xff]
    %v61 = vld [vmem:[%s3 + $0x28] sm:$0xff]
    %v62 = vld [vmem:[%s3 + $0x30] sm:$0xff]
    %v63 = vld [vmem:[%s3 + $0x38] sm:$0xff]
    %v64 = vld [vmem:[%s3 + $0x40] sm:$0xff]
    %v65 = vld [vmem:[%s3 + $0x48] sm:$0xff]
    %v66 = vld [vmem:[%s3 + $0x50] sm:$0xff]
    %v67 = vld [vmem:[%s3 + $0x58] sm:$0xff]
    %v68 = vld [vmem:[%s3 + $0x60] sm:$0xff]
    %v69 = vld [vmem:[%s3 + $0x68] sm:$0xff]
    %v70 = vld [vmem:[%s3 + $0x70] sm:$0xff]
    %v71 = vld [vmem:[%s3 + $0x78] sm:$0xff]
    %v72 = vld [vmem:[%s3 + $0x80] sm:$0xff]
    %v73 = vld [vmem:[%s3 + $0x88] sm:$0xff]
    %v74 = vld [vmem:[%s3 + $0x90] sm:$0xff]
    %v75 = vld [vmem:[%s3 + $0x98] sm:$0xff]
    %v76 = vld [vmem:[%s3 + $0xa0] sm:$0xff]
    %v77 = vld [vmem:[%s3 + $0xa8] sm:$0xff]
    %v78 = vld [vmem:[%s3 + $0xb0] sm:$0xff]
    %v79 = vld [vmem:[%s3 + $0xb8] sm:$0xff]
    %v80 = vld [vmem:[%s3 + $0xc0] sm:$0xff]
    %v81 = vld [vmem:[%s3 + $0xc8] sm:$0xff]
    %v82 = vld [vmem:[%s3 + $0xd0] sm:$0xff]
    %v83 = vld [vmem:[%s3 + $0xd8] sm:$0xff]
    %v84 = vld [vmem:[%s3 + $0xe0] sm:$0xff]
    %v85 = vld [vmem:[%s3 + $0xe8] sm:$0xff]
    %v86 = vld [vmem:[%s3 + $0xf0] sm:$0xff]
    %v87 = vld [vmem:[%s3 + $0xf8] sm:$0xff]
    %v88 = vld [vmem:[%s3 + $0x100] sm:$0xff]
    %v89 = vld [vmem:[%s3 + $0x108] sm:$0xff]
    %v90 = vld [vmem:[%s3 + $0x110] sm:$0xff]
    %v91 = vld [vmem:[%s3 + $0x118] sm:$0xff]
    %v92 = vld [vmem:[%s3 + $0x120] sm:$0xff]
    %v93 = vld [vmem:[%s3 + $0x128] sm:$0xff]
    %v94 = vld [vmem:[%s3 + $0x130] sm:$0xff]
    %v95 = vld [vmem:[%s3 + $0x138] sm:$0xff]
    %v96 = vld [vmem:[%s4] sm:$0x1]
    %v97 = vld [vmem:[%s5] sm:$0xff]
    %v98 = vld [vmem:[%s5 + $0x8] sm:$0xff]
    %v99 = vld [vmem:[%s5 + $0x10] sm:$0xff]
    %v100 = vld [vmem:[%s5 + $0x18] sm:$0xff]
    %v101 = vld [vmem:[%s5 + $0x20] sm:$0xff]
    %v102 = vld [vmem:[%s5 + $0x28] sm:$0xff]
    %v103 = vld [vmem:[%s5 + $0x30] sm:$0x3]
    %v104 = vld [vmem:[%s6] sm:$0x1]
    %v106 = vlaneseq
    %v107 = vshrl.u32 %v106, 7
    %v108 = vsub.s32 0, %v107
    %v109 = vrot.slane %v96, %v108
    %v112 = vcombine.high %v55, %v55
    %v114 = vunpack.c.l.s4 1983009808
    %v115 = vunpack.c.0.s8 %v114
    %v116 = vlaneseq
    %v117 = vshrl.u32 %v116, 7
    %v118 = vsub.s32 %v115, %v117
    %v119 = vrot.slane %v55, %v118
    %v121 = vunpack.c.l.s4 1983009808
    %v122 = vunpack.c.0.s8 %v121
    %v123 = vlaneseq
    %v124 = vshrl.u32 %v123, 7
    %v125 = vsub.s32 %v122, %v124
    %v126 = vrot.slane %v112, %v125
    %v127 = vcombine.high %v119, %v119
    %vm130 = vcmask 523264
    %v131 = vsel %vm130, %v126, 0
    %133 = vmatprep.subr.mxu0 0.0
    %134 = vmatpush1.msra.mxu0 %v56
    %135 = vmatprep.subr.mxu0 0.0
    %136 = vmatpush1.msra.mxu0 %v57
    %137 = vmatprep.subr.mxu0 0.0
    %138 = vmatpush1.msra.mxu0 %v58
    %139 = vmatprep.subr.mxu0 0.0
    %140 = vmatpush1.msra.mxu0 %v59
    %141 = vmatprep.subr.mxu0 0.0
    %142 = vmatpush1.msra.mxu0 %v60
    %143 = vmatprep.subr.mxu0 0.0
    %144 = vmatpush1.msra.mxu0 %v61
    %145 = vmatprep.subr.mxu0 0.0
    %146 = vmatpush1.msra.mxu0 %v62
    %147 = vmatprep.subr.mxu0 0.0
    %148 = vmatpush1.msra.mxu0 %v63
    %149 = vmatprep.subr.mxu0 0.0
    %150 = vmatpush1.msra.mxu0 %v64
    %151 = vmatprep.subr.mxu0 0.0
    %152 = vmatpush1.msra.mxu0 %v65
    %153 = vmatprep.subr.mxu0 0.0
    %154 = vmatpush1.msra.mxu0 %v66
    %155 = vmatprep.subr.mxu0 0.0
    %156 = vmatpush1.msra.mxu0 %v67
    %157 = vmatprep.subr.mxu0 0.0
    %158 = vmatpush1.msra.mxu0 %v68
    %159 = vmatprep.subr.mxu0 0.0
    %160 = vmatpush1.msra.mxu0 %v69
    %161 = vmatprep.subr.mxu0 0.0
    %162 = vmatpush1.msra.mxu0 %v70
    %163 = vmatprep.subr.mxu0 0.0
    %164 = vmatpush1.msra.mxu0 %v71
    %165 = vmatprep.subr.mxu0 0.0
    %166 = vmatpush1.msra.mxu0 %v72
    %167 = vmatprep.subr.mxu0 0.0
    %168 = vmatpush1.msra.mxu0 %v73
    %169 = vmatprep.subr.mxu0 0.0
    %170 = vmatpush1.msra.mxu0 %v74
    %171 = vmatprep.subr.mxu0 0.0
    %172 = vmatpush1.msra.mxu0 %v75
    %173 = vmatprep.subr.mxu0 0.0
    %174 = vmatpush1.msra.mxu0 %v76
    %175 = vmatprep.subr.mxu0 0.0
    %176 = vmatpush1.msra.mxu0 %v77
    %177 = vmatprep.subr.mxu0 0.0
    %178 = vmatpush1.msra.mxu0 %v78
    %179 = vmatprep.subr.mxu0 0.0
    %180 = vmatpush1.msra.mxu0 %v79
    %181 = vmatprep.subr.mxu0 0.0
    %182 = vmatpush1.msra.mxu0 %v80
    %183 = vmatprep.subr.mxu0 0.0
    %184 = vmatpush1.msra.mxu0 %v81
    %185 = vmatprep.subr.mxu0 0.0
    %186 = vmatpush1.msra.mxu0 %v82
    %187 = vmatprep.subr.mxu0 0.0
    %188 = vmatpush1.msra.mxu0 %v83
    %189 = vmatprep.subr.mxu0 0.0
    %190 = vmatpush1.msra.mxu0 %v84
    %191 = vmatprep.subr.mxu0 0.0
    %192 = vmatpush1.msra.mxu0 %v85
    %193 = vmatprep.subr.mxu0 0.0
    %194 = vmatpush1.msra.mxu0 %v86
    %195 = vmatprep.subr.mxu0 0.0
    %196 = vmatpush1.msra.mxu0 %v87
    %197 = vmatprep.mubr.f32.mxu0 %v127
    %198 = vmatmul.mubr.f32.gmra.mrb[0].mxu0 %v119
    %v199 = vpop.f32.mrb[0].mxu0
    %v200 = vadd.f32 %v109, %v199
    %v201 = vpop.f32.mrb[0].mxu0
    %202 = vdwg.mxu0
    %203 = vmatprep.subr.mxu0 0.0
    %204 = vmatpush1.msra.mxu0 %v88
    %205 = vmatprep.subr.mxu0 0.0
    %206 = vmatpush1.msra.mxu0 %v89
    %207 = vmatprep.subr.mxu0 0.0
    %208 = vmatpush1.msra.mxu0 %v90
    %209 = vmatprep.subr.mxu0 0.0
    %210 = vmatpush1.msra.mxu0 %v91
    %211 = vmatprep.subr.mxu0 0.0
    %212 = vmatpush1.msra.mxu0 %v92
    %213 = vmatprep.subr.mxu0 0.0
    %214 = vmatpush1.msra.mxu0 %v93
    %215 = vmatprep.subr.mxu0 0.0
    %216 = vmatpush1.msra.mxu0 %v94
    %217 = vmatprep.subr.mxu0 0.0
    %218 = vmatpush1.msra.mxu0 %v95
    %219 = vmatprep.subr.mxu0 0.0
    %220 = vmatpush1.msra.mxu0 0.0
    %221 = vmatprep.subr.mxu0 0.0
    %222 = vmatpush1.msra.mxu0 0.0
    %223 = vmatprep.subr.mxu0 0.0
    %224 = vmatpush1.msra.mxu0 0.0
    %225 = vmatprep.subr.mxu0 0.0
    %226 = vmatpush1.msra.mxu0 0.0
    %227 = vmatprep.subr.mxu0 0.0
    %228 = vmatpush1.msra.mxu0 0.0
    %229 = vmatprep.subr.mxu0 0.0
    %230 = vmatpush1.msra.mxu0 0.0
    %231 = vmatprep.subr.mxu0 0.0
    %232 = vmatpush1.msra.mxu0 0.0
    %233 = vmatprep.subr.mxu0 0.0
    %234 = vmatpush1.msra.mxu0 0.0
    %235 = vmatprep.subr.mxu0 0.0
    %236 = vmatpush1.msra.mxu0 0.0
    %237 = vmatprep.subr.mxu0 0.0
    %238 = vmatpush1.msra.mxu0 0.0
    %239 = vmatprep.subr.mxu0 0.0
    %240 = vmatpush1.msra.mxu0 0.0
    %241 = vmatprep.subr.mxu0 0.0
    %242 = vmatpush1.msra.mxu0 0.0
    %243 = vmatprep.subr.mxu0 0.0
    %244 = vmatpush1.msra.mxu0 0.0
    %245 = vmatprep.subr.mxu0 0.0
    %246 = vmatpush1.msra.mxu0 0.0
    %247 = vmatprep.subr.mxu0 0.0
    %248 = vmatpush1.msra.mxu0 0.0
    %249 = vmatprep.subr.mxu0 0.0
    %250 = vmatpush1.msra.mxu0 0.0
    %251 = vmatprep.subr.mxu0 0.0
    %252 = vmatpush1.msra.mxu0 0.0
    %253 = vmatprep.subr.mxu0 0.0
    %254 = vmatpush1.msra.mxu0 0.0
    %255 = vmatprep.subr.mxu0 0.0
    %256 = vmatpush1.msra.mxu0 0.0
    %257 = vmatprep.subr.mxu0 0.0
    %258 = vmatpush1.msra.mxu0 0.0
    %259 = vmatprep.subr.mxu0 0.0
    %260 = vmatpush1.msra.mxu0 0.0
    %261 = vmatprep.subr.mxu0 0.0
    %262 = vmatpush1.msra.mxu0 0.0
    %263 = vmatprep.subr.mxu0 0.0
    %264 = vmatpush1.msra.mxu0 0.0
    %265 = vmatprep.subr.mxu0 0.0
    %266 = vmatpush1.msra.mxu0 0.0
    %267 = vmatprep.mubr.f32.mxu0 0.0
    %268 = vmatmul.mubr.f32.gmra.mrb[0].mxu0 %v131
    %v269 = vpop.f32.mrb[0].mxu0
    %v270 = vadd.f32 %v200, %v269
    %v271 = vpop.f32.mrb[0].mxu0
    %272 = vdwg.mxu0
    %v273 = vmax.f32 %v270, 0.0
    %v275 = vlaneseq
    %v276 = vshrl.u32 %v275, 7
    %v277 = vsub.s32 0, %v276
    %v278 = vrot.slane %v104, %v277
    %vm280 = vcmask 408576
    %v282 = vsel %vm280, %v273, 0
    %vm284 = vcmask 1041408
    %v286 = vsel %vm284, %v103, 0
    %288 = vmatprep.subr.mxu0 0.0
    %289 = vmatpush1.msra.mxu0 %v97
    %290 = vmatprep.subr.mxu0 0.0
    %291 = vmatpush1.msra.mxu0 %v98
    %292 = vmatprep.subr.mxu0 0.0
    %293 = vmatpush1.msra.mxu0 %v99
    %294 = vmatprep.subr.mxu0 0.0
    %295 = vmatpush1.msra.mxu0 %v100
    %296 = vmatprep.subr.mxu0 0.0
    %297 = vmatpush1.msra.mxu0 %v101
    %298 = vmatprep.subr.mxu0 0.0
    %299 = vmatpush1.msra.mxu0 %v102
    %300 = vmatprep.subr.mxu0 0.0
    %301 = vmatpush1.msra.mxu0 %v286
    %302 = vmatprep.subr.mxu0 0.0
    %303 = vmatpush1.msra.mxu0 0.0
    %304 = vmatprep.subr.mxu0 0.0
    %305 = vmatpush1.msra.mxu0 0.0
    %306 = vmatprep.subr.mxu0 0.0
    %307 = vmatpush1.msra.mxu0 0.0
    %308 = vmatprep.subr.mxu0 0.0
    %309 = vmatpush1.msra.mxu0 0.0
    %310 = vmatprep.subr.mxu0 0.0
    %311 = vmatpush1.msra.mxu0 0.0
    %312 = vmatprep.subr.mxu0 0.0
    %313 = vmatpush1.msra.mxu0 0.0
    %314 = vmatprep.subr.mxu0 0.0
    %315 = vmatpush1.msra.mxu0 0.0
    %316 = vmatprep.subr.mxu0 0.0
    %317 = vmatpush1.msra.mxu0 0.0
    %318 = vmatprep.subr.mxu0 0.0
    %319 = vmatpush1.msra.mxu0 0.0
    %320 = vmatprep.subr.mxu0 0.0
    %321 = vmatpush1.msra.mxu0 0.0
    %322 = vmatprep.subr.mxu0 0.0
    %323 = vmatpush1.msra.mxu0 0.0
    %324 = vmatprep.subr.mxu0 0.0
    %325 = vmatpush1.msra.mxu0 0.0
    %326 = vmatprep.subr.mxu0 0.0
    %327 = vmatpush1.msra.mxu0 0.0
    %328 = vmatprep.subr.mxu0 0.0
    %329 = vmatpush1.msra.mxu0 0.0
    %330 = vmatprep.subr.mxu0 0.0
    %331 = vmatpush1.msra.mxu0 0.0
    %332 = vmatprep.subr.mxu0 0.0
    %333 = vmatpush1.msra.mxu0 0.0
    %334 = vmatprep.subr.mxu0 0.0
    %335 = vmatpush1.msra.mxu0 0.0
    %336 = vmatprep.subr.mxu0 0.0
    %337 = vmatpush1.msra.mxu0 0.0
    %338 = vmatprep.subr.mxu0 0.0
    %339 = vmatpush1.msra.mxu0 0.0
    %340 = vmatprep.subr.mxu0 0.0
    %341 = vmatpush1.msra.mxu0 0.0
    %342 = vmatprep.subr.mxu0 0.0
    %343 = vmatpush1.msra.mxu0 0.0
    %344 = vmatprep.subr.mxu0 0.0
    %345 = vmatpush1.msra.mxu0 0.0
    %346 = vmatprep.subr.mxu0 0.0
    %347 = vmatpush1.msra.mxu0 0.0
    %348 = vmatprep.subr.mxu0 0.0
    %349 = vmatpush1.msra.mxu0 0.0
    %350 = vmatprep.subr.mxu0 0.0
    %351 = vmatpush1.msra.mxu0 0.0
    %352 = vmatprep.mubr.f32.mxu0 0.0
    %353 = vmatmul.mubr.f32.gmra.mrb[0].mxu0 %v282
    %v354 = vpop.f32.mrb[0].mxu0
    %v355 = vadd.f32 %v278, %v354
    %v356 = vpop.f32.mrb[0].mxu0
    %357 = vdwg.mxu0
    %vm358 = vcmask 74752
    %359 = vst.msk [vmem:[#allocation2] sm:$0x3] %vm358, %v355
    %v360 = vld [vmem:[%s1] sm:$0xff]
    %v361 = vld [vmem:[%s1 + $0x8] sm:$0xff]
    %v362 = vld [vmem:[%s1 + $0x10] sm:$0xff]
    %v363 = vld [vmem:[%s7] sm:$0xff]
    %v364 = vld [vmem:[%s7 + $0x8] sm:$0xff]
    %v365 = vld [vmem:[%s7 + $0x10] sm:$0xff]
    %v366 = vld [vmem:[%s7 + $0x18] sm:$0xff]
    %v367 = vld [vmem:[%s7 + $0x20] sm:$0xff]
    %v368 = vld [vmem:[%s7 + $0x28] sm:$0xff]
    %v369 = vld [vmem:[%s7 + $0x30] sm:$0xff]
    %v370 = vld [vmem:[%s7 + $0x38] sm:$0xff]
    %v371 = vld [vmem:[%s7 + $0x40] sm:$0xff]
    %v372 = vld [vmem:[%s7 + $0x48] sm:$0xff]
    %v373 = vld [vmem:[%s7 + $0x50] sm:$0xff]
    %v374 = vld [vmem:[%s7 + $0x58] sm:$0xff]
    %v375 = vld [vmem:[%s7 + $0x60] sm:$0xff]
    %v376 = vld [vmem:[%s7 + $0x68] sm:$0xff]
    %v377 = vld [vmem:[%s7 + $0x70] sm:$0xff]
    %v378 = vld [vmem:[%s7 + $0x78] sm:$0xff]
    %v379 = vld [vmem:[%s7 + $0x80] sm:$0xff]
    %v380 = vld [vmem:[%s7 + $0x88] sm:$0xff]
    %v381 = vld [vmem:[%s7 + $0x90] sm:$0xff]
    %v382 = vld [vmem:[%s7 + $0x98] sm:$0xff]
    %v383 = vld [vmem:[%s7 + $0xa0] sm:$0xff]
    %v384 = vld [vmem:[%s7 + $0xa8] sm:$0xff]
    %v385 = vld [vmem:[%s7 + $0xb0] sm:$0xff]
    %v386 = vld [vmem:[%s7 + $0xb8] sm:$0xff]
    %v387 = vld [vmem:[%s7 + $0xc0] sm:$0xff]
    %v388 = vld [vmem:[%s7 + $0xc8] sm:$0xff]
    %v389 = vld [vmem:[%s7 + $0xd0] sm:$0xff]
    %v390 = vld [vmem:[%s7 + $0xd8] sm:$0xff]
    %v391 = vld [vmem:[%s7 + $0xe0] sm:$0xff]
    %v392 = vld [vmem:[%s7 + $0xe8] sm:$0xff]
    %v393 = vld [vmem:[%s7 + $0xf0] sm:$0xff]
    %v394 = vld [vmem:[%s7 + $0xf8] sm:$0xff]
    %v395 = vld [vmem:[%s7 + $0x100] sm:$0xff]
    %v396 = vld [vmem:[%s7 + $0x108] sm:$0xff]
    %v397 = vld [vmem:[%s7 + $0x110] sm:$0xff]
    %v398 = vld [vmem:[%s7 + $0x118] sm:$0xff]
    %v399 = vld [vmem:[%s7 + $0x120] sm:$0xff]
    %v400 = vld [vmem:[%s7 + $0x128] sm:$0xff]
    %v401 = vld [vmem:[%s7 + $0x130] sm:$0xff]
    %v402 = vld [vmem:[%s7 + $0x138] sm:$0xff]
    %v403 = vld [vmem:[%s7 + $0x140] sm:$0xff]
    %v404 = vld [vmem:[%s7 + $0x148] sm:$0xff]
    %v405 = vld [vmem:[%s7 + $0x150] sm:$0xff]
    %v406 = vld [vmem:[%s7 + $0x158] sm:$0xff]
    %v407 = vld [vmem:[%s7 + $0x160] sm:$0xff]
    %v408 = vld [vmem:[%s7 + $0x168] sm:$0xff]
    %v409 = vld [vmem:[%s7 + $0x170] sm:$0xff]
    %v410 = vld [vmem:[%s7 + $0x178] sm:$0xff]
    %v411 = vld [vmem:[%s7 + $0x180] sm:$0xff]
    %v412 = vld [vmem:[%s7 + $0x188] sm:$0xff]
    %v413 = vld [vmem:[%s7 + $0x190] sm:$0xff]
    %v414 = vld [vmem:[%s7 + $0x198] sm:$0xff]
    %v415 = vld [vmem:[%s7 + $0x1a0] sm:$0xff]
    %v416 = vld [vmem:[%s7 + $0x1a8] sm:$0xff]
    %v417 = vld [vmem:[%s7 + $0x1b0] sm:$0xff]
    %v418 = vld [vmem:[%s7 + $0x1b8] sm:$0xff]
    %v419 = vld [vmem:[%s7 + $0x1c0] sm:$0xff]
    %v420 = vld [vmem:[%s7 + $0x1c8] sm:$0xff]
    %v421 = vld [vmem:[%s7 + $0x1d0] sm:$0xff]
    %v422 = vld [vmem:[%s7 + $0x1d8] sm:$0xff]
    %v423 = vld [vmem:[%s7 + $0x1e0] sm:$0xff]
    %v424 = vld [vmem:[%s7 + $0x1e8] sm:$0xff]
    %v425 = vld [vmem:[%s7 + $0x1f0] sm:$0xff]
    %v426 = vld [vmem:[%s7 + $0x1f8] sm:$0xff]
    %v427 = vld [vmem:[%s7 + $0x200] sm:$0xff]
    %v428 = vld [vmem:[%s7 + $0x208] sm:$0xff]
    %v429 = vld [vmem:[%s7 + $0x210] sm:$0xff]
    %v430 = vld [vmem:[%s7 + $0x218] sm:$0xff]
    %v431 = vld [vmem:[%s7 + $0x220] sm:$0xff]
    %v432 = vld [vmem:[%s7 + $0x228] sm:$0xff]
    %v433 = vld [vmem:[%s7 + $0x230] sm:$0xff]
    %v434 = vld [vmem:[%s7 + $0x238] sm:$0xff]
    %v435 = vld [vmem:[%s7 + $0x240] sm:$0xff]
    %v436 = vld [vmem:[%s7 + $0x248] sm:$0xff]
    %v437 = vld [vmem:[%s7 + $0x250] sm:$0xff]
    %v438 = vld [vmem:[%s7 + $0x258] sm:$0xff]
    %v439 = vld [vmem:[%s7 + $0x260] sm:$0xff]
    %v440 = vld [vmem:[%s7 + $0x268] sm:$0xff]
    %v441 = vld [vmem:[%s7 + $0x270] sm:$0xff]
    %v442 = vld [vmem:[%s7 + $0x278] sm:$0xff]
    %v443 = vld [vmem:[%s7 + $0x280] sm:$0xff]
    %v444 = vld [vmem:[%s7 + $0x288] sm:$0xff]
    %v445 = vld [vmem:[%s7 + $0x290] sm:$0xff]
    %v446 = vld [vmem:[%s7 + $0x298] sm:$0xff]
    %v447 = vld [vmem:[%s7 + $0x2a0] sm:$0xff]
    %v448 = vld [vmem:[%s7 + $0x2a8] sm:$0xff]
    %v449 = vld [vmem:[%s7 + $0x2b0] sm:$0xff]
    %v450 = vld [vmem:[%s7 + $0x2b8] sm:$0xff]
    %v451 = vld [vmem:[%s7 + $0x2c0] sm:$0xff]
    %v452 = vld [vmem:[%s7 + $0x2c8] sm:$0xff]
    %v453 = vld [vmem:[%s7 + $0x2d0] sm:$0xff]
    %v454 = vld [vmem:[%s7 + $0x2d8] sm:$0xff]
    %v455 = vld [vmem:[%s7 + $0x2e0] sm:$0xff]
    %v456 = vld [vmem:[%s7 + $0x2e8] sm:$0xff]
    %v457 = vld [vmem:[%s7 + $0x2f0] sm:$0xff]
    %v458 = vld [vmem:[%s7 + $0x2f8] sm:$0xff]
    %v459 = vld [vmem:[%s7 + $0x300] sm:$0xff]
    %v460 = vld [vmem:[%s7 + $0x308] sm:$0xff]
    %v461 = vld [vmem:[%s7 + $0x310] sm:$0xff]
    %v462 = vld [vmem:[%s7 + $0x318] sm:$0xff]
    %v463 = vld [vmem:[%s7 + $0x320] sm:$0xff]
    %v464 = vld [vmem:[%s7 + $0x328] sm:$0xff]
    %v465 = vld [vmem:[%s7 + $0x330] sm:$0xff]
    %v466 = vld [vmem:[%s7 + $0x338] sm:$0xff]
    %v467 = vld [vmem:[%s7 + $0x340] sm:$0xff]
    %v468 = vld [vmem:[%s7 + $0x348] sm:$0xff]
    %v469 = vld [vmem:[%s7 + $0x350] sm:$0xff]
    %v470 = vld [vmem:[%s7 + $0x358] sm:$0xff]
    %v471 = vld [vmem:[%s7 + $0x360] sm:$0xff]
    %v472 = vld [vmem:[%s7 + $0x368] sm:$0xff]
    %v473 = vld [vmem:[%s7 + $0x370] sm:$0xff]
    %v474 = vld [vmem:[%s7 + $0x378] sm:$0xff]
    %v475 = vld [vmem:[%s7 + $0x380] sm:$0xff]
    %v476 = vld [vmem:[%s7 + $0x388] sm:$0xff]
    %v477 = vld [vmem:[%s7 + $0x390] sm:$0xff]
    %v478 = vld [vmem:[%s7 + $0x398] sm:$0xff]
    %v479 = vld [vmem:[%s7 + $0x3a0] sm:$0xff]
    %v480 = vld [vmem:[%s7 + $0x3a8] sm:$0xff]
    %v481 = vld [vmem:[%s7 + $0x3b0] sm:$0xff]
    %v482 = vld [vmem:[%s7 + $0x3b8] sm:$0xff]
    %v483 = vld [vmem:[%s7 + $0x3c0] sm:$0xff]
    %v484 = vld [vmem:[%s7 + $0x3c8] sm:$0xff]
    %v485 = vld [vmem:[%s7 + $0x3d0] sm:$0xff]
    %v486 = vld [vmem:[%s7 + $0x3d8] sm:$0xff]
    %v487 = vld [vmem:[%s7 + $0x3e0] sm:$0xff]
    %v488 = vld [vmem:[%s7 + $0x3e8] sm:$0xff]
    %v489 = vld [vmem:[%s7 + $0x3f0] sm:$0xff]
    %v490 = vld [vmem:[%s7 + $0x3f8] sm:$0xff]
    %v491 = vld [vmem:[%s7 + $0x400] sm:$0xff]
    %v492 = vld [vmem:[%s7 + $0x408] sm:$0xff]
    %v493 = vld [vmem:[%s7 + $0x410] sm:$0xff]
    %v494 = vld [vmem:[%s7 + $0x418] sm:$0xff]
    %v495 = vld [vmem:[%s7 + $0x420] sm:$0xff]
    %v496 = vld [vmem:[%s7 + $0x428] sm:$0xff]
    %v497 = vld [vmem:[%s7 + $0x430] sm:$0xff]
    %v498 = vld [vmem:[%s7 + $0x438] sm:$0xff]
    %v499 = vld [vmem:[%s7 + $0x440] sm:$0xff]
    %v500 = vld [vmem:[%s7 + $0x448] sm:$0xff]
    %v501 = vld [vmem:[%s7 + $0x450] sm:$0xff]
    %v502 = vld [vmem:[%s7 + $0x458] sm:$0xff]
    %v503 = vld [vmem:[%s7 + $0x460] sm:$0xff]
    %v504 = vld [vmem:[%s7 + $0x468] sm:$0xff]
    %v505 = vld [vmem:[%s7 + $0x470] sm:$0xff]
    %v506 = vld [vmem:[%s7 + $0x478] sm:$0xff]
    %v507 = vld [vmem:[%s7 + $0x480] sm:$0xff]
    %v508 = vld [vmem:[%s7 + $0x488] sm:$0xff]
    %v509 = vld [vmem:[%s7 + $0x490] sm:$0xff]
    %v510 = vld [vmem:[%s7 + $0x498] sm:$0xff]
    %v511 = vld [vmem:[%s7 + $0x4a0] sm:$0xff]
    %v512 = vld [vmem:[%s7 + $0x4a8] sm:$0xff]
    %v513 = vld [vmem:[%s7 + $0x4b0] sm:$0xff]
    %v514 = vld [vmem:[%s7 + $0x4b8] sm:$0xff]
    %v515 = vld [vmem:[%s7 + $0x4c0] sm:$0xff]
    %v516 = vld [vmem:[%s7 + $0x4c8] sm:$0xff]
    %v517 = vld [vmem:[%s7 + $0x4d0] sm:$0xff]
    %v518 = vld [vmem:[%s7 + $0x4d8] sm:$0xff]
    %v519 = vld [vmem:[%s7 + $0x4e0] sm:$0xff]
    %v520 = vld [vmem:[%s7 + $0x4e8] sm:$0xff]
    %v521 = vld [vmem:[%s7 + $0x4f0] sm:$0xff]
    %v522 = vld [vmem:[%s7 + $0x4f8] sm:$0xff]
    %v523 = vld [vmem:[%s7 + $0x500] sm:$0xff]
    %v524 = vld [vmem:[%s7 + $0x508] sm:$0xff]
    %v525 = vld [vmem:[%s7 + $0x510] sm:$0xff]
    %v526 = vld [vmem:[%s7 + $0x518] sm:$0xff]
    %v527 = vld [vmem:[%s7 + $0x520] sm:$0xff]
    %v528 = vld [vmem:[%s7 + $0x528] sm:$0xff]
    %v529 = vld [vmem:[%s7 + $0x530] sm:$0xff]
    %v530 = vld [vmem:[%s7 + $0x538] sm:$0xff]
    %v531 = vld [vmem:[%s7 + $0x540] sm:$0xff]
    %v532 = vld [vmem:[%s7 + $0x548] sm:$0xff]
    %v533 = vld [vmem:[%s7 + $0x550] sm:$0xff]
    %v534 = vld [vmem:[%s7 + $0x558] sm:$0xff]
    %v535 = vld [vmem:[%s7 + $0x560] sm:$0xff]
    %v536 = vld [vmem:[%s7 + $0x568] sm:$0xff]
    %v537 = vld [vmem:[%s7 + $0x570] sm:$0xff]
    %v538 = vld [vmem:[%s7 + $0x578] sm:$0xff]
    %v539 = vld [vmem:[%s7 + $0x580] sm:$0xff]
    %v540 = vld [vmem:[%s7 + $0x588] sm:$0xff]
    %v541 = vld [vmem:[%s7 + $0x590] sm:$0xff]
    %v542 = vld [vmem:[%s7 + $0x598] sm:$0xff]
    %v543 = vld [vmem:[%s8] sm:$0x1]
    %v544 = vld [vmem:[%s9] sm:$0xff]
    %v545 = vld [vmem:[%s9 + $0x8] sm:$0xff]
    %v546 = vld [vmem:[%s9 + $0x10] sm:$0xff]
    %v547 = vld [vmem:[%s9 + $0x18] sm:$0xff]
    %v548 = vld [vmem:[%s9 + $0x20] sm:$0xff]
    %v549 = vld [vmem:[%s9 + $0x28] sm:$0xff]
    %v550 = vld [vmem:[%s9 + $0x30] sm:$0xff]
    %v551 = vld [vmem:[%s9 + $0x38] sm:$0xff]
    %v552 = vld [vmem:[%s9 + $0x40] sm:$0xff]
    %v553 = vld [vmem:[%s9 + $0x48] sm:$0xff]
    %v554 = vld [vmem:[%s9 + $0x50] sm:$0xff]
    %v555 = vld [vmem:[%s9 + $0x58] sm:$0xff]
    %v556 = vld [vmem:[%s9 + $0x60] sm:$0xff]
    %v557 = vld [vmem:[%s9 + $0x68] sm:$0xff]
    %v558 = vld [vmem:[%s9 + $0x70] sm:$0xff]
    %v559 = vld [vmem:[%s9 + $0x78] sm:$0xff]
    %v560 = vld [vmem:[%s10] sm:$0x1]
    %v562 = vlaneseq
    %v563 = vshrl.u32 %v562, 7
    %v564 = vsub.s32 0, %v563
    %v565 = vrot.slane %v543, %v564
    %v570 = vcombine.high %v360, %v360
    %v572 = vunpack.c.l.s4 1983009808
    %v573 = vunpack.c.0.s8 %v572
    %v574 = vlaneseq
    %v575 = vshrl.u32 %v574, 7
    %v576 = vsub.s32 %v573, %v575
    %v577 = vrot.slane %v360, %v576
    %v579 = vunpack.c.l.s4 1983009808
    %v580 = vunpack.c.0.s8 %v579
    %v581 = vlaneseq
    %v582 = vshrl.u32 %v581, 7
    %v583 = vsub.s32 %v580, %v582
    %v584 = vrot.slane %v570, %v583
    %v585 = vcombine.high %v577, %v577
    %v586 = vcombine.high %v584, %v584
    %v587 = vcombine.high %v361, %v361
    %v589 = vunpack.c.l.s4 1983009808
    %v590 = vunpack.c.0.s8 %v589
    %v591 = vlaneseq
    %v592 = vshrl.u32 %v591, 7
    %v593 = vsub.s32 %v590, %v592
    %v594 = vrot.slane %v361, %v593
    %v596 = vunpack.c.l.s4 1983009808
    %v597 = vunpack.c.0.s8 %v596
    %v598 = vlaneseq
    %v599 = vshrl.u32 %v598, 7
    %v600 = vsub.s32 %v597, %v599
    %v601 = vrot.slane %v587, %v600
    %v602 = vcombine.high %v594, %v594
    %v603 = vcombine.high %v601, %v601
    %v604 = vcombine.high %v362, %v362
    %v606 = vunpack.c.l.s4 1983009808
    %v607 = vunpack.c.0.s8 %v606
    %v608 = vlaneseq
    %v609 = vshrl.u32 %v608, 7
    %v610 = vsub.s32 %v607, %v609
    %v611 = vrot.slane %v362, %v610
    %v613 = vunpack.c.l.s4 1983009808
    %v614 = vunpack.c.0.s8 %v613
    %v615 = vlaneseq
    %v616 = vshrl.u32 %v615, 7
    %v617 = vsub.s32 %v614, %v616
    %v618 = vrot.slane %v604, %v617
    %v619 = vcombine.high %v611, %v611
    %v620 = vcombine.high %v618, %v618
    %vm632 = vcmask 261120
    %v633 = vsel %vm632, %v620, 0
    %635 = vmatprep.subr.mxu0 0.0
    %636 = vmatpush1.msra.mxu0 %v363
    %637 = vmatprep.subr.mxu0 0.0
    %638 = vmatpush1.msra.mxu0 %v364
    %639 = vmatprep.subr.mxu0 0.0
    %640 = vmatpush1.msra.mxu0 %v365
    %641 = vmatprep.subr.mxu0 0.0
    %642 = vmatpush1.msra.mxu0 %v366
    %643 = vmatprep.subr.mxu0 0.0
    %644 = vmatpush1.msra.mxu0 %v367
    %645 = vmatprep.subr.mxu0 0.0
    %646 = vmatpush1.msra.mxu0 %v368
    %647 = vmatprep.subr.mxu0 0.0
    %648 = vmatpush1.msra.mxu0 %v369
    %649 = vmatprep.subr.mxu0 0.0
    %650 = vmatpush1.msra.mxu0 %v370
    %651 = vmatprep.subr.mxu0 0.0
    %652 = vmatpush1.msra.mxu0 %v371
    %653 = vmatprep.subr.mxu0 0.0
    %654 = vmatpush1.msra.mxu0 %v372
    %655 = vmatprep.subr.mxu0 0.0
    %656 = vmatpush1.msra.mxu0 %v373
    %657 = vmatprep.subr.mxu0 0.0
    %658 = vmatpush1.msra.mxu0 %v374
    %659 = vmatprep.subr.mxu0 0.0
    %660 = vmatpush1.msra.mxu0 %v375
    %661 = vmatprep.subr.mxu0 0.0
    %662 = vmatpush1.msra.mxu0 %v376
    %663 = vmatprep.subr.mxu0 0.0
    %664 = vmatpush1.msra.mxu0 %v377
    %665 = vmatprep.subr.mxu0 0.0
    %666 = vmatpush1.msra.mxu0 %v378
    %667 = vmatprep.subr.mxu0 0.0
    %668 = vmatpush1.msra.mxu0 %v379
    %669 = vmatprep.subr.mxu0 0.0
    %670 = vmatpush1.msra.mxu0 %v380
    %671 = vmatprep.subr.mxu0 0.0
    %672 = vmatpush1.msra.mxu0 %v381
    %673 = vmatprep.subr.mxu0 0.0
    %674 = vmatpush1.msra.mxu0 %v382
    %675 = vmatprep.subr.mxu0 0.0
    %676 = vmatpush1.msra.mxu0 %v383
    %677 = vmatprep.subr.mxu0 0.0
    %678 = vmatpush1.msra.mxu0 %v384
    %679 = vmatprep.subr.mxu0 0.0
    %680 = vmatpush1.msra.mxu0 %v385
    %681 = vmatprep.subr.mxu0 0.0
    %682 = vmatpush1.msra.mxu0 %v386
    %683 = vmatprep.subr.mxu0 0.0
    %684 = vmatpush1.msra.mxu0 %v387
    %685 = vmatprep.subr.mxu0 0.0
    %686 = vmatpush1.msra.mxu0 %v388
    %687 = vmatprep.subr.mxu0 0.0
    %688 = vmatpush1.msra.mxu0 %v389
    %689 = vmatprep.subr.mxu0 0.0
    %690 = vmatpush1.msra.mxu0 %v390
    %691 = vmatprep.subr.mxu0 0.0
    %692 = vmatpush1.msra.mxu0 %v391
    %693 = vmatprep.subr.mxu0 0.0
    %694 = vmatpush1.msra.mxu0 %v392
    %695 = vmatprep.subr.mxu0 0.0
    %696 = vmatpush1.msra.mxu0 %v393
    %697 = vmatprep.subr.mxu0 0.0
    %698 = vmatpush1.msra.mxu0 %v394
    %699 = vmatprep.mubr.f32.mxu0 %v585
    %700 = vmatmul.mubr.f32.gmra.mrb[0].mxu0 %v577
    %v701 = vpop.f32.mrb[0].mxu0
    %v702 = vadd.f32 %v565, %v701
    %v703 = vpop.f32.mrb[0].mxu0
    %704 = vdwg.mxu0
    %705 = vmatprep.subr.mxu0 0.0
    %706 = vmatpush1.msra.mxu0 %v395
    %707 = vmatprep.subr.mxu0 0.0
    %708 = vmatpush1.msra.mxu0 %v396
    %709 = vmatprep.subr.mxu0 0.0
    %710 = vmatpush1.msra.mxu0 %v397
    %711 = vmatprep.subr.mxu0 0.0
    %712 = vmatpush1.msra.mxu0 %v398
    %713 = vmatprep.subr.mxu0 0.0
    %714 = vmatpush1.msra.mxu0 %v399
    %715 = vmatprep.subr.mxu0 0.0
    %716 = vmatpush1.msra.mxu0 %v400
    %717 = vmatprep.subr.mxu0 0.0
    %718 = vmatpush1.msra.mxu0 %v401
    %719 = vmatprep.subr.mxu0 0.0
    %720 = vmatpush1.msra.mxu0 %v402
    %721 = vmatprep.subr.mxu0 0.0
    %722 = vmatpush1.msra.mxu0 %v403
    %723 = vmatprep.subr.mxu0 0.0
    %724 = vmatpush1.msra.mxu0 %v404
    %725 = vmatprep.subr.mxu0 0.0
    %726 = vmatpush1.msra.mxu0 %v405
    %727 = vmatprep.subr.mxu0 0.0
    %728 = vmatpush1.msra.mxu0 %v406
    %729 = vmatprep.subr.mxu0 0.0
    %730 = vmatpush1.msra.mxu0 %v407
    %731 = vmatprep.subr.mxu0 0.0
    %732 = vmatpush1.msra.mxu0 %v408
    %733 = vmatprep.subr.mxu0 0.0
    %734 = vmatpush1.msra.mxu0 %v409
    %735 = vmatprep.subr.mxu0 0.0
    %736 = vmatpush1.msra.mxu0 %v410
    %737 = vmatprep.subr.mxu0 0.0
    %738 = vmatpush1.msra.mxu0 %v411
    %739 = vmatprep.subr.mxu0 0.0
    %740 = vmatpush1.msra.mxu0 %v412
    %741 = vmatprep.subr.mxu0 0.0
    %742 = vmatpush1.msra.mxu0 %v413
    %743 = vmatprep.subr.mxu0 0.0
    %744 = vmatpush1.msra.mxu0 %v414
    %745 = vmatprep.subr.mxu0 0.0
    %746 = vmatpush1.msra.mxu0 %v415
    %747 = vmatprep.subr.mxu0 0.0
    %748 = vmatpush1.msra.mxu0 %v416
    %749 = vmatprep.subr.mxu0 0.0
    %750 = vmatpush1.msra.mxu0 %v417
    %751 = vmatprep.subr.mxu0 0.0
    %752 = vmatpush1.msra.mxu0 %v418
    %753 = vmatprep.subr.mxu0 0.0
    %754 = vmatpush1.msra.mxu0 %v419
    %755 = vmatprep.subr.mxu0 0.0
    %756 = vmatpush1.msra.mxu0 %v420
    %757 = vmatprep.subr.mxu0 0.0
    %758 = vmatpush1.msra.mxu0 %v421
    %759 = vmatprep.subr.mxu0 0.0
    %760 = vmatpush1.msra.mxu0 %v422
    %761 = vmatprep.subr.mxu0 0.0
    %762 = vmatpush1.msra.mxu0 %v423
    %763 = vmatprep.subr.mxu0 0.0
    %764 = vmatpush1.msra.mxu0 %v424
    %765 = vmatprep.subr.mxu0 0.0
    %766 = vmatpush1.msra.mxu0 %v425
    %767 = vmatprep.subr.mxu0 0.0
    %768 = vmatpush1.msra.mxu0 %v426
    %769 = vmatprep.mubr.f32.mxu0 %v586
    %770 = vmatmul.mubr.f32.gmra.mrb[0].mxu0 %v584
    %v771 = vpop.f32.mrb[0].mxu0
    %v772 = vadd.f32 %v702, %v771
    %v773 = vpop.f32.mrb[0].mxu0
    %774 = vdwg.mxu0
    %775 = vmatprep.subr.mxu0 0.0
    %776 = vmatpush1.msra.mxu0 %v427
    %777 = vmatprep.subr.mxu0 0.0
    %778 = vmatpush1.msra.mxu0 %v428
    %779 = vmatprep.subr.mxu0 0.0
    %780 = vmatpush1.msra.mxu0 %v429
    %781 = vmatprep.subr.mxu0 0.0
    %782 = vmatpush1.msra.mxu0 %v430
    %783 = vmatprep.subr.mxu0 0.0
    %784 = vmatpush1.msra.mxu0 %v431
    %785 = vmatprep.subr.mxu0 0.0
    %786 = vmatpush1.msra.mxu0 %v432
    %787 = vmatprep.subr.mxu0 0.0
    %788 = vmatpush1.msra.mxu0 %v433
    %789 = vmatprep.subr.mxu0 0.0
    %790 = vmatpush1.msra.mxu0 %v434
    %791 = vmatprep.subr.mxu0 0.0
    %792 = vmatpush1.msra.mxu0 %v435
    %793 = vmatprep.subr.mxu0 0.0
    %794 = vmatpush1.msra.mxu0 %v436
    %795 = vmatprep.subr.mxu0 0.0
    %796 = vmatpush1.msra.mxu0 %v437
    %797 = vmatprep.subr.mxu0 0.0
    %798 = vmatpush1.msra.mxu0 %v438
    %799 = vmatprep.subr.mxu0 0.0
    %800 = vmatpush1.msra.mxu0 %v439
    %801 = vmatprep.subr.mxu0 0.0
    %802 = vmatpush1.msra.mxu0 %v440
    %803 = vmatprep.subr.mxu0 0.0
    %804 = vmatpush1.msra.mxu0 %v441
    %805 = vmatprep.subr.mxu0 0.0
    %806 = vmatpush1.msra.mxu0 %v442
    %807 = vmatprep.subr.mxu0 0.0
    %808 = vmatpush1.msra.mxu0 %v443
    %809 = vmatprep.subr.mxu0 0.0
    %810 = vmatpush1.msra.mxu0 %v444
    %811 = vmatprep.subr.mxu0 0.0
    %812 = vmatpush1.msra.mxu0 %v445
    %813 = vmatprep.subr.mxu0 0.0
    %814 = vmatpush1.msra.mxu0 %v446
    %815 = vmatprep.subr.mxu0 0.0
    %816 = vmatpush1.msra.mxu0 %v447
    %817 = vmatprep.subr.mxu0 0.0
    %818 = vmatpush1.msra.mxu0 %v448
    %819 = vmatprep.subr.mxu0 0.0
    %820 = vmatpush1.msra.mxu0 %v449
    %821 = vmatprep.subr.mxu0 0.0
    %822 = vmatpush1.msra.mxu0 %v450
    %823 = vmatprep.subr.mxu0 0.0
    %824 = vmatpush1.msra.mxu0 %v451
    %825 = vmatprep.subr.mxu0 0.0
    %826 = vmatpush1.msra.mxu0 %v452
    %827 = vmatprep.subr.mxu0 0.0
    %828 = vmatpush1.msra.mxu0 %v453
    %829 = vmatprep.subr.mxu0 0.0
    %830 = vmatpush1.msra.mxu0 %v454
    %831 = vmatprep.subr.mxu0 0.0
    %832 = vmatpush1.msra.mxu0 %v455
    %833 = vmatprep.subr.mxu0 0.0
    %834 = vmatpush1.msra.mxu0 %v456
    %835 = vmatprep.subr.mxu0 0.0
    %836 = vmatpush1.msra.mxu0 %v457
    %837 = vmatprep.subr.mxu0 0.0
    %838 = vmatpush1.msra.mxu0 %v458
    %839 = vmatprep.mubr.f32.mxu0 %v602
    %840 = vmatmul.mubr.f32.gmra.mrb[0].mxu0 %v594
    %v841 = vpop.f32.mrb[0].mxu0
    %v842 = vadd.f32 %v772, %v841
    %v843 = vpop.f32.mrb[0].mxu0
    %844 = vdwg.mxu0
    %845 = vmatprep.subr.mxu0 0.0
    %846 = vmatpush1.msra.mxu0 %v459
    %847 = vmatprep.subr.mxu0 0.0
    %848 = vmatpush1.msra.mxu0 %v460
    %849 = vmatprep.subr.mxu0 0.0
    %850 = vmatpush1.msra.mxu0 %v461
    %851 = vmatprep.subr.mxu0 0.0
    %852 = vmatpush1.msra.mxu0 %v462
    %853 = vmatprep.subr.mxu0 0.0
    %854 = vmatpush1.msra.mxu0 %v463
    %855 = vmatprep.subr.mxu0 0.0
    %856 = vmatpush1.msra.mxu0 %v464
    %857 = vmatprep.subr.mxu0 0.0
    %858 = vmatpush1.msra.mxu0 %v465
    %859 = vmatprep.subr.mxu0 0.0
    %860 = vmatpush1.msra.mxu0 %v466
    %861 = vmatprep.subr.mxu0 0.0
    %862 = vmatpush1.msra.mxu0 %v467
    %863 = vmatprep.subr.mxu0 0.0
    %864 = vmatpush1.msra.mxu0 %v468
    %865 = vmatprep.subr.mxu0 0.0
    %866 = vmatpush1.msra.mxu0 %v469
    %867 = vmatprep.subr.mxu0 0.0
    %868 = vmatpush1.msra.mxu0 %v470
    %869 = vmatprep.subr.mxu0 0.0
    %870 = vmatpush1.msra.mxu0 %v471
    %871 = vmatprep.subr.mxu0 0.0
    %872 = vmatpush1.msra.mxu0 %v472
    %873 = vmatprep.subr.mxu0 0.0
    %874 = vmatpush1.msra.mxu0 %v473
    %875 = vmatprep.subr.mxu0 0.0
    %876 = vmatpush1.msra.mxu0 %v474
    %877 = vmatprep.subr.mxu0 0.0
    %878 = vmatpush1.msra.mxu0 %v475
    %879 = vmatprep.subr.mxu0 0.0
    %880 = vmatpush1.msra.mxu0 %v476
    %881 = vmatprep.subr.mxu0 0.0
    %882 = vmatpush1.msra.mxu0 %v477
    %883 = vmatprep.subr.mxu0 0.0
    %884 = vmatpush1.msra.mxu0 %v478
    %885 = vmatprep.subr.mxu0 0.0
    %886 = vmatpush1.msra.mxu0 %v479
    %887 = vmatprep.subr.mxu0 0.0
    %888 = vmatpush1.msra.mxu0 %v480
    %889 = vmatprep.subr.mxu0 0.0
    %890 = vmatpush1.msra.mxu0 %v481
    %891 = vmatprep.subr.mxu0 0.0
    %892 = vmatpush1.msra.mxu0 %v482
    %893 = vmatprep.subr.mxu0 0.0
    %894 = vmatpush1.msra.mxu0 %v483
    %895 = vmatprep.subr.mxu0 0.0
    %896 = vmatpush1.msra.mxu0 %v484
    %897 = vmatprep.subr.mxu0 0.0
    %898 = vmatpush1.msra.mxu0 %v485
    %899 = vmatprep.subr.mxu0 0.0
    %900 = vmatpush1.msra.mxu0 %v486
    %901 = vmatprep.subr.mxu0 0.0
    %902 = vmatpush1.msra.mxu0 %v487
    %903 = vmatprep.subr.mxu0 0.0
    %904 = vmatpush1.msra.mxu0 %v488
    %905 = vmatprep.subr.mxu0 0.0
    %906 = vmatpush1.msra.mxu0 %v489
    %907 = vmatprep.subr.mxu0 0.0
    %908 = vmatpush1.msra.mxu0 %v490
    %909 = vmatprep.mubr.f32.mxu0 %v603
    %910 = vmatmul.mubr.f32.gmra.mrb[0].mxu0 %v601
    %v911 = vpop.f32.mrb[0].mxu0
    %v912 = vadd.f32 %v842, %v911
    %v913 = vpop.f32.mrb[0].mxu0
    %914 = vdwg.mxu0
    %915 = vmatprep.subr.mxu0 0.0
    %916 = vmatpush1.msra.mxu0 %v491
    %917 = vmatprep.subr.mxu0 0.0
    %918 = vmatpush1.msra.mxu0 %v492
    %919 = vmatprep.subr.mxu0 0.0
    %920 = vmatpush1.msra.mxu0 %v493
    %921 = vmatprep.subr.mxu0 0.0
    %922 = vmatpush1.msra.mxu0 %v494
    %923 = vmatprep.subr.mxu0 0.0
    %924 = vmatpush1.msra.mxu0 %v495
    %925 = vmatprep.subr.mxu0 0.0
    %926 = vmatpush1.msra.mxu0 %v496
    %927 = vmatprep.subr.mxu0 0.0
    %928 = vmatpush1.msra.mxu0 %v497
    %929 = vmatprep.subr.mxu0 0.0
    %930 = vmatpush1.msra.mxu0 %v498
    %931 = vmatprep.subr.mxu0 0.0
    %932 = vmatpush1.msra.mxu0 %v499
    %933 = vmatprep.subr.mxu0 0.0
    %934 = vmatpush1.msra.mxu0 %v500
    %935 = vmatprep.subr.mxu0 0.0
    %936 = vmatpush1.msra.mxu0 %v501
    %937 = vmatprep.subr.mxu0 0.0
    %938 = vmatpush1.msra.mxu0 %v502
    %939 = vmatprep.subr.mxu0 0.0
    %940 = vmatpush1.msra.mxu0 %v503
    %941 = vmatprep.subr.mxu0 0.0
    %942 = vmatpush1.msra.mxu0 %v504
    %943 = vmatprep.subr.mxu0 0.0
    %944 = vmatpush1.msra.mxu0 %v505
    %945 = vmatprep.subr.mxu0 0.0
    %946 = vmatpush1.msra.mxu0 %v506
    %947 = vmatprep.subr.mxu0 0.0
    %948 = vmatpush1.msra.mxu0 %v507
    %949 = vmatprep.subr.mxu0 0.0
    %950 = vmatpush1.msra.mxu0 %v508
    %951 = vmatprep.subr.mxu0 0.0
    %952 = vmatpush1.msra.mxu0 %v509
    %953 = vmatprep.subr.mxu0 0.0
    %954 = vmatpush1.msra.mxu0 %v510
    %955 = vmatprep.subr.mxu0 0.0
    %956 = vmatpush1.msra.mxu0 %v511
    %957 = vmatprep.subr.mxu0 0.0
    %958 = vmatpush1.msra.mxu0 %v512
    %959 = vmatprep.subr.mxu0 0.0
    %960 = vmatpush1.msra.mxu0 %v513
    %961 = vmatprep.subr.mxu0 0.0
    %962 = vmatpush1.msra.mxu0 %v514
    %963 = vmatprep.subr.mxu0 0.0
    %964 = vmatpush1.msra.mxu0 %v515
    %965 = vmatprep.subr.mxu0 0.0
    %966 = vmatpush1.msra.mxu0 %v516
    %967 = vmatprep.subr.mxu0 0.0
    %968 = vmatpush1.msra.mxu0 %v517
    %969 = vmatprep.subr.mxu0 0.0
    %970 = vmatpush1.msra.mxu0 %v518
    %971 = vmatprep.subr.mxu0 0.0
    %972 = vmatpush1.msra.mxu0 %v519
    %973 = vmatprep.subr.mxu0 0.0
    %974 = vmatpush1.msra.mxu0 %v520
    %975 = vmatprep.subr.mxu0 0.0
    %976 = vmatpush1.msra.mxu0 %v521
    %977 = vmatprep.subr.mxu0 0.0
    %978 = vmatpush1.msra.mxu0 %v522
    %979 = vmatprep.mubr.f32.mxu0 %v619
    %980 = vmatmul.mubr.f32.gmra.mrb[0].mxu0 %v611
    %v981 = vpop.f32.mrb[0].mxu0
    %v982 = vadd.f32 %v912, %v981
    %v983 = vpop.f32.mrb[0].mxu0
    %984 = vdwg.mxu0
    %985 = vmatprep.subr.mxu0 0.0
    %986 = vmatpush1.msra.mxu0 %v523
    %987 = vmatprep.subr.mxu0 0.0
    %988 = vmatpush1.msra.mxu0 %v524
    %989 = vmatprep.subr.mxu0 0.0
    %990 = vmatpush1.msra.mxu0 %v525
    %991 = vmatprep.subr.mxu0 0.0
    %992 = vmatpush1.msra.mxu0 %v526
    %993 = vmatprep.subr.mxu0 0.0
    %994 = vmatpush1.msra.mxu0 %v527
    %995 = vmatprep.subr.mxu0 0.0
    %996 = vmatpush1.msra.mxu0 %v528
    %997 = vmatprep.subr.mxu0 0.0
    %998 = vmatpush1.msra.mxu0 %v529
    %999 = vmatprep.subr.mxu0 0.0
    %1000 = vmatpush1.msra.mxu0 %v530
    %1001 = vmatprep.subr.mxu0 0.0
    %1002 = vmatpush1.msra.mxu0 %v531
    %1003 = vmatprep.subr.mxu0 0.0
    %1004 = vmatpush1.msra.mxu0 %v532
    %1005 = vmatprep.subr.mxu0 0.0
    %1006 = vmatpush1.msra.mxu0 %v533
    %1007 = vmatprep.subr.mxu0 0.0
    %1008 = vmatpush1.msra.mxu0 %v534
    %1009 = vmatprep.subr.mxu0 0.0
    %1010 = vmatpush1.msra.mxu0 %v535
    %1011 = vmatprep.subr.mxu0 0.0
    %1012 = vmatpush1.msra.mxu0 %v536
    %1013 = vmatprep.subr.mxu0 0.0
    %1014 = vmatpush1.msra.mxu0 %v537
    %1015 = vmatprep.subr.mxu0 0.0
    %1016 = vmatpush1.msra.mxu0 %v538
    %1017 = vmatprep.subr.mxu0 0.0
    %1018 = vmatpush1.msra.mxu0 %v539
    %1019 = vmatprep.subr.mxu0 0.0
    %1020 = vmatpush1.msra.mxu0 %v540
    %1021 = vmatprep.subr.mxu0 0.0
    %1022 = vmatpush1.msra.mxu0 %v541
    %1023 = vmatprep.subr.mxu0 0.0
    %1024 = vmatpush1.msra.mxu0 %v542
    %1025 = vmatprep.subr.mxu0 0.0
    %1026 = vmatpush1.msra.mxu0 0.0
    %1027 = vmatprep.subr.mxu0 0.0
    %1028 = vmatpush1.msra.mxu0 0.0
    %1029 = vmatprep.subr.mxu0 0.0
    %1030 = vmatpush1.msra.mxu0 0.0
    %1031 = vmatprep.subr.mxu0 0.0
    %1032 = vmatpush1.msra.mxu0 0.0
    %1033 = vmatprep.subr.mxu0 0.0
    %1034 = vmatpush1.msra.mxu0 0.0
    %1035 = vmatprep.subr.mxu0 0.0
    %1036 = vmatpush1.msra.mxu0 0.0
    %1037 = vmatprep.subr.mxu0 0.0
    %1038 = vmatpush1.msra.mxu0 0.0
    %1039 = vmatprep.subr.mxu0 0.0
    %1040 = vmatpush1.msra.mxu0 0.0
    %1041 = vmatprep.subr.mxu0 0.0
    %1042 = vmatpush1.msra.mxu0 0.0
    %1043 = vmatprep.subr.mxu0 0.0
    %1044 = vmatpush1.msra.mxu0 0.0
    %1045 = vmatprep.subr.mxu0 0.0
    %1046 = vmatpush1.msra.mxu0 0.0
    %1047 = vmatprep.subr.mxu0 0.0
    %1048 = vmatpush1.msra.mxu0 0.0
    %1049 = vmatprep.mubr.f32.mxu0 %v633
    %1050 = vmatmul.mubr.f32.gmra.mrb[0].mxu0 %v618
    %v1051 = vpop.f32.mrb[0].mxu0
    %v1052 = vadd.f32 %v982, %v1051
    %v1053 = vpop.f32.mrb[0].mxu0
    %1054 = vdwg.mxu0
    %v1055 = vmax.f32 %v1052, 0.0
    %v1057 = vlaneseq
    %v1058 = vshrl.u32 %v1057, 7
    %v1059 = vsub.s32 0, %v1058
    %v1060 = vrot.slane %v560, %v1059
    %1062 = vmatprep.subr.mxu0 0.0
    %1063 = vmatpush1.msra.mxu0 %v544
    %1064 = vmatprep.subr.mxu0 0.0
    %1065 = vmatpush1.msra.mxu0 %v545
    %1066 = vmatprep.subr.mxu0 0.0
    %1067 = vmatpush1.msra.mxu0 %v546
    %1068 = vmatprep.subr.mxu0 0.0
    %1069 = vmatpush1.msra.mxu0 %v547
    %1070 = vmatprep.subr.mxu0 0.0
    %1071 = vmatpush1.msra.mxu0 %v548
    %1072 = vmatprep.subr.mxu0 0.0
    %1073 = vmatpush1.msra.mxu0 %v549
    %1074 = vmatprep.subr.mxu0 0.0
    %1075 = vmatpush1.msra.mxu0 %v550
    %1076 = vmatprep.subr.mxu0 0.0
    %1077 = vmatpush1.msra.mxu0 %v551
    %1078 = vmatprep.subr.mxu0 0.0
    %1079 = vmatpush1.msra.mxu0 %v552
    %1080 = vmatprep.subr.mxu0 0.0
    %1081 = vmatpush1.msra.mxu0 %v553
    %1082 = vmatprep.subr.mxu0 0.0
    %1083 = vmatpush1.msra.mxu0 %v554
    %1084 = vmatprep.subr.mxu0 0.0
    %1085 = vmatpush1.msra.mxu0 %v555
    %1086 = vmatprep.subr.mxu0 0.0
    %1087 = vmatpush1.msra.mxu0 %v556
    %1088 = vmatprep.subr.mxu0 0.0
    %1089 = vmatpush1.msra.mxu0 %v557
    %1090 = vmatprep.subr.mxu0 0.0
    %1091 = vmatpush1.msra.mxu0 %v558
    %1092 = vmatprep.subr.mxu0 0.0
    %1093 = vmatpush1.msra.mxu0 %v559
    %1094 = vmatprep.subr.mxu0 0.0
    %1095 = vmatpush1.msra.mxu0 0.0
    %1096 = vmatprep.subr.mxu0 0.0
    %1097 = vmatpush1.msra.mxu0 0.0
    %1098 = vmatprep.subr.mxu0 0.0
    %1099 = vmatpush1.msra.mxu0 0.0
    %1100 = vmatprep.subr.mxu0 0.0
    %1101 = vmatpush1.msra.mxu0 0.0
    %1102 = vmatprep.subr.mxu0 0.0
    %1103 = vmatpush1.msra.mxu0 0.0
    %1104 = vmatprep.subr.mxu0 0.0
    %1105 = vmatpush1.msra.mxu0 0.0
    %1106 = vmatprep.subr.mxu0 0.0
    %1107 = vmatpush1.msra.mxu0 0.0
    %1108 = vmatprep.subr.mxu0 0.0
    %1109 = vmatpush1.msra.mxu0 0.0
    %1110 = vmatprep.subr.mxu0 0.0
    %1111 = vmatpush1.msra.mxu0 0.0
    %1112 = vmatprep.subr.mxu0 0.0
    %1113 = vmatpush1.msra.mxu0 0.0
    %1114 = vmatprep.subr.mxu0 0.0
    %1115 = vmatpush1.msra.mxu0 0.0
    %1116 = vmatprep.subr.mxu0 0.0
    %1117 = vmatpush1.msra.mxu0 0.0
    %1118 = vmatprep.subr.mxu0 0.0
    %1119 = vmatpush1.msra.mxu0 0.0
    %1120 = vmatprep.subr.mxu0 0.0
    %1121 = vmatpush1.msra.mxu0 0.0
    %1122 = vmatprep.subr.mxu0 0.0
    %1123 = vmatpush1.msra.mxu0 0.0
    %1124 = vmatprep.subr.mxu0 0.0
    %1125 = vmatpush1.msra.mxu0 0.0
    %1126 = vmatprep.mubr.f32.mxu0 0.0
    %1127 = vmatmul.mubr.f32.gmra.mrb[0].mxu0 %v1055
    %v1128 = vpop.f32.mrb[0].mxu0
    %v1129 = vadd.f32 %v1060, %v1128
    %v1130 = vpop.f32.mrb[0].mxu0
    %1131 = vdwg.mxu0
    %1132 = vst.msk [vmem:[#allocation4] sm:$0x3] %vm358, %v1129
    %v1133 = vld [vmem:[%s2] sm:$0xf]
    %v1134 = vld [vmem:[%s11] sm:$0xff]
    %v1135 = vld [vmem:[%s11 + $0x8] sm:$0xff]
    %v1136 = vld [vmem:[%s11 + $0x10] sm:$0xff]
    %v1137 = vld [vmem:[%s11 + $0x18] sm:$0xff]
    %v1138 = vld [vmem:[%s11 + $0x20] sm:$0xff]
    %v1139 = vld [vmem:[%s11 + $0x28] sm:$0xff]
    %v1140 = vld [vmem:[%s11 + $0x30] sm:$0xff]
    %v1141 = vld [vmem:[%s11 + $0x38] sm:$0xff]
    %v1142 = vld [vmem:[%s11 + $0x40] sm:$0xff]
    %v1143 = vld [vmem:[%s11 + $0x48] sm:$0xff]
    %v1144 = vld [vmem:[%s11 + $0x50] sm:$0xff]
    %v1145 = vld [vmem:[%s11 + $0x58] sm:$0xff]
    %v1146 = vld [vmem:[%s11 + $0x60] sm:$0xff]
    %v1147 = vld [vmem:[%s11 + $0x68] sm:$0xff]
    %v1148 = vld [vmem:[%s11 + $0x70] sm:$0xff]
    %v1149 = vld [vmem:[%s11 + $0x78] sm:$0xff]
    %v1150 = vld [vmem:[%s11 + $0x80] sm:$0xff]
    %v1151 = vld [vmem:[%s11 + $0x88] sm:$0xff]
    %v1152 = vld [vmem:[%s11 + $0x90] sm:$0xff]
    %v1153 = vld [vmem:[%s11 + $0x98] sm:$0xff]
    %v1154 = vld [vmem:[%s12] sm:$0x1]
    %v1155 = vld [vmem:[%s13] sm:$0xff]
    %v1156 = vld [vmem:[%s13 + $0x8] sm:$0xff]
    %v1157 = vld [vmem:[%s13 + $0x10] sm:$0xff]
    %v1158 = vld [vmem:[%s13 + $0x18] sm:$0xff]
    %v1159 = vld [vmem:[%s14] sm:$0x1]
    %v1161 = vlaneseq
    %v1162 = vshrl.u32 %v1161, 7
    %v1163 = vsub.s32 0, %v1162
    %v1164 = vrot.slane %v1154, %v1163
    %v1168 = vunpack.c.l.s4 1983009808
    %v1169 = vunpack.c.0.s8 %v1168
    %v1170 = vlaneseq
    %v1171 = vshrl.u32 %v1170, 7
    %v1172 = vsub.s32 %v1169, %v1171
    %v1173 = vrot.slane %v1133, %v1172
    %v1174 = vcombine.high %v1173, %v1173
    %v1176 = vsel %vm632, %v1174, 0
    %1178 = vmatprep.subr.mxu0 0.0
    %1179 = vmatpush1.msra.mxu0 %v1134
    %1180 = vmatprep.subr.mxu0 0.0
    %1181 = vmatpush1.msra.mxu0 %v1135
    %1182 = vmatprep.subr.mxu0 0.0
    %1183 = vmatpush1.msra.mxu0 %v1136
    %1184 = vmatprep.subr.mxu0 0.0
    %1185 = vmatpush1.msra.mxu0 %v1137
    %1186 = vmatprep.subr.mxu0 0.0
    %1187 = vmatpush1.msra.mxu0 %v1138
    %1188 = vmatprep.subr.mxu0 0.0
    %1189 = vmatpush1.msra.mxu0 %v1139
    %1190 = vmatprep.subr.mxu0 0.0
    %1191 = vmatpush1.msra.mxu0 %v1140
    %1192 = vmatprep.subr.mxu0 0.0
    %1193 = vmatpush1.msra.mxu0 %v1141
    %1194 = vmatprep.subr.mxu0 0.0
    %1195 = vmatpush1.msra.mxu0 %v1142
    %1196 = vmatprep.subr.mxu0 0.0
    %1197 = vmatpush1.msra.mxu0 %v1143
    %1198 = vmatprep.subr.mxu0 0.0
    %1199 = vmatpush1.msra.mxu0 %v1144
    %1200 = vmatprep.subr.mxu0 0.0
    %1201 = vmatpush1.msra.mxu0 %v1145
    %1202 = vmatprep.subr.mxu0 0.0
    %1203 = vmatpush1.msra.mxu0 %v1146
    %1204 = vmatprep.subr.mxu0 0.0
    %1205 = vmatpush1.msra.mxu0 %v1147
    %1206 = vmatprep.subr.mxu0 0.0
    %1207 = vmatpush1.msra.mxu0 %v1148
    %1208 = vmatprep.subr.mxu0 0.0
    %1209 = vmatpush1.msra.mxu0 %v1149
    %1210 = vmatprep.subr.mxu0 0.0
    %1211 = vmatpush1.msra.mxu0 %v1150
    %1212 = vmatprep.subr.mxu0 0.0
    %1213 = vmatpush1.msra.mxu0 %v1151
    %1214 = vmatprep.subr.mxu0 0.0
    %1215 = vmatpush1.msra.mxu0 %v1152
    %1216 = vmatprep.subr.mxu0 0.0
    %1217 = vmatpush1.msra.mxu0 %v1153
    %1218 = vmatprep.subr.mxu0 0.0
    %1219 = vmatpush1.msra.mxu0 0.0
    %1220 = vmatprep.subr.mxu0 0.0
    %1221 = vmatpush1.msra.mxu0 0.0
    %1222 = vmatprep.subr.mxu0 0.0
    %1223 = vmatpush1.msra.mxu0 0.0
    %1224 = vmatprep.subr.mxu0 0.0
    %1225 = vmatpush1.msra.mxu0 0.0
    %1226 = vmatprep.subr.mxu0 0.0
    %1227 = vmatpush1.msra.mxu0 0.0
    %1228 = vmatprep.subr.mxu0 0.0
    %1229 = vmatpush1.msra.mxu0 0.0
    %1230 = vmatprep.subr.mxu0 0.0
    %1231 = vmatpush1.msra.mxu0 0.0
    %1232 = vmatprep.subr.mxu0 0.0
    %1233 = vmatpush1.msra.mxu0 0.0
    %1234 = vmatprep.subr.mxu0 0.0
    %1235 = vmatpush1.msra.mxu0 0.0
    %1236 = vmatprep.subr.mxu0 0.0
    %1237 = vmatpush1.msra.mxu0 0.0
    %1238 = vmatprep.subr.mxu0 0.0
    %1239 = vmatpush1.msra.mxu0 0.0
    %1240 = vmatprep.subr.mxu0 0.0
    %1241 = vmatpush1.msra.mxu0 0.0
    %1242 = vmatprep.mubr.f32.mxu0 %v1176
    %1243 = vmatmul.mubr.f32.gmra.mrb[0].mxu0 %v1173
    %v1244 = vpop.f32.mrb[0].mxu0
    %v1245 = vadd.f32 %v1164, %v1244
    %v1246 = vpop.f32.mrb[0].mxu0
    %1247 = vdwg.mxu0
    %v1248 = vmax.f32 %v1245, 0.0
    %v1250 = vlaneseq
    %v1251 = vshrl.u32 %v1250, 7
    %v1252 = vsub.s32 0, %v1251
    %v1253 = vrot.slane %v1159, %v1252
    %v1256 = vsel %vm632, %v1248, 0
    %1258 = vmatprep.subr.mxu0 0.0
    %1259 = vmatpush1.msra.mxu0 %v1155
    %1260 = vmatprep.subr.mxu0 0.0
    %1261 = vmatpush1.msra.mxu0 %v1156
    %1262 = vmatprep.subr.mxu0 0.0
    %1263 = vmatpush1.msra.mxu0 %v1157
    %1264 = vmatprep.subr.mxu0 0.0
    %1265 = vmatpush1.msra.mxu0 %v1158
    %1266 = vmatprep.subr.mxu0 0.0
    %1267 = vmatpush1.msra.mxu0 0.0
    %1268 = vmatprep.subr.mxu0 0.0
    %1269 = vmatpush1.msra.mxu0 0.0
    %1270 = vmatprep.subr.mxu0 0.0
    %1271 = vmatpush1.msra.mxu0 0.0
    %1272 = vmatprep.subr.mxu0 0.0
    %1273 = vmatpush1.msra.mxu0 0.0
    %1274 = vmatprep.subr.mxu0 0.0
    %1275 = vmatpush1.msra.mxu0 0.0
    %1276 = vmatprep.subr.mxu0 0.0
    %1277 = vmatpush1.msra.mxu0 0.0
    %1278 = vmatprep.subr.mxu0 0.0
    %1279 = vmatpush1.msra.mxu0 0.0
    %1280 = vmatprep.subr.mxu0 0.0
    %1281 = vmatpush1.msra.mxu0 0.0
    %1282 = vmatprep.subr.mxu0 0.0
    %1283 = vmatpush1.msra.mxu0 0.0
    %1284 = vmatprep.subr.mxu0 0.0
    %1285 = vmatpush1.msra.mxu0 0.0
    %1286 = vmatprep.subr.mxu0 0.0
    %1287 = vmatpush1.msra.mxu0 0.0
    %1288 = vmatprep.subr.mxu0 0.0
    %1289 = vmatpush1.msra.mxu0 0.0
    %1290 = vmatprep.subr.mxu0 0.0
    %1291 = vmatpush1.msra.mxu0 0.0
    %1292 = vmatprep.subr.mxu0 0.0
    %1293 = vmatpush1.msra.mxu0 0.0
    %1294 = vmatprep.subr.mxu0 0.0
    %1295 = vmatpush1.msra.mxu0 0.0
    %1296 = vmatprep.subr.mxu0 0.0
    %1297 = vmatpush1.msra.mxu0 0.0
    %1298 = vmatprep.subr.mxu0 0.0
    %1299 = vmatpush1.msra.mxu0 0.0
    %1300 = vmatprep.subr.mxu0 0.0
    %1301 = vmatpush1.msra.mxu0 0.0
    %1302 = vmatprep.subr.mxu0 0.0
    %1303 = vmatpush1.msra.mxu0 0.0
    %1304 = vmatprep.subr.mxu0 0.0
    %1305 = vmatpush1.msra.mxu0 0.0
    %1306 = vmatprep.subr.mxu0 0.0
    %1307 = vmatpush1.msra.mxu0 0.0
    %1308 = vmatprep.subr.mxu0 0.0
    %1309 = vmatpush1.msra.mxu0 0.0
    %1310 = vmatprep.subr.mxu0 0.0
    %1311 = vmatpush1.msra.mxu0 0.0
    %1312 = vmatprep.subr.mxu0 0.0
    %1313 = vmatpush1.msra.mxu0 0.0
    %1314 = vmatprep.subr.mxu0 0.0
    %1315 = vmatpush1.msra.mxu0 0.0
    %1316 = vmatprep.subr.mxu0 0.0
    %1317 = vmatpush1.msra.mxu0 0.0
    %1318 = vmatprep.subr.mxu0 0.0
    %1319 = vmatpush1.msra.mxu0 0.0
    %1320 = vmatprep.subr.mxu0 0.0
    %1321 = vmatpush1.msra.mxu0 0.0
    %1322 = vmatprep.mubr.f32.mxu0 0.0
    %1323 = vmatmul.mubr.f32.gmra.mrb[0].mxu0 %v1256
    %v1324 = vpop.f32.mrb[0].mxu0
    %v1325 = vadd.f32 %v1253, %v1324
    %v1326 = vpop.f32.mrb[0].mxu0
    %1327 = vdwg.mxu0
    %1328 = vst.msk [vmem:[#allocation6] sm:$0x3] %vm358, %v1325
    // Predicated region
    $region62: #{net_forward.9} parent=1 // pred_check
      _
    $region63: #{net_forward.9} parent=1 // pred_check_branch
      %1330 = sbr.rel (0) target = $region65
    $region64: #{net_forward.9} parent=1 // pred_region
      %s1332 = ssub.s32 32, 32
      %1333 = vsyncadd [#allocation3], %s1332
      %s1335 = sshll.u32 [#allocation2], 4
      %s1336 = int_to_ptr.vmem [resolvable:$true] %s1335
      %1338 = dma.vmem_to_hbm [thread:$0]  %s1336, 32, %s15, [#allocation3]
    $region65: #{net_forward.9} parent=1 // pred_fallthru
      _
    // Predicated region
    $region66: #{net_forward.9} parent=1 // pred_check
      _
    $region67: #{net_forward.9} parent=1 // pred_check_branch
      %1340 = sbr.rel (0) target = $region69
    $region68: #{net_forward.9} parent=1 // pred_region
      %s1342 = ssub.s32 32, 32
      %1343 = vsyncadd [#allocation5], %s1342
      %s1345 = sshll.u32 [#allocation4], 4
      %s1346 = int_to_ptr.vmem [resolvable:$true] %s1345
      %1348 = dma.vmem_to_hbm [thread:$0]  %s1346, 32, %s16, [#allocation5]
    $region69: #{net_forward.9} parent=1 // pred_fallthru
      _
    // Predicated region
    $region70: #{net_forward.9} parent=1 // pred_check
      _
    $region71: #{net_forward.9} parent=1 // pred_check_branch
      %1350 = sbr.rel (0) target = $region73
    $region72: #{net_forward.9} parent=1 // pred_region
      %s1352 = ssub.s32 32, 32
      %1353 = vsyncadd [#allocation5], %s1352
      %s1355 = sshll.u32 [#allocation6], 4
      %s1356 = int_to_ptr.vmem [resolvable:$true] %s1355
      %1358 = dma.vmem_to_hbm [thread:$0]  %s1356, 32, %s17, [#allocation5]
    $region73: #{net_forward.9} parent=1 // pred_fallthru
      _
    // Predicated region
    $region74: #{net_forward.9} parent=1 // pred_check
      _
    $region75: #{net_forward.9} parent=1 // pred_check_branch
      %1360 = sbr.rel (0) target = $region77
    $region76: #{net_forward.9} parent=1 // pred_region
      %1361 = dma.done [#allocation3], 32
    $region77: #{net_forward.9} parent=1 // pred_fallthru
      _
    // Predicated region
    $region78: #{net_forward.9} parent=1 // pred_check
      _
    $region79: #{net_forward.9} parent=1 // pred_check_branch
      %1363 = sbr.rel (0) target = $region81
    $region80: #{net_forward.9} parent=1 // pred_region
      %1364 = dma.done [#allocation5], 32
    $region81: #{net_forward.9} parent=1 // pred_fallthru
      _
    // Predicated region
    $region82: #{net_forward.9} parent=1 // pred_check
      _
    $region83: #{net_forward.9} parent=1 // pred_check_branch
      %1366 = sbr.rel (0) target = $region85
    $region84: #{net_forward.9} parent=1 // pred_region
      %1367 = dma.done [#allocation5], 32
    $region85: #{net_forward.9} parent=1 // pred_fallthru
      _
    %1368 = vsyncpa [#allocation3], 1
    %1369 = vsyncpa [#allocation5], 1

</llo_original>
